<compile_context>
chip_gen: v7x
topology: tpu7x:2x2x1
jax: 0.10.0
libtpu: 0.0.40
codegen_flags: <defaults>
</compile_context>

<pallas_src>
import functools

import jax
import jax.numpy as jnp
from jax.experimental import pallas as pl
from jax.experimental.pallas import tpu as pltpu


def _round_up(x, m):
    return (x + m - 1) // m * m


# PyTorch gate row order is [i, f, g, o]; kernel packs [i, f, o, g] so one
# sigmoid covers a contiguous 3*H slab and one tanh covers g.
_GATE_ORDER = (0, 1, 3, 2)


# ----------------------------- Pallas kernel ------------------------------ #

def _encoder_lstm_kernel(*refs, n_layers, seq_len, batch_p, hid, hid_p):
    """Fused multi-layer LSTM over the whole sequence (single invocation).

    refs layout:
      [x,                                    # (T*Bp, Ep) bf16
       wx_0, wh_0, b_0, ..., wx_{L-1}, wh_{L-1}, b_{L-1},
       hN, cN,                               # (L, Bp, Hp) f32 outputs
       pre_sc, seq_sc, h_sc, c_sc]           # VMEM scratch
    """
    x_ref = refs[0]
    wx_refs = [refs[1 + 3 * l] for l in range(n_layers)]
    wh_refs = [refs[2 + 3 * l] for l in range(n_layers)]
    b_refs = [refs[3 + 3 * l] for l in range(n_layers)]
    hN_ref = refs[1 + 3 * n_layers]
    cN_ref = refs[2 + 3 * n_layers]
    pre_sc = refs[3 + 3 * n_layers]   # (T*Bp, Np) f32  hoisted input projection
    seq_sc = refs[4 + 3 * n_layers]   # (T*Bp, Hp) f32  inter-layer activations
    h_sc = refs[5 + 3 * n_layers]     # (Bp, Hp)   f32  hidden state
    c_sc = refs[6 + 3 * n_layers]     # (Bp, Hp)   f32  cell state

    Bp, H = batch_p, hid

    if n_layers > 1:
        # Keep padding lanes / rows of the inter-layer buffer at exactly zero.
        seq_sc[...] = jnp.zeros_like(seq_sc)

    for l in range(n_layers):
        last = (l == n_layers - 1)
        in_ref = x_ref if l == 0 else seq_sc
        wh_ref = wh_refs[l]

        # ---- Hoisted input projection: ONE MXU matmul with M = T*Bp rows ----
        x_all = in_ref[...]
        if x_all.dtype != jnp.bfloat16:
            x_all = x_all.astype(jnp.bfloat16)
        pre_sc[...] = (
            jnp.dot(x_all, wx_refs[l][...], preferred_element_type=jnp.float32)
            + b_refs[l][...])                       # bias folded in, once per layer

        # Zero initial hidden / cell state (padding lanes stay zero).
        h_sc[...] = jnp.zeros_like(h_sc)
        c_sc[...] = jnp.zeros_like(c_sc)

        def step(t, carry):
            row = t * Bp
            if not isinstance(row, int):
                row = pl.multiple_of(row, Bp)
            # Serial path: only the small recurrent matmul (K = Hp, N = 4H).
            gates = pre_sc[pl.ds(row, Bp), :] + jnp.dot(
                h_sc[...].astype(jnp.bfloat16), wh_ref[...],
                preferred_element_type=jnp.float32)
            sig = jax.nn.sigmoid(gates[:, 0:3 * H])     # i, f, o in one slab
            i_g = sig[:, 0:H]
            f_g = sig[:, H:2 * H]
            o_g = sig[:, 2 * H:3 * H]
            g_g = jnp.tanh(gates[:, 3 * H:4 * H])
            c_new = f_g * c_sc[:, 0:H] + i_g * g_g
            h_new = o_g * jnp.tanh(c_new)
            c_sc[:, 0:H] = c_new
            h_sc[:, 0:H] = h_new
            if not last:
                # Feed the next layer from VMEM (no HBM round trip).
                seq_sc[pl.ds(row, Bp), 0:H] = h_new
            return carry

        if seq_len <= 32:
            # Fully unrolled at trace time (small fixed T).
            for t in range(seq_len):
                step(t, 0)
        else:
            jax.lax.fori_loop(0, seq_len, step, 0, unroll=8)

        hN_ref[l] = h_sc[...]
        cN_ref[l] = c_sc[...]


# ------------------------------ Encoder glue ------------------------------- #

def encoder_forward(params, src):
    """src: (T, B) int32 token ids -> (hidden, cell), each (n_layers, B, H)."""
    # TODO(synk): embedding gather kept as an XLA gather outside the kernel.
    emb = jnp.take(params["embedding"], src, axis=0)            # (T, B, E) f32
    T, B, E = emb.shape
    H = params["lstm"][0]["w_hh"].shape[1]
    n_layers = len(params["lstm"])

    Bp = _round_up(B, 8)            # sublane alignment
    Ep = _round_up(E, 128)          # lane alignment for the x segment
    Hp = _round_up(H, 128)          # K-dim padding for the recurrent matmul
    Np = _round_up(4 * H, 128)      # all 4 gates packed contiguously

    # Zero-padded, bf16, flattened to (T*Bp, Ep) so the layer-0 input
    # projection is one big MXU matmul with no in-kernel reshape.
    x = jnp.zeros((T, Bp, Ep), jnp.float32).at[:, :B, :E].set(emb)
    x2d = x.reshape(T * Bp, Ep).astype(jnp.bfloat16)

    # Split weights into x-part (hoisted) and h-part (recurrent); reorder gate
    # blocks to [i, f, o, g]; fold the two biases together.
    inputs = [x2d]
    for l, layer in enumerate(params["lstm"]):
        Din = layer["w_ih"].shape[1]
        Dinp = Ep if l == 0 else Hp
        wx = jnp.zeros((Dinp, Np), jnp.float32)
        wh = jnp.zeros((Hp, Np), jnp.float32)
        bb = jnp.zeros((1, Np), jnp.float32)
        for dk, sk in enumerate(_GATE_ORDER):
            wx = wx.at[:Din, dk * H:(dk + 1) * H].set(
                layer["w_ih"][sk * H:(sk + 1) * H, :].T)
            wh = wh.at[:H, dk * H:(dk + 1) * H].set(
                layer["w_hh"][sk * H:(sk + 1) * H, :].T)
            bb = bb.at[0, dk * H:(dk + 1) * H].set(
                layer["b_ih"][sk * H:(sk + 1) * H]
                + layer["b_hh"][sk * H:(sk + 1) * H])
        inputs.append(wx.astype(jnp.bfloat16))
        inputs.append(wh.astype(jnp.bfloat16))
        inputs.append(bb)                                   # bias stays f32

    kernel = functools.partial(_encoder_lstm_kernel, n_layers=n_layers,
                               seq_len=T, batch_p=Bp, hid=H, hid_p=Hp)

    scratch_shapes = [
        pltpu.VMEM((T * Bp, Np), jnp.float32),   # pre-activations, all T steps
        pltpu.VMEM((T * Bp, Hp), jnp.float32),   # inter-layer sequence buffer
        pltpu.VMEM((Bp, Hp), jnp.float32),       # hidden state
        pltpu.VMEM((Bp, Hp), jnp.float32),       # cell state
    ]

    # Explicit scoped-VMEM budget (inputs + outputs + scratch + headroom).
    in_bytes = sum(int(a.nbytes) for a in inputs)
    out_bytes = 2 * n_layers * Bp * Hp * 4
    scr_bytes = (T * Bp * Np + T * Bp * Hp + 2 * Bp * Hp) * 4
    vmem_limit = int(min(64 * 2**20,
                         max(in_bytes + out_bytes + scr_bytes + (4 << 20),
                             8 << 20)))

    hN, cN = pl.pallas_call(
        kernel,
        out_shape=(
            jax.ShapeDtypeStruct((n_layers, Bp, Hp), jnp.float32),
            jax.ShapeDtypeStruct((n_layers, Bp, Hp), jnp.float32),
        ),
        scratch_shapes=scratch_shapes,
        compiler_params=pltpu.CompilerParams(vmem_limit_bytes=vmem_limit),
    )(*inputs)

    return hN[:, :B, :H], cN[:, :B, :H]


# ------------------------- Pure-JAX reference ------------------------------ #

def _lstm_layer_ref(x, w_ih, w_hh, b_ih, b_hh):
    T, B, _ = x.shape
    H = w_hh.shape[1]

    def step(carry, x_t):
        h, c = carry
        gates = x_t @ w_ih.T + h @ w_hh.T + b_ih + b_hh
        i = jax.nn.sigmoid(gates[:, :H])
        f = jax.nn.sigmoid(gates[:, H:2 * H])
        g = jnp.tanh(gates[:, 2 * H:3 * H])
        o = jax.nn.sigmoid(gates[:, 3 * H:])
        c = f * c + i * g
        h = o * jnp.tanh(c)
        return (h, c), h

    (h, c), outs = jax.lax.scan(
        step, (jnp.zeros((B, H), jnp.float32), jnp.zeros((B, H), jnp.float32)), x)
    return outs, h, c


def encoder_ref(params, src):
    x = jnp.take(params["embedding"], src, axis=0)
    hs, cs = [], []
    for layer in params["lstm"]:
        x, h, c = _lstm_layer_ref(x, layer["w_ih"], layer["w_hh"],
                                  layer["b_ih"], layer["b_hh"])
        hs.append(h)
        cs.append(c)
    return jnp.stack(hs, 0), jnp.stack(cs, 0)


# ------------------------------ Param init --------------------------------- #

def init_params(key, input_dim, emb_dim, hid_dim, n_layers):
    k_emb, key = jax.random.split(key)
    params = {
        "embedding": jax.random.normal(k_emb, (input_dim, emb_dim), jnp.float32),
        "lstm": [],
    }
    bound = 1.0 / jnp.sqrt(hid_dim)
    in_dim = emb_dim
    for _ in range(n_layers):
        k1, k2, k3, k4, key = jax.random.split(key, 5)
        layer = {
            "w_ih": jax.random.uniform(k1, (4 * hid_dim, in_dim), jnp.float32,
                                       -bound, bound),
            "w_hh": jax.random.uniform(k2, (4 * hid_dim, hid_dim), jnp.float32,
                                       -bound, bound),
            "b_ih": jax.random.uniform(k3, (4 * hid_dim,), jnp.float32,
                                       -bound, bound),
            "b_hh": jax.random.uniform(k4, (4 * hid_dim,), jnp.float32,
                                       -bound, bound),
        }
        params["lstm"].append(layer)
        in_dim = hid_dim
    return params


# --------------------------------- Main ------------------------------------ #

if __name__ == "__main__":
    INPUT_DIM, EMB_DIM, HID_DIM, N_LAYERS = 50, 16, 32, 2
    SEQ_LEN, BATCH = 8, 2

    key = jax.random.PRNGKey(0)
    k_params, k_src = jax.random.split(key)
    params = init_params(k_params, INPUT_DIM, EMB_DIM, HID_DIM, N_LAYERS)
    src = jax.random.randint(k_src, (SEQ_LEN, BATCH), 0, INPUT_DIM,
                             dtype=jnp.int32)

    hidden, cell = encoder_forward(params, src)
    jax.block_until_ready((hidden, cell))

    h_ref, c_ref = encoder_ref(params, src)
    assert hidden.shape == (N_LAYERS, BATCH, HID_DIM)
    assert cell.shape == (N_LAYERS, BATCH, HID_DIM)
    # Tolerance loosened vs. pure-f32: matmul operands are bf16 (f32 accum).
    assert jnp.allclose(hidden, h_ref, atol=5e-2), "hidden mismatch vs reference"
    assert jnp.allclose(cell, c_ref, atol=5e-2), "cell mismatch vs reference"

    print("KERNEL_OK")
</pallas_src>

<mosaic_0001>
module attributes {stable_mosaic.version = 11 : i64} {
  func.func @_encoder_lstm_kernel(%arg0: memref<64x128xbf16, #tpu.memory_space<vmem>>, %arg1: memref<128x128xbf16, #tpu.memory_space<vmem>>, %arg2: memref<128x128xbf16, #tpu.memory_space<vmem>>, %arg3: memref<1x128xf32, #tpu.memory_space<vmem>>, %arg4: memref<128x128xbf16, #tpu.memory_space<vmem>>, %arg5: memref<128x128xbf16, #tpu.memory_space<vmem>>, %arg6: memref<1x128xf32, #tpu.memory_space<vmem>>, %arg7: memref<2x8x128xf32, #tpu.memory_space<vmem>>, %arg8: memref<2x8x128xf32, #tpu.memory_space<vmem>>, %arg9: memref<64x128xf32, #tpu.memory_space<vmem>>, %arg10: memref<64x128xf32, #tpu.memory_space<vmem>>, %arg11: memref<8x128xf32, #tpu.memory_space<vmem>>, %arg12: memref<8x128xf32, #tpu.memory_space<vmem>>) attributes {dimension_semantics = [], scalar_prefetch = 0 : i64, scratch_operands = 4 : i64, tpu.core_type = #tpu.core_type<tc>} {
    %cst = arith.constant 0.000000e+00 : f32
    %0 = vector.broadcast %cst : f32 to vector<64x128xf32>
    %c0 = arith.constant 0 : index
    %c0_0 = arith.constant 0 : index
    %1 = vector.load %arg10[%c0, %c0_0] : memref<64x128xf32, #tpu.memory_space<vmem>>, vector<64x128xf32>
    tpu.vector_store %arg10[%c0, %c0_0], %0 {strides = array<i32>} : memref<64x128xf32, #tpu.memory_space<vmem>>, vector<64x128xf32>,
    %c0_1 = arith.constant 0 : index
    %c0_2 = arith.constant 0 : index
    %2 = vector.load %arg0[%c0_1, %c0_2] : memref<64x128xbf16, #tpu.memory_space<vmem>>, vector<64x128xbf16>
    %c0_3 = arith.constant 0 : index
    %c0_4 = arith.constant 0 : index
    %3 = vector.load %arg1[%c0_3, %c0_4] : memref<128x128xbf16, #tpu.memory_space<vmem>>, vector<128x128xbf16>
    %cst_5 = arith.constant dense<0.000000e+00> : vector<64x128xf32>
    %4 = tpu.matmul %2, %3, %cst_5 {dimension_numbers = #tpu.dot_dimension_numbers<[1], [0], [0], [1], [0, 0, 1, 1], [], []>} : vector<64x128xbf16>, vector<128x128xbf16>, vector<64x128xf32> -> vector<64x128xf32>
    %c0_6 = arith.constant 0 : index
    %c0_7 = arith.constant 0 : index
    %5 = vector.load %arg3[%c0_6, %c0_7] : memref<1x128xf32, #tpu.memory_space<vmem>>, vector<1x128xf32>
    %6 = vector.broadcast %5 : vector<1x128xf32> to vector<64x128xf32>
    %7 = arith.addf %4, %6 : vector<64x128xf32>
    %c0_8 = arith.constant 0 : index
    %c0_9 = arith.constant 0 : index
    %8 = vector.load %arg9[%c0_8, %c0_9] : memref<64x128xf32, #tpu.memory_space<vmem>>, vector<64x128xf32>
    tpu.vector_store %arg9[%c0_8, %c0_9], %7 {strides = array<i32>} : memref<64x128xf32, #tpu.memory_space<vmem>>, vector<64x128xf32>,
    %cst_10 = arith.constant 0.000000e+00 : f32
    %9 = vector.broadcast %cst_10 : f32 to vector<8x128xf32>
    %c0_11 = arith.constant 0 : index
    %c0_12 = arith.constant 0 : index
    %10 = vector.load %arg11[%c0_11, %c0_12] : memref<8x128xf32, #tpu.memory_space<vmem>>, vector<8x128xf32>
    tpu.vector_store %arg11[%c0_11, %c0_12], %9 {strides = array<i32>} : memref<8x128xf32, #tpu.memory_space<vmem>>, vector<8x128xf32>,
    %cst_13 = arith.constant 0.000000e+00 : f32
    %11 = vector.broadcast %cst_13 : f32 to vector<8x128xf32>
    %c0_14 = arith.constant 0 : index
    %c0_15 = arith.constant 0 : index
    %12 = vector.load %arg12[%c0_14, %c0_15] : memref<8x128xf32, #tpu.memory_space<vmem>>, vector<8x128xf32>
    tpu.vector_store %arg12[%c0_14, %c0_15], %11 {strides = array<i32>} : memref<8x128xf32, #tpu.memory_space<vmem>>, vector<8x128xf32>,
    %c0_16 = arith.constant 0 : index
    %c0_17 = arith.constant 0 : index
    %13 = vector.load %arg9[%c0_16, %c0_17] : memref<64x128xf32, #tpu.memory_space<vmem>>, vector<8x128xf32>
    %c0_18 = arith.constant 0 : index
    %c0_19 = arith.constant 0 : index
    %14 = vector.load %arg11[%c0_18, %c0_19] : memref<8x128xf32, #tpu.memory_space<vmem>>, vector<8x128xf32>
    %15 = arith.truncf %14 : vector<8x128xf32> to vector<8x128xbf16>
    %c0_20 = arith.constant 0 : index
    %c0_21 = arith.constant 0 : index
    %16 = vector.load %arg2[%c0_20, %c0_21] : memref<128x128xbf16, #tpu.memory_space<vmem>>, vector<128x128xbf16>
    %cst_22 = arith.constant dense<0.000000e+00> : vector<8x128xf32>
    %17 = tpu.matmul %15, %16, %cst_22 {dimension_numbers = #tpu.dot_dimension_numbers<[1], [0], [0], [1], [0, 0, 1, 1], [], []>} : vector<8x128xbf16>, vector<128x128xbf16>, vector<8x128xf32> -> vector<8x128xf32>
    %18 = arith.addf %13, %17 : vector<8x128xf32>
    %19 = vector.extract_strided_slice %18 {offsets = [0, 0], sizes = [8, 96], strides = [1, 1]} : vector<8x128xf32> to vector<8x96xf32>
    %20 = arith.negf %19 : vector<8x96xf32>
    %21 = math.exp %20 : vector<8x96xf32>
    %cst_23 = arith.constant 1.000000e+00 : f32
    %22 = vector.broadcast %cst_23 : f32 to vector<8x96xf32>
    %23 = arith.addf %22, %21 : vector<8x96xf32>
    %24 = arith.divf %22, %23 : vector<8x96xf32>
    %25 = vector.extract_strided_slice %24 {offsets = [0, 0], sizes = [8, 32], strides = [1, 1]} : vector<8x96xf32> to vector<8x32xf32>
    %26 = vector.extract_strided_slice %24 {offsets = [0, 32], sizes = [8, 32], strides = [1, 1]} : vector<8x96xf32> to vector<8x32xf32>
    %27 = vector.extract_strided_slice %24 {offsets = [0, 64], sizes = [8, 32], strides = [1, 1]} : vector<8x96xf32> to vector<8x32xf32>
    %28 = vector.extract_strided_slice %18 {offsets = [0, 96], sizes = [8, 32], strides = [1, 1]} : vector<8x128xf32> to vector<8x32xf32>
    %29 = math.tanh %28 : vector<8x32xf32>
    %c0_24 = arith.constant 0 : index
    %c0_25 = arith.constant 0 : index
    %30 = vector.load %arg12[%c0_24, %c0_25] : memref<8x128xf32, #tpu.memory_space<vmem>>, vector<8x32xf32>
    %31 = arith.mulf %26, %30 : vector<8x32xf32>
    %32 = arith.mulf %25, %29 : vector<8x32xf32>
    %33 = arith.addf %31, %32 : vector<8x32xf32>
    %34 = math.tanh %33 : vector<8x32xf32>
    %35 = arith.mulf %27, %34 : vector<8x32xf32>
    %c0_26 = arith.constant 0 : index
    %c0_27 = arith.constant 0 : index
    %36 = vector.load %arg12[%c0_26, %c0_27] : memref<8x128xf32, #tpu.memory_space<vmem>>, vector<8x32xf32>
    tpu.vector_store %arg12[%c0_26, %c0_27], %33 {strides = array<i32>} : memref<8x128xf32, #tpu.memory_space<vmem>>, vector<8x32xf32>,
    %c0_28 = arith.constant 0 : index
    %c0_29 = arith.constant 0 : index
    %37 = vector.load %arg11[%c0_28, %c0_29] : memref<8x128xf32, #tpu.memory_space<vmem>>, vector<8x32xf32>
    tpu.vector_store %arg11[%c0_28, %c0_29], %35 {strides = array<i32>} : memref<8x128xf32, #tpu.memory_space<vmem>>, vector<8x32xf32>,
    %c0_30 = arith.constant 0 : index
    %c0_31 = arith.constant 0 : index
    %38 = vector.load %arg10[%c0_30, %c0_31] : memref<64x128xf32, #tpu.memory_space<vmem>>, vector<8x32xf32>
    tpu.vector_store %arg10[%c0_30, %c0_31], %35 {strides = array<i32>} : memref<64x128xf32, #tpu.memory_space<vmem>>, vector<8x32xf32>,
    %c8 = arith.constant 8 : index
    %c0_32 = arith.constant 0 : index
    %39 = vector.load %arg9[%c8, %c0_32] : memref<64x128xf32, #tpu.memory_space<vmem>>, vector<8x128xf32>
    %c0_33 = arith.constant 0 : index
    %c0_34 = arith.constant 0 : index
    %40 = vector.load %arg11[%c0_33, %c0_34] : memref<8x128xf32, #tpu.memory_space<vmem>>, vector<8x128xf32>
    %41 = arith.truncf %40 : vector<8x128xf32> to vector<8x128xbf16>
    %c0_35 = arith.constant 0 : index
    %c0_36 = arith.constant 0 : index
    %42 = vector.load %arg2[%c0_35, %c0_36] : memref<128x128xbf16, #tpu.memory_space<vmem>>, vector<128x128xbf16>
    %cst_37 = arith.constant dense<0.000000e+00> : vector<8x128xf32>
    %43 = tpu.matmul %41, %42, %cst_37 {dimension_numbers = #tpu.dot_dimension_numbers<[1], [0], [0], [1], [0, 0, 1, 1], [], []>} : vector<8x128xbf16>, vector<128x128xbf16>, vector<8x128xf32> -> vector<8x128xf32>
    %44 = arith.addf %39, %43 : vector<8x128xf32>
    %45 = vector.extract_strided_slice %44 {offsets = [0, 0], sizes = [8, 96], strides = [1, 1]} : vector<8x128xf32> to vector<8x96xf32>
    %46 = arith.negf %45 : vector<8x96xf32>
    %47 = math.exp %46 : vector<8x96xf32>
    %cst_38 = arith.constant 1.000000e+00 : f32
    %48 = vector.broadcast %cst_38 : f32 to vector<8x96xf32>
    %49 = arith.addf %48, %47 : vector<8x96xf32>
    %50 = arith.divf %48, %49 : vector<8x96xf32>
    %51 = vector.extract_strided_slice %50 {offsets = [0, 0], sizes = [8, 32], strides = [1, 1]} : vector<8x96xf32> to vector<8x32xf32>
    %52 = vector.extract_strided_slice %50 {offsets = [0, 32], sizes = [8, 32], strides = [1, 1]} : vector<8x96xf32> to vector<8x32xf32>
    %53 = vector.extract_strided_slice %50 {offsets = [0, 64], sizes = [8, 32], strides = [1, 1]} : vector<8x96xf32> to vector<8x32xf32>
    %54 = vector.extract_strided_slice %44 {offsets = [0, 96], sizes = [8, 32], strides = [1, 1]} : vector<8x128xf32> to vector<8x32xf32>
    %55 = math.tanh %54 : vector<8x32xf32>
    %c0_39 = arith.constant 0 : index
    %c0_40 = arith.constant 0 : index
    %56 = vector.load %arg12[%c0_39, %c0_40] : memref<8x128xf32, #tpu.memory_space<vmem>>, vector<8x32xf32>
    %57 = arith.mulf %52, %56 : vector<8x32xf32>
    %58 = arith.mulf %51, %55 : vector<8x32xf32>
    %59 = arith.addf %57, %58 : vector<8x32xf32>
    %60 = math.tanh %59 : vector<8x32xf32>
    %61 = arith.mulf %53, %60 : vector<8x32xf32>
    %c0_41 = arith.constant 0 : index
    %c0_42 = arith.constant 0 : index
    %62 = vector.load %arg12[%c0_41, %c0_42] : memref<8x128xf32, #tpu.memory_space<vmem>>, vector<8x32xf32>
    tpu.vector_store %arg12[%c0_41, %c0_42], %59 {strides = array<i32>} : memref<8x128xf32, #tpu.memory_space<vmem>>, vector<8x32xf32>,
    %c0_43 = arith.constant 0 : index
    %c0_44 = arith.constant 0 : index
    %63 = vector.load %arg11[%c0_43, %c0_44] : memref<8x128xf32, #tpu.memory_space<vmem>>, vector<8x32xf32>
    tpu.vector_store %arg11[%c0_43, %c0_44], %61 {strides = array<i32>} : memref<8x128xf32, #tpu.memory_space<vmem>>, vector<8x32xf32>,
    %c8_45 = arith.constant 8 : index
    %c0_46 = arith.constant 0 : index
    %64 = vector.load %arg10[%c8_45, %c0_46] : memref<64x128xf32, #tpu.memory_space<vmem>>, vector<8x32xf32>
    tpu.vector_store %arg10[%c8_45, %c0_46], %61 {strides = array<i32>} : memref<64x128xf32, #tpu.memory_space<vmem>>, vector<8x32xf32>,
    %c16 = arith.constant 16 : index
    %c0_47 = arith.constant 0 : index
    %65 = vector.load %arg9[%c16, %c0_47] : memref<64x128xf32, #tpu.memory_space<vmem>>, vector<8x128xf32>
    %c0_48 = arith.constant 0 : index
    %c0_49 = arith.constant 0 : index
    %66 = vector.load %arg11[%c0_48, %c0_49] : memref<8x128xf32, #tpu.memory_space<vmem>>, vector<8x128xf32>
    %67 = arith.truncf %66 : vector<8x128xf32> to vector<8x128xbf16>
    %c0_50 = arith.constant 0 : index
    %c0_51 = arith.constant 0 : index
    %68 = vector.load %arg2[%c0_50, %c0_51] : memref<128x128xbf16, #tpu.memory_space<vmem>>, vector<128x128xbf16>
    %cst_52 = arith.constant dense<0.000000e+00> : vector<8x128xf32>
    %69 = tpu.matmul %67, %68, %cst_52 {dimension_numbers = #tpu.dot_dimension_numbers<[1], [0], [0], [1], [0, 0, 1, 1], [], []>} : vector<8x128xbf16>, vector<128x128xbf16>, vector<8x128xf32> -> vector<8x128xf32>
    %70 = arith.addf %65, %69 : vector<8x128xf32>
    %71 = vector.extract_strided_slice %70 {offsets = [0, 0], sizes = [8, 96], strides = [1, 1]} : vector<8x128xf32> to vector<8x96xf32>
    %72 = arith.negf %71 : vector<8x96xf32>
    %73 = math.exp %72 : vector<8x96xf32>
    %cst_53 = arith.constant 1.000000e+00 : f32
    %74 = vector.broadcast %cst_53 : f32 to vector<8x96xf32>
    %75 = arith.addf %74, %73 : vector<8x96xf32>
    %76 = arith.divf %74, %75 : vector<8x96xf32>
    %77 = vector.extract_strided_slice %76 {offsets = [0, 0], sizes = [8, 32], strides = [1, 1]} : vector<8x96xf32> to vector<8x32xf32>
    %78 = vector.extract_strided_slice %76 {offsets = [0, 32], sizes = [8, 32], strides = [1, 1]} : vector<8x96xf32> to vector<8x32xf32>
    %79 = vector.extract_strided_slice %76 {offsets = [0, 64], sizes = [8, 32], strides = [1, 1]} : vector<8x96xf32> to vector<8x32xf32>
    %80 = vector.extract_strided_slice %70 {offsets = [0, 96], sizes = [8, 32], strides = [1, 1]} : vector<8x128xf32> to vector<8x32xf32>
    %81 = math.tanh %80 : vector<8x32xf32>
    %c0_54 = arith.constant 0 : index
    %c0_55 = arith.constant 0 : index
    %82 = vector.load %arg12[%c0_54, %c0_55] : memref<8x128xf32, #tpu.memory_space<vmem>>, vector<8x32xf32>
    %83 = arith.mulf %78, %82 : vector<8x32xf32>
    %84 = arith.mulf %77, %81 : vector<8x32xf32>
    %85 = arith.addf %83, %84 : vector<8x32xf32>
    %86 = math.tanh %85 : vector<8x32xf32>
    %87 = arith.mulf %79, %86 : vector<8x32xf32>
    %c0_56 = arith.constant 0 : index
    %c0_57 = arith.constant 0 : index
    %88 = vector.load %arg12[%c0_56, %c0_57] : memref<8x128xf32, #tpu.memory_space<vmem>>, vector<8x32xf32>
    tpu.vector_store %arg12[%c0_56, %c0_57], %85 {strides = array<i32>} : memref<8x128xf32, #tpu.memory_space<vmem>>, vector<8x32xf32>,
    %c0_58 = arith.constant 0 : index
    %c0_59 = arith.constant 0 : index
    %89 = vector.load %arg11[%c0_58, %c0_59] : memref<8x128xf32, #tpu.memory_space<vmem>>, vector<8x32xf32>
    tpu.vector_store %arg11[%c0_58, %c0_59], %87 {strides = array<i32>} : memref<8x128xf32, #tpu.memory_space<vmem>>, vector<8x32xf32>,
    %c16_60 = arith.constant 16 : index
    %c0_61 = arith.constant 0 : index
    %90 = vector.load %arg10[%c16_60, %c0_61] : memref<64x128xf32, #tpu.memory_space<vmem>>, vector<8x32xf32>
    tpu.vector_store %arg10[%c16_60, %c0_61], %87 {strides = array<i32>} : memref<64x128xf32, #tpu.memory_space<vmem>>, vector<8x32xf32>,
    %c24 = arith.constant 24 : index
    %c0_62 = arith.constant 0 : index
    %91 = vector.load %arg9[%c24, %c0_62] : memref<64x128xf32, #tpu.memory_space<vmem>>, vector<8x128xf32>
    %c0_63 = arith.constant 0 : index
    %c0_64 = arith.constant 0 : index
    %92 = vector.load %arg11[%c0_63, %c0_64] : memref<8x128xf32, #tpu.memory_space<vmem>>, vector<8x128xf32>
    %93 = arith.truncf %92 : vector<8x128xf32> to vector<8x128xbf16>
    %c0_65 = arith.constant 0 : index
    %c0_66 = arith.constant 0 : index
    %94 = vector.load %arg2[%c0_65, %c0_66] : memref<128x128xbf16, #tpu.memory_space<vmem>>, vector<128x128xbf16>
    %cst_67 = arith.constant dense<0.000000e+00> : vector<8x128xf32>
    %95 = tpu.matmul %93, %94, %cst_67 {dimension_numbers = #tpu.dot_dimension_numbers<[1], [0], [0], [1], [0, 0, 1, 1], [], []>} : vector<8x128xbf16>, vector<128x128xbf16>, vector<8x128xf32> -> vector<8x128xf32>
    %96 = arith.addf %91, %95 : vector<8x128xf32>
    %97 = vector.extract_strided_slice %96 {offsets = [0, 0], sizes = [8, 96], strides = [1, 1]} : vector<8x128xf32> to vector<8x96xf32>
    %98 = arith.negf %97 : vector<8x96xf32>
    %99 = math.exp %98 : vector<8x96xf32>
    %cst_68 = arith.constant 1.000000e+00 : f32
    %100 = vector.broadcast %cst_68 : f32 to vector<8x96xf32>
    %101 = arith.addf %100, %99 : vector<8x96xf32>
    %102 = arith.divf %100, %101 : vector<8x96xf32>
    %103 = vector.extract_strided_slice %102 {offsets = [0, 0], sizes = [8, 32], strides = [1, 1]} : vector<8x96xf32> to vector<8x32xf32>
    %104 = vector.extract_strided_slice %102 {offsets = [0, 32], sizes = [8, 32], strides = [1, 1]} : vector<8x96xf32> to vector<8x32xf32>
    %105 = vector.extract_strided_slice %102 {offsets = [0, 64], sizes = [8, 32], strides = [1, 1]} : vector<8x96xf32> to vector<8x32xf32>
    %106 = vector.extract_strided_slice %96 {offsets = [0, 96], sizes = [8, 32], strides = [1, 1]} : vector<8x128xf32> to vector<8x32xf32>
    %107 = math.tanh %106 : vector<8x32xf32>
    %c0_69 = arith.constant 0 : index
    %c0_70 = arith.constant 0 : index
    %108 = vector.load %arg12[%c0_69, %c0_70] : memref<8x128xf32, #tpu.memory_space<vmem>>, vector<8x32xf32>
    %109 = arith.mulf %104, %108 : vector<8x32xf32>
    %110 = arith.mulf %103, %107 : vector<8x32xf32>
    %111 = arith.addf %109, %110 : vector<8x32xf32>
    %112 = math.tanh %111 : vector<8x32xf32>
    %113 = arith.mulf %105, %112 : vector<8x32xf32>
    %c0_71 = arith.constant 0 : index
    %c0_72 = arith.constant 0 : index
    %114 = vector.load %arg12[%c0_71, %c0_72] : memref<8x128xf32, #tpu.memory_space<vmem>>, vector<8x32xf32>
    tpu.vector_store %arg12[%c0_71, %c0_72], %111 {strides = array<i32>} : memref<8x128xf32, #tpu.memory_space<vmem>>, vector<8x32xf32>,
    %c0_73 = arith.constant 0 : index
    %c0_74 = arith.constant 0 : index
    %115 = vector.load %arg11[%c0_73, %c0_74] : memref<8x128xf32, #tpu.memory_space<vmem>>, vector<8x32xf32>
    tpu.vector_store %arg11[%c0_73, %c0_74], %113 {strides = array<i32>} : memref<8x128xf32, #tpu.memory_space<vmem>>, vector<8x32xf32>,
    %c24_75 = arith.constant 24 : index
    %c0_76 = arith.constant 0 : index
    %116 = vector.load %arg10[%c24_75, %c0_76] : memref<64x128xf32, #tpu.memory_space<vmem>>, vector<8x32xf32>
    tpu.vector_store %arg10[%c24_75, %c0_76], %113 {strides = array<i32>} : memref<64x128xf32, #tpu.memory_space<vmem>>, vector<8x32xf32>,
    %c32 = arith.constant 32 : index
    %c0_77 = arith.constant 0 : index
    %117 = vector.load %arg9[%c32, %c0_77] : memref<64x128xf32, #tpu.memory_space<vmem>>, vector<8x128xf32>
    %c0_78 = arith.constant 0 : index
    %c0_79 = arith.constant 0 : index
    %118 = vector.load %arg11[%c0_78, %c0_79] : memref<8x128xf32, #tpu.memory_space<vmem>>, vector<8x128xf32>
    %119 = arith.truncf %118 : vector<8x128xf32> to vector<8x128xbf16>
    %c0_80 = arith.constant 0 : index
    %c0_81 = arith.constant 0 : index
    %120 = vector.load %arg2[%c0_80, %c0_81] : memref<128x128xbf16, #tpu.memory_space<vmem>>, vector<128x128xbf16>
    %cst_82 = arith.constant dense<0.000000e+00> : vector<8x128xf32>
    %121 = tpu.matmul %119, %120, %cst_82 {dimension_numbers = #tpu.dot_dimension_numbers<[1], [0], [0], [1], [0, 0, 1, 1], [], []>} : vector<8x128xbf16>, vector<128x128xbf16>, vector<8x128xf32> -> vector<8x128xf32>
    %122 = arith.addf %117, %121 : vector<8x128xf32>
    %123 = vector.extract_strided_slice %122 {offsets = [0, 0], sizes = [8, 96], strides = [1, 1]} : vector<8x128xf32> to vector<8x96xf32>
    %124 = arith.negf %123 : vector<8x96xf32>
    %125 = math.exp %124 : vector<8x96xf32>
    %cst_83 = arith.constant 1.000000e+00 : f32
    %126 = vector.broadcast %cst_83 : f32 to vector<8x96xf32>
    %127 = arith.addf %126, %125 : vector<8x96xf32>
    %128 = arith.divf %126, %127 : vector<8x96xf32>
    %129 = vector.extract_strided_slice %128 {offsets = [0, 0], sizes = [8, 32], strides = [1, 1]} : vector<8x96xf32> to vector<8x32xf32>
    %130 = vector.extract_strided_slice %128 {offsets = [0, 32], sizes = [8, 32], strides = [1, 1]} : vector<8x96xf32> to vector<8x32xf32>
    %131 = vector.extract_strided_slice %128 {offsets = [0, 64], sizes = [8, 32], strides = [1, 1]} : vector<8x96xf32> to vector<8x32xf32>
    %132 = vector.extract_strided_slice %122 {offsets = [0, 96], sizes = [8, 32], strides = [1, 1]} : vector<8x128xf32> to vector<8x32xf32>
    %133 = math.tanh %132 : vector<8x32xf32>
    %c0_84 = arith.constant 0 : index
    %c0_85 = arith.constant 0 : index
    %134 = vector.load %arg12[%c0_84, %c0_85] : memref<8x128xf32, #tpu.memory_space<vmem>>, vector<8x32xf32>
    %135 = arith.mulf %130, %134 : vector<8x32xf32>
    %136 = arith.mulf %129, %133 : vector<8x32xf32>
    %137 = arith.addf %135, %136 : vector<8x32xf32>
    %138 = math.tanh %137 : vector<8x32xf32>
    %139 = arith.mulf %131, %138 : vector<8x32xf32>
    %c0_86 = arith.constant 0 : index
    %c0_87 = arith.constant 0 : index
    %140 = vector.load %arg12[%c0_86, %c0_87] : memref<8x128xf32, #tpu.memory_space<vmem>>, vector<8x32xf32>
    tpu.vector_store %arg12[%c0_86, %c0_87], %137 {strides = array<i32>} : memref<8x128xf32, #tpu.memory_space<vmem>>, vector<8x32xf32>,
    %c0_88 = arith.constant 0 : index
    %c0_89 = arith.constant 0 : index
    %141 = vector.load %arg11[%c0_88, %c0_89] : memref<8x128xf32, #tpu.memory_space<vmem>>, vector<8x32xf32>
    tpu.vector_store %arg11[%c0_88, %c0_89], %139 {strides = array<i32>} : memref<8x128xf32, #tpu.memory_space<vmem>>, vector<8x32xf32>,
    %c32_90 = arith.constant 32 : index
    %c0_91 = arith.constant 0 : index
    %142 = vector.load %arg10[%c32_90, %c0_91] : memref<64x128xf32, #tpu.memory_space<vmem>>, vector<8x32xf32>
    tpu.vector_store %arg10[%c32_90, %c0_91], %139 {strides = array<i32>} : memref<64x128xf32, #tpu.memory_space<vmem>>, vector<8x32xf32>,
    %c40 = arith.constant 40 : index
    %c0_92 = arith.constant 0 : index
    %143 = vector.load %arg9[%c40, %c0_92] : memref<64x128xf32, #tpu.memory_space<vmem>>, vector<8x128xf32>
    %c0_93 = arith.constant 0 : index
    %c0_94 = arith.constant 0 : index
    %144 = vector.load %arg11[%c0_93, %c0_94] : memref<8x128xf32, #tpu.memory_space<vmem>>, vector<8x128xf32>
    %145 = arith.truncf %144 : vector<8x128xf32> to vector<8x128xbf16>
    %c0_95 = arith.constant 0 : index
    %c0_96 = arith.constant 0 : index
    %146 = vector.load %arg2[%c0_95, %c0_96] : memref<128x128xbf16, #tpu.memory_space<vmem>>, vector<128x128xbf16>
    %cst_97 = arith.constant dense<0.000000e+00> : vector<8x128xf32>
    %147 = tpu.matmul %145, %146, %cst_97 {dimension_numbers = #tpu.dot_dimension_numbers<[1], [0], [0], [1], [0, 0, 1, 1], [], []>} : vector<8x128xbf16>, vector<128x128xbf16>, vector<8x128xf32> -> vector<8x128xf32>
    %148 = arith.addf %143, %147 : vector<8x128xf32>
    %149 = vector.extract_strided_slice %148 {offsets = [0, 0], sizes = [8, 96], strides = [1, 1]} : vector<8x128xf32> to vector<8x96xf32>
    %150 = arith.negf %149 : vector<8x96xf32>
    %151 = math.exp %150 : vector<8x96xf32>
    %cst_98 = arith.constant 1.000000e+00 : f32
    %152 = vector.broadcast %cst_98 : f32 to vector<8x96xf32>
    %153 = arith.addf %152, %151 : vector<8x96xf32>
    %154 = arith.divf %152, %153 : vector<8x96xf32>
    %155 = vector.extract_strided_slice %154 {offsets = [0, 0], sizes = [8, 32], strides = [1, 1]} : vector<8x96xf32> to vector<8x32xf32>
    %156 = vector.extract_strided_slice %154 {offsets = [0, 32], sizes = [8, 32], strides = [1, 1]} : vector<8x96xf32> to vector<8x32xf32>
    %157 = vector.extract_strided_slice %154 {offsets = [0, 64], sizes = [8, 32], strides = [1, 1]} : vector<8x96xf32> to vector<8x32xf32>
    %158 = vector.extract_strided_slice %148 {offsets = [0, 96], sizes = [8, 32], strides = [1, 1]} : vector<8x128xf32> to vector<8x32xf32>
    %159 = math.tanh %158 : vector<8x32xf32>
    %c0_99 = arith.constant 0 : index
    %c0_100 = arith.constant 0 : index
    %160 = vector.load %arg12[%c0_99, %c0_100] : memref<8x128xf32, #tpu.memory_space<vmem>>, vector<8x32xf32>
    %161 = arith.mulf %156, %160 : vector<8x32xf32>
    %162 = arith.mulf %155, %159 : vector<8x32xf32>
    %163 = arith.addf %161, %162 : vector<8x32xf32>
    %164 = math.tanh %163 : vector<8x32xf32>
    %165 = arith.mulf %157, %164 : vector<8x32xf32>
    %c0_101 = arith.constant 0 : index
    %c0_102 = arith.constant 0 : index
    %166 = vector.load %arg12[%c0_101, %c0_102] : memref<8x128xf32, #tpu.memory_space<vmem>>, vector<8x32xf32>
    tpu.vector_store %arg12[%c0_101, %c0_102], %163 {strides = array<i32>} : memref<8x128xf32, #tpu.memory_space<vmem>>, vector<8x32xf32>,
    %c0_103 = arith.constant 0 : index
    %c0_104 = arith.constant 0 : index
    %167 = vector.load %arg11[%c0_103, %c0_104] : memref<8x128xf32, #tpu.memory_space<vmem>>, vector<8x32xf32>
    tpu.vector_store %arg11[%c0_103, %c0_104], %165 {strides = array<i32>} : memref<8x128xf32, #tpu.memory_space<vmem>>, vector<8x32xf32>,
    %c40_105 = arith.constant 40 : index
    %c0_106 = arith.constant 0 : index
    %168 = vector.load %arg10[%c40_105, %c0_106] : memref<64x128xf32, #tpu.memory_space<vmem>>, vector<8x32xf32>
    tpu.vector_store %arg10[%c40_105, %c0_106], %165 {strides = array<i32>} : memref<64x128xf32, #tpu.memory_space<vmem>>, vector<8x32xf32>,
    %c48 = arith.constant 48 : index
    %c0_107 = arith.constant 0 : index
    %169 = vector.load %arg9[%c48, %c0_107] : memref<64x128xf32, #tpu.memory_space<vmem>>, vector<8x128xf32>
    %c0_108 = arith.constant 0 : index
    %c0_109 = arith.constant 0 : index
    %170 = vector.load %arg11[%c0_108, %c0_109] : memref<8x128xf32, #tpu.memory_space<vmem>>, vector<8x128xf32>
    %171 = arith.truncf %170 : vector<8x128xf32> to vector<8x128xbf16>
    %c0_110 = arith.constant 0 : index
    %c0_111 = arith.constant 0 : index
    %172 = vector.load %arg2[%c0_110, %c0_111] : memref<128x128xbf16, #tpu.memory_space<vmem>>, vector<128x128xbf16>
    %cst_112 = arith.constant dense<0.000000e+00> : vector<8x128xf32>
    %173 = tpu.matmul %171, %172, %cst_112 {dimension_numbers = #tpu.dot_dimension_numbers<[1], [0], [0], [1], [0, 0, 1, 1], [], []>} : vector<8x128xbf16>, vector<128x128xbf16>, vector<8x128xf32> -> vector<8x128xf32>
    %174 = arith.addf %169, %173 : vector<8x128xf32>
    %175 = vector.extract_strided_slice %174 {offsets = [0, 0], sizes = [8, 96], strides = [1, 1]} : vector<8x128xf32> to vector<8x96xf32>
    %176 = arith.negf %175 : vector<8x96xf32>
    %177 = math.exp %176 : vector<8x96xf32>
    %cst_113 = arith.constant 1.000000e+00 : f32
    %178 = vector.broadcast %cst_113 : f32 to vector<8x96xf32>
    %179 = arith.addf %178, %177 : vector<8x96xf32>
    %180 = arith.divf %178, %179 : vector<8x96xf32>
    %181 = vector.extract_strided_slice %180 {offsets = [0, 0], sizes = [8, 32], strides = [1, 1]} : vector<8x96xf32> to vector<8x32xf32>
    %182 = vector.extract_strided_slice %180 {offsets = [0, 32], sizes = [8, 32], strides = [1, 1]} : vector<8x96xf32> to vector<8x32xf32>
    %183 = vector.extract_strided_slice %180 {offsets = [0, 64], sizes = [8, 32], strides = [1, 1]} : vector<8x96xf32> to vector<8x32xf32>
    %184 = vector.extract_strided_slice %174 {offsets = [0, 96], sizes = [8, 32], strides = [1, 1]} : vector<8x128xf32> to vector<8x32xf32>
    %185 = math.tanh %184 : vector<8x32xf32>
    %c0_114 = arith.constant 0 : index
    %c0_115 = arith.constant 0 : index
    %186 = vector.load %arg12[%c0_114, %c0_115] : memref<8x128xf32, #tpu.memory_space<vmem>>, vector<8x32xf32>
    %187 = arith.mulf %182, %186 : vector<8x32xf32>
    %188 = arith.mulf %181, %185 : vector<8x32xf32>
    %189 = arith.addf %187, %188 : vector<8x32xf32>
    %190 = math.tanh %189 : vector<8x32xf32>
    %191 = arith.mulf %183, %190 : vector<8x32xf32>
    %c0_116 = arith.constant 0 : index
    %c0_117 = arith.constant 0 : index
    %192 = vector.load %arg12[%c0_116, %c0_117] : memref<8x128xf32, #tpu.memory_space<vmem>>, vector<8x32xf32>
    tpu.vector_store %arg12[%c0_116, %c0_117], %189 {strides = array<i32>} : memref<8x128xf32, #tpu.memory_space<vmem>>, vector<8x32xf32>,
    %c0_118 = arith.constant 0 : index
    %c0_119 = arith.constant 0 : index
    %193 = vector.load %arg11[%c0_118, %c0_119] : memref<8x128xf32, #tpu.memory_space<vmem>>, vector<8x32xf32>
    tpu.vector_store %arg11[%c0_118, %c0_119], %191 {strides = array<i32>} : memref<8x128xf32, #tpu.memory_space<vmem>>, vector<8x32xf32>,
    %c48_120 = arith.constant 48 : index
    %c0_121 = arith.constant 0 : index
    %194 = vector.load %arg10[%c48_120, %c0_121] : memref<64x128xf32, #tpu.memory_space<vmem>>, vector<8x32xf32>
    tpu.vector_store %arg10[%c48_120, %c0_121], %191 {strides = array<i32>} : memref<64x128xf32, #tpu.memory_space<vmem>>, vector<8x32xf32>,
    %c56 = arith.constant 56 : index
    %c0_122 = arith.constant 0 : index
    %195 = vector.load %arg9[%c56, %c0_122] : memref<64x128xf32, #tpu.memory_space<vmem>>, vector<8x128xf32>
    %c0_123 = arith.constant 0 : index
    %c0_124 = arith.constant 0 : index
    %196 = vector.load %arg11[%c0_123, %c0_124] : memref<8x128xf32, #tpu.memory_space<vmem>>, vector<8x128xf32>
    %197 = arith.truncf %196 : vector<8x128xf32> to vector<8x128xbf16>
    %c0_125 = arith.constant 0 : index
    %c0_126 = arith.constant 0 : index
    %198 = vector.load %arg2[%c0_125, %c0_126] : memref<128x128xbf16, #tpu.memory_space<vmem>>, vector<128x128xbf16>
    %cst_127 = arith.constant dense<0.000000e+00> : vector<8x128xf32>
    %199 = tpu.matmul %197, %198, %cst_127 {dimension_numbers = #tpu.dot_dimension_numbers<[1], [0], [0], [1], [0, 0, 1, 1], [], []>} : vector<8x128xbf16>, vector<128x128xbf16>, vector<8x128xf32> -> vector<8x128xf32>
    %200 = arith.addf %195, %199 : vector<8x128xf32>
    %201 = vector.extract_strided_slice %200 {offsets = [0, 0], sizes = [8, 96], strides = [1, 1]} : vector<8x128xf32> to vector<8x96xf32>
    %202 = arith.negf %201 : vector<8x96xf32>
    %203 = math.exp %202 : vector<8x96xf32>
    %cst_128 = arith.constant 1.000000e+00 : f32
    %204 = vector.broadcast %cst_128 : f32 to vector<8x96xf32>
    %205 = arith.addf %204, %203 : vector<8x96xf32>
    %206 = arith.divf %204, %205 : vector<8x96xf32>
    %207 = vector.extract_strided_slice %206 {offsets = [0, 0], sizes = [8, 32], strides = [1, 1]} : vector<8x96xf32> to vector<8x32xf32>
    %208 = vector.extract_strided_slice %206 {offsets = [0, 32], sizes = [8, 32], strides = [1, 1]} : vector<8x96xf32> to vector<8x32xf32>
    %209 = vector.extract_strided_slice %206 {offsets = [0, 64], sizes = [8, 32], strides = [1, 1]} : vector<8x96xf32> to vector<8x32xf32>
    %210 = vector.extract_strided_slice %200 {offsets = [0, 96], sizes = [8, 32], strides = [1, 1]} : vector<8x128xf32> to vector<8x32xf32>
    %211 = math.tanh %210 : vector<8x32xf32>
    %c0_129 = arith.constant 0 : index
    %c0_130 = arith.constant 0 : index
    %212 = vector.load %arg12[%c0_129, %c0_130] : memref<8x128xf32, #tpu.memory_space<vmem>>, vector<8x32xf32>
    %213 = arith.mulf %208, %212 : vector<8x32xf32>
    %214 = arith.mulf %207, %211 : vector<8x32xf32>
    %215 = arith.addf %213, %214 : vector<8x32xf32>
    %216 = math.tanh %215 : vector<8x32xf32>
    %217 = arith.mulf %209, %216 : vector<8x32xf32>
    %c0_131 = arith.constant 0 : index
    %c0_132 = arith.constant 0 : index
    %218 = vector.load %arg12[%c0_131, %c0_132] : memref<8x128xf32, #tpu.memory_space<vmem>>, vector<8x32xf32>
    tpu.vector_store %arg12[%c0_131, %c0_132], %215 {strides = array<i32>} : memref<8x128xf32, #tpu.memory_space<vmem>>, vector<8x32xf32>,
    %c0_133 = arith.constant 0 : index
    %c0_134 = arith.constant 0 : index
    %219 = vector.load %arg11[%c0_133, %c0_134] : memref<8x128xf32, #tpu.memory_space<vmem>>, vector<8x32xf32>
    tpu.vector_store %arg11[%c0_133, %c0_134], %217 {strides = array<i32>} : memref<8x128xf32, #tpu.memory_space<vmem>>, vector<8x32xf32>,
    %c56_135 = arith.constant 56 : index
    %c0_136 = arith.constant 0 : index
    %220 = vector.load %arg10[%c56_135, %c0_136] : memref<64x128xf32, #tpu.memory_space<vmem>>, vector<8x32xf32>
    tpu.vector_store %arg10[%c56_135, %c0_136], %217 {strides = array<i32>} : memref<64x128xf32, #tpu.memory_space<vmem>>, vector<8x32xf32>,
    %c0_137 = arith.constant 0 : index
    %c0_138 = arith.constant 0 : index
    %221 = vector.load %arg11[%c0_137, %c0_138] : memref<8x128xf32, #tpu.memory_space<vmem>>, vector<8x128xf32>
    %c0_139 = arith.constant 0 : index
    %c0_140 = arith.constant 0 : index
    %c0_141 = arith.constant 0 : index
    %222 = vector.load %arg7[%c0_139, %c0_140, %c0_141] : memref<2x8x128xf32, #tpu.memory_space<vmem>>, vector<1x8x128xf32>
    %223 = vector.shape_cast %222 : vector<1x8x128xf32> to vector<8x128xf32>
    %224 = vector.shape_cast %221 : vector<8x128xf32> to vector<1x8x128xf32>
    tpu.vector_store %arg7[%c0_139, %c0_140, %c0_141], %224 {strides = array<i32>} : memref<2x8x128xf32, #tpu.memory_space<vmem>>, vector<1x8x128xf32>,
    %c0_142 = arith.constant 0 : index
    %c0_143 = arith.constant 0 : index
    %225 = vector.load %arg12[%c0_142, %c0_143] : memref<8x128xf32, #tpu.memory_space<vmem>>, vector<8x128xf32>
    %c0_144 = arith.constant 0 : index
    %c0_145 = arith.constant 0 : index
    %c0_146 = arith.constant 0 : index
    %226 = vector.load %arg8[%c0_144, %c0_145, %c0_146] : memref<2x8x128xf32, #tpu.memory_space<vmem>>, vector<1x8x128xf32>
    %227 = vector.shape_cast %226 : vector<1x8x128xf32> to vector<8x128xf32>
    %228 = vector.shape_cast %225 : vector<8x128xf32> to vector<1x8x128xf32>
    tpu.vector_store %arg8[%c0_144, %c0_145, %c0_146], %228 {strides = array<i32>} : memref<2x8x128xf32, #tpu.memory_space<vmem>>, vector<1x8x128xf32>,
    %c0_147 = arith.constant 0 : index
    %c0_148 = arith.constant 0 : index
    %229 = vector.load %arg10[%c0_147, %c0_148] : memref<64x128xf32, #tpu.memory_space<vmem>>, vector<64x128xf32>
    %230 = arith.truncf %229 : vector<64x128xf32> to vector<64x128xbf16>
    %c0_149 = arith.constant 0 : index
    %c0_150 = arith.constant 0 : index
    %231 = vector.load %arg4[%c0_149, %c0_150] : memref<128x128xbf16, #tpu.memory_space<vmem>>, vector<128x128xbf16>
    %cst_151 = arith.constant dense<0.000000e+00> : vector<64x128xf32>
    %232 = tpu.matmul %230, %231, %cst_151 {dimension_numbers = #tpu.dot_dimension_numbers<[1], [0], [0], [1], [0, 0, 1, 1], [], []>} : vector<64x128xbf16>, vector<128x128xbf16>, vector<64x128xf32> -> vector<64x128xf32>
    %c0_152 = arith.constant 0 : index
    %c0_153 = arith.constant 0 : index
    %233 = vector.load %arg6[%c0_152, %c0_153] : memref<1x128xf32, #tpu.memory_space<vmem>>, vector<1x128xf32>
    %234 = vector.broadcast %233 : vector<1x128xf32> to vector<64x128xf32>
    %235 = arith.addf %232, %234 : vector<64x128xf32>
    %c0_154 = arith.constant 0 : index
    %c0_155 = arith.constant 0 : index
    %236 = vector.load %arg9[%c0_154, %c0_155] : memref<64x128xf32, #tpu.memory_space<vmem>>, vector<64x128xf32>
    tpu.vector_store %arg9[%c0_154, %c0_155], %235 {strides = array<i32>} : memref<64x128xf32, #tpu.memory_space<vmem>>, vector<64x128xf32>,
    %cst_156 = arith.constant 0.000000e+00 : f32
    %237 = vector.broadcast %cst_156 : f32 to vector<8x128xf32>
    %c0_157 = arith.constant 0 : index
    %c0_158 = arith.constant 0 : index
    %238 = vector.load %arg11[%c0_157, %c0_158] : memref<8x128xf32, #tpu.memory_space<vmem>>, vector<8x128xf32>
    tpu.vector_store %arg11[%c0_157, %c0_158], %237 {strides = array<i32>} : memref<8x128xf32, #tpu.memory_space<vmem>>, vector<8x128xf32>,
    %cst_159 = arith.constant 0.000000e+00 : f32
    %239 = vector.broadcast %cst_159 : f32 to vector<8x128xf32>
    %c0_160 = arith.constant 0 : index
    %c0_161 = arith.constant 0 : index
    %240 = vector.load %arg12[%c0_160, %c0_161] : memref<8x128xf32, #tpu.memory_space<vmem>>, vector<8x128xf32>
    tpu.vector_store %arg12[%c0_160, %c0_161], %239 {strides = array<i32>} : memref<8x128xf32, #tpu.memory_space<vmem>>, vector<8x128xf32>,
    %c0_162 = arith.constant 0 : index
    %c0_163 = arith.constant 0 : index
    %241 = vector.load %arg9[%c0_162, %c0_163] : memref<64x128xf32, #tpu.memory_space<vmem>>, vector<8x128xf32>
    %c0_164 = arith.constant 0 : index
    %c0_165 = arith.constant 0 : index
    %242 = vector.load %arg11[%c0_164, %c0_165] : memref<8x128xf32, #tpu.memory_space<vmem>>, vector<8x128xf32>
    %243 = arith.truncf %242 : vector<8x128xf32> to vector<8x128xbf16>
    %c0_166 = arith.constant 0 : index
    %c0_167 = arith.constant 0 : index
    %244 = vector.load %arg5[%c0_166, %c0_167] : memref<128x128xbf16, #tpu.memory_space<vmem>>, vector<128x128xbf16>
    %cst_168 = arith.constant dense<0.000000e+00> : vector<8x128xf32>
    %245 = tpu.matmul %243, %244, %cst_168 {dimension_numbers = #tpu.dot_dimension_numbers<[1], [0], [0], [1], [0, 0, 1, 1], [], []>} : vector<8x128xbf16>, vector<128x128xbf16>, vector<8x128xf32> -> vector<8x128xf32>
    %246 = arith.addf %241, %245 : vector<8x128xf32>
    %247 = vector.extract_strided_slice %246 {offsets = [0, 0], sizes = [8, 96], strides = [1, 1]} : vector<8x128xf32> to vector<8x96xf32>
    %248 = arith.negf %247 : vector<8x96xf32>
    %249 = math.exp %248 : vector<8x96xf32>
    %cst_169 = arith.constant 1.000000e+00 : f32
    %250 = vector.broadcast %cst_169 : f32 to vector<8x96xf32>
    %251 = arith.addf %250, %249 : vector<8x96xf32>
    %252 = arith.divf %250, %251 : vector<8x96xf32>
    %253 = vector.extract_strided_slice %252 {offsets = [0, 0], sizes = [8, 32], strides = [1, 1]} : vector<8x96xf32> to vector<8x32xf32>
    %254 = vector.extract_strided_slice %252 {offsets = [0, 32], sizes = [8, 32], strides = [1, 1]} : vector<8x96xf32> to vector<8x32xf32>
    %255 = vector.extract_strided_slice %252 {offsets = [0, 64], sizes = [8, 32], strides = [1, 1]} : vector<8x96xf32> to vector<8x32xf32>
    %256 = vector.extract_strided_slice %246 {offsets = [0, 96], sizes = [8, 32], strides = [1, 1]} : vector<8x128xf32> to vector<8x32xf32>
    %257 = math.tanh %256 : vector<8x32xf32>
    %c0_170 = arith.constant 0 : index
    %c0_171 = arith.constant 0 : index
    %258 = vector.load %arg12[%c0_170, %c0_171] : memref<8x128xf32, #tpu.memory_space<vmem>>, vector<8x32xf32>
    %259 = arith.mulf %254, %258 : vector<8x32xf32>
    %260 = arith.mulf %253, %257 : vector<8x32xf32>
    %261 = arith.addf %259, %260 : vector<8x32xf32>
    %262 = math.tanh %261 : vector<8x32xf32>
    %263 = arith.mulf %255, %262 : vector<8x32xf32>
    %c0_172 = arith.constant 0 : index
    %c0_173 = arith.constant 0 : index
    %264 = vector.load %arg12[%c0_172, %c0_173] : memref<8x128xf32, #tpu.memory_space<vmem>>, vector<8x32xf32>
    tpu.vector_store %arg12[%c0_172, %c0_173], %261 {strides = array<i32>} : memref<8x128xf32, #tpu.memory_space<vmem>>, vector<8x32xf32>,
    %c0_174 = arith.constant 0 : index
    %c0_175 = arith.constant 0 : index
    %265 = vector.load %arg11[%c0_174, %c0_175] : memref<8x128xf32, #tpu.memory_space<vmem>>, vector<8x32xf32>
    tpu.vector_store %arg11[%c0_174, %c0_175], %263 {strides = array<i32>} : memref<8x128xf32, #tpu.memory_space<vmem>>, vector<8x32xf32>,
    %c8_176 = arith.constant 8 : index
    %c0_177 = arith.constant 0 : index
    %266 = vector.load %arg9[%c8_176, %c0_177] : memref<64x128xf32, #tpu.memory_space<vmem>>, vector<8x128xf32>
    %c0_178 = arith.constant 0 : index
    %c0_179 = arith.constant 0 : index
    %267 = vector.load %arg11[%c0_178, %c0_179] : memref<8x128xf32, #tpu.memory_space<vmem>>, vector<8x128xf32>
    %268 = arith.truncf %267 : vector<8x128xf32> to vector<8x128xbf16>
    %c0_180 = arith.constant 0 : index
    %c0_181 = arith.constant 0 : index
    %269 = vector.load %arg5[%c0_180, %c0_181] : memref<128x128xbf16, #tpu.memory_space<vmem>>, vector<128x128xbf16>
    %cst_182 = arith.constant dense<0.000000e+00> : vector<8x128xf32>
    %270 = tpu.matmul %268, %269, %cst_182 {dimension_numbers = #tpu.dot_dimension_numbers<[1], [0], [0], [1], [0, 0, 1, 1], [], []>} : vector<8x128xbf16>, vector<128x128xbf16>, vector<8x128xf32> -> vector<8x128xf32>
    %271 = arith.addf %266, %270 : vector<8x128xf32>
    %272 = vector.extract_strided_slice %271 {offsets = [0, 0], sizes = [8, 96], strides = [1, 1]} : vector<8x128xf32> to vector<8x96xf32>
    %273 = arith.negf %272 : vector<8x96xf32>
    %274 = math.exp %273 : vector<8x96xf32>
    %cst_183 = arith.constant 1.000000e+00 : f32
    %275 = vector.broadcast %cst_183 : f32 to vector<8x96xf32>
    %276 = arith.addf %275, %274 : vector<8x96xf32>
    %277 = arith.divf %275, %276 : vector<8x96xf32>
    %278 = vector.extract_strided_slice %277 {offsets = [0, 0], sizes = [8, 32], strides = [1, 1]} : vector<8x96xf32> to vector<8x32xf32>
    %279 = vector.extract_strided_slice %277 {offsets = [0, 32], sizes = [8, 32], strides = [1, 1]} : vector<8x96xf32> to vector<8x32xf32>
    %280 = vector.extract_strided_slice %277 {offsets = [0, 64], sizes = [8, 32], strides = [1, 1]} : vector<8x96xf32> to vector<8x32xf32>
    %281 = vector.extract_strided_slice %271 {offsets = [0, 96], sizes = [8, 32], strides = [1, 1]} : vector<8x128xf32> to vector<8x32xf32>
    %282 = math.tanh %281 : vector<8x32xf32>
    %c0_184 = arith.constant 0 : index
    %c0_185 = arith.constant 0 : index
    %283 = vector.load %arg12[%c0_184, %c0_185] : memref<8x128xf32, #tpu.memory_space<vmem>>, vector<8x32xf32>
    %284 = arith.mulf %279, %283 : vector<8x32xf32>
    %285 = arith.mulf %278, %282 : vector<8x32xf32>
    %286 = arith.addf %284, %285 : vector<8x32xf32>
    %287 = math.tanh %286 : vector<8x32xf32>
    %288 = arith.mulf %280, %287 : vector<8x32xf32>
    %c0_186 = arith.constant 0 : index
    %c0_187 = arith.constant 0 : index
    %289 = vector.load %arg12[%c0_186, %c0_187] : memref<8x128xf32, #tpu.memory_space<vmem>>, vector<8x32xf32>
    tpu.vector_store %arg12[%c0_186, %c0_187], %286 {strides = array<i32>} : memref<8x128xf32, #tpu.memory_space<vmem>>, vector<8x32xf32>,
    %c0_188 = arith.constant 0 : index
    %c0_189 = arith.constant 0 : index
    %290 = vector.load %arg11[%c0_188, %c0_189] : memref<8x128xf32, #tpu.memory_space<vmem>>, vector<8x32xf32>
    tpu.vector_store %arg11[%c0_188, %c0_189], %288 {strides = array<i32>} : memref<8x128xf32, #tpu.memory_space<vmem>>, vector<8x32xf32>,
    %c16_190 = arith.constant 16 : index
    %c0_191 = arith.constant 0 : index
    %291 = vector.load %arg9[%c16_190, %c0_191] : memref<64x128xf32, #tpu.memory_space<vmem>>, vector<8x128xf32>
    %c0_192 = arith.constant 0 : index
    %c0_193 = arith.constant 0 : index
    %292 = vector.load %arg11[%c0_192, %c0_193] : memref<8x128xf32, #tpu.memory_space<vmem>>, vector<8x128xf32>
    %293 = arith.truncf %292 : vector<8x128xf32> to vector<8x128xbf16>
    %c0_194 = arith.constant 0 : index
    %c0_195 = arith.constant 0 : index
    %294 = vector.load %arg5[%c0_194, %c0_195] : memref<128x128xbf16, #tpu.memory_space<vmem>>, vector<128x128xbf16>
    %cst_196 = arith.constant dense<0.000000e+00> : vector<8x128xf32>
    %295 = tpu.matmul %293, %294, %cst_196 {dimension_numbers = #tpu.dot_dimension_numbers<[1], [0], [0], [1], [0, 0, 1, 1], [], []>} : vector<8x128xbf16>, vector<128x128xbf16>, vector<8x128xf32> -> vector<8x128xf32>
    %296 = arith.addf %291, %295 : vector<8x128xf32>
    %297 = vector.extract_strided_slice %296 {offsets = [0, 0], sizes = [8, 96], strides = [1, 1]} : vector<8x128xf32> to vector<8x96xf32>
    %298 = arith.negf %297 : vector<8x96xf32>
    %299 = math.exp %298 : vector<8x96xf32>
    %cst_197 = arith.constant 1.000000e+00 : f32
    %300 = vector.broadcast %cst_197 : f32 to vector<8x96xf32>
    %301 = arith.addf %300, %299 : vector<8x96xf32>
    %302 = arith.divf %300, %301 : vector<8x96xf32>
    %303 = vector.extract_strided_slice %302 {offsets = [0, 0], sizes = [8, 32], strides = [1, 1]} : vector<8x96xf32> to vector<8x32xf32>
    %304 = vector.extract_strided_slice %302 {offsets = [0, 32], sizes = [8, 32], strides = [1, 1]} : vector<8x96xf32> to vector<8x32xf32>
    %305 = vector.extract_strided_slice %302 {offsets = [0, 64], sizes = [8, 32], strides = [1, 1]} : vector<8x96xf32> to vector<8x32xf32>
    %306 = vector.extract_strided_slice %296 {offsets = [0, 96], sizes = [8, 32], strides = [1, 1]} : vector<8x128xf32> to vector<8x32xf32>
    %307 = math.tanh %306 : vector<8x32xf32>
    %c0_198 = arith.constant 0 : index
    %c0_199 = arith.constant 0 : index
    %308 = vector.load %arg12[%c0_198, %c0_199] : memref<8x128xf32, #tpu.memory_space<vmem>>, vector<8x32xf32>
    %309 = arith.mulf %304, %308 : vector<8x32xf32>
    %310 = arith.mulf %303, %307 : vector<8x32xf32>
    %311 = arith.addf %309, %310 : vector<8x32xf32>
    %312 = math.tanh %311 : vector<8x32xf32>
    %313 = arith.mulf %305, %312 : vector<8x32xf32>
    %c0_200 = arith.constant 0 : index
    %c0_201 = arith.constant 0 : index
    %314 = vector.load %arg12[%c0_200, %c0_201] : memref<8x128xf32, #tpu.memory_space<vmem>>, vector<8x32xf32>
    tpu.vector_store %arg12[%c0_200, %c0_201], %311 {strides = array<i32>} : memref<8x128xf32, #tpu.memory_space<vmem>>, vector<8x32xf32>,
    %c0_202 = arith.constant 0 : index
    %c0_203 = arith.constant 0 : index
    %315 = vector.load %arg11[%c0_202, %c0_203] : memref<8x128xf32, #tpu.memory_space<vmem>>, vector<8x32xf32>
    tpu.vector_store %arg11[%c0_202, %c0_203], %313 {strides = array<i32>} : memref<8x128xf32, #tpu.memory_space<vmem>>, vector<8x32xf32>,
    %c24_204 = arith.constant 24 : index
    %c0_205 = arith.constant 0 : index
    %316 = vector.load %arg9[%c24_204, %c0_205] : memref<64x128xf32, #tpu.memory_space<vmem>>, vector<8x128xf32>
    %c0_206 = arith.constant 0 : index
    %c0_207 = arith.constant 0 : index
    %317 = vector.load %arg11[%c0_206, %c0_207] : memref<8x128xf32, #tpu.memory_space<vmem>>, vector<8x128xf32>
    %318 = arith.truncf %317 : vector<8x128xf32> to vector<8x128xbf16>
    %c0_208 = arith.constant 0 : index
    %c0_209 = arith.constant 0 : index
    %319 = vector.load %arg5[%c0_208, %c0_209] : memref<128x128xbf16, #tpu.memory_space<vmem>>, vector<128x128xbf16>
    %cst_210 = arith.constant dense<0.000000e+00> : vector<8x128xf32>
    %320 = tpu.matmul %318, %319, %cst_210 {dimension_numbers = #tpu.dot_dimension_numbers<[1], [0], [0], [1], [0, 0, 1, 1], [], []>} : vector<8x128xbf16>, vector<128x128xbf16>, vector<8x128xf32> -> vector<8x128xf32>
    %321 = arith.addf %316, %320 : vector<8x128xf32>
    %322 = vector.extract_strided_slice %321 {offsets = [0, 0], sizes = [8, 96], strides = [1, 1]} : vector<8x128xf32> to vector<8x96xf32>
    %323 = arith.negf %322 : vector<8x96xf32>
    %324 = math.exp %323 : vector<8x96xf32>
    %cst_211 = arith.constant 1.000000e+00 : f32
    %325 = vector.broadcast %cst_211 : f32 to vector<8x96xf32>
    %326 = arith.addf %325, %324 : vector<8x96xf32>
    %327 = arith.divf %325, %326 : vector<8x96xf32>
    %328 = vector.extract_strided_slice %327 {offsets = [0, 0], sizes = [8, 32], strides = [1, 1]} : vector<8x96xf32> to vector<8x32xf32>
    %329 = vector.extract_strided_slice %327 {offsets = [0, 32], sizes = [8, 32], strides = [1, 1]} : vector<8x96xf32> to vector<8x32xf32>
    %330 = vector.extract_strided_slice %327 {offsets = [0, 64], sizes = [8, 32], strides = [1, 1]} : vector<8x96xf32> to vector<8x32xf32>
    %331 = vector.extract_strided_slice %321 {offsets = [0, 96], sizes = [8, 32], strides = [1, 1]} : vector<8x128xf32> to vector<8x32xf32>
    %332 = math.tanh %331 : vector<8x32xf32>
    %c0_212 = arith.constant 0 : index
    %c0_213 = arith.constant 0 : index
    %333 = vector.load %arg12[%c0_212, %c0_213] : memref<8x128xf32, #tpu.memory_space<vmem>>, vector<8x32xf32>
    %334 = arith.mulf %329, %333 : vector<8x32xf32>
    %335 = arith.mulf %328, %332 : vector<8x32xf32>
    %336 = arith.addf %334, %335 : vector<8x32xf32>
    %337 = math.tanh %336 : vector<8x32xf32>
    %338 = arith.mulf %330, %337 : vector<8x32xf32>
    %c0_214 = arith.constant 0 : index
    %c0_215 = arith.constant 0 : index
    %339 = vector.load %arg12[%c0_214, %c0_215] : memref<8x128xf32, #tpu.memory_space<vmem>>, vector<8x32xf32>
    tpu.vector_store %arg12[%c0_214, %c0_215], %336 {strides = array<i32>} : memref<8x128xf32, #tpu.memory_space<vmem>>, vector<8x32xf32>,
    %c0_216 = arith.constant 0 : index
    %c0_217 = arith.constant 0 : index
    %340 = vector.load %arg11[%c0_216, %c0_217] : memref<8x128xf32, #tpu.memory_space<vmem>>, vector<8x32xf32>
    tpu.vector_store %arg11[%c0_216, %c0_217], %338 {strides = array<i32>} : memref<8x128xf32, #tpu.memory_space<vmem>>, vector<8x32xf32>,
    %c32_218 = arith.constant 32 : index
    %c0_219 = arith.constant 0 : index
    %341 = vector.load %arg9[%c32_218, %c0_219] : memref<64x128xf32, #tpu.memory_space<vmem>>, vector<8x128xf32>
    %c0_220 = arith.constant 0 : index
    %c0_221 = arith.constant 0 : index
    %342 = vector.load %arg11[%c0_220, %c0_221] : memref<8x128xf32, #tpu.memory_space<vmem>>, vector<8x128xf32>
    %343 = arith.truncf %342 : vector<8x128xf32> to vector<8x128xbf16>
    %c0_222 = arith.constant 0 : index
    %c0_223 = arith.constant 0 : index
    %344 = vector.load %arg5[%c0_222, %c0_223] : memref<128x128xbf16, #tpu.memory_space<vmem>>, vector<128x128xbf16>
    %cst_224 = arith.constant dense<0.000000e+00> : vector<8x128xf32>
    %345 = tpu.matmul %343, %344, %cst_224 {dimension_numbers = #tpu.dot_dimension_numbers<[1], [0], [0], [1], [0, 0, 1, 1], [], []>} : vector<8x128xbf16>, vector<128x128xbf16>, vector<8x128xf32> -> vector<8x128xf32>
    %346 = arith.addf %341, %345 : vector<8x128xf32>
    %347 = vector.extract_strided_slice %346 {offsets = [0, 0], sizes = [8, 96], strides = [1, 1]} : vector<8x128xf32> to vector<8x96xf32>
    %348 = arith.negf %347 : vector<8x96xf32>
    %349 = math.exp %348 : vector<8x96xf32>
    %cst_225 = arith.constant 1.000000e+00 : f32
    %350 = vector.broadcast %cst_225 : f32 to vector<8x96xf32>
    %351 = arith.addf %350, %349 : vector<8x96xf32>
    %352 = arith.divf %350, %351 : vector<8x96xf32>
    %353 = vector.extract_strided_slice %352 {offsets = [0, 0], sizes = [8, 32], strides = [1, 1]} : vector<8x96xf32> to vector<8x32xf32>
    %354 = vector.extract_strided_slice %352 {offsets = [0, 32], sizes = [8, 32], strides = [1, 1]} : vector<8x96xf32> to vector<8x32xf32>
    %355 = vector.extract_strided_slice %352 {offsets = [0, 64], sizes = [8, 32], strides = [1, 1]} : vector<8x96xf32> to vector<8x32xf32>
    %356 = vector.extract_strided_slice %346 {offsets = [0, 96], sizes = [8, 32], strides = [1, 1]} : vector<8x128xf32> to vector<8x32xf32>
    %357 = math.tanh %356 : vector<8x32xf32>
    %c0_226 = arith.constant 0 : index
    %c0_227 = arith.constant 0 : index
    %358 = vector.load %arg12[%c0_226, %c0_227] : memref<8x128xf32, #tpu.memory_space<vmem>>, vector<8x32xf32>
    %359 = arith.mulf %354, %358 : vector<8x32xf32>
    %360 = arith.mulf %353, %357 : vector<8x32xf32>
    %361 = arith.addf %359, %360 : vector<8x32xf32>
    %362 = math.tanh %361 : vector<8x32xf32>
    %363 = arith.mulf %355, %362 : vector<8x32xf32>
    %c0_228 = arith.constant 0 : index
    %c0_229 = arith.constant 0 : index
    %364 = vector.load %arg12[%c0_228, %c0_229] : memref<8x128xf32, #tpu.memory_space<vmem>>, vector<8x32xf32>
    tpu.vector_store %arg12[%c0_228, %c0_229], %361 {strides = array<i32>} : memref<8x128xf32, #tpu.memory_space<vmem>>, vector<8x32xf32>,
    %c0_230 = arith.constant 0 : index
    %c0_231 = arith.constant 0 : index
    %365 = vector.load %arg11[%c0_230, %c0_231] : memref<8x128xf32, #tpu.memory_space<vmem>>, vector<8x32xf32>
    tpu.vector_store %arg11[%c0_230, %c0_231], %363 {strides = array<i32>} : memref<8x128xf32, #tpu.memory_space<vmem>>, vector<8x32xf32>,
    %c40_232 = arith.constant 40 : index
    %c0_233 = arith.constant 0 : index
    %366 = vector.load %arg9[%c40_232, %c0_233] : memref<64x128xf32, #tpu.memory_space<vmem>>, vector<8x128xf32>
    %c0_234 = arith.constant 0 : index
    %c0_235 = arith.constant 0 : index
    %367 = vector.load %arg11[%c0_234, %c0_235] : memref<8x128xf32, #tpu.memory_space<vmem>>, vector<8x128xf32>
    %368 = arith.truncf %367 : vector<8x128xf32> to vector<8x128xbf16>
    %c0_236 = arith.constant 0 : index
    %c0_237 = arith.constant 0 : index
    %369 = vector.load %arg5[%c0_236, %c0_237] : memref<128x128xbf16, #tpu.memory_space<vmem>>, vector<128x128xbf16>
    %cst_238 = arith.constant dense<0.000000e+00> : vector<8x128xf32>
    %370 = tpu.matmul %368, %369, %cst_238 {dimension_numbers = #tpu.dot_dimension_numbers<[1], [0], [0], [1], [0, 0, 1, 1], [], []>} : vector<8x128xbf16>, vector<128x128xbf16>, vector<8x128xf32> -> vector<8x128xf32>
    %371 = arith.addf %366, %370 : vector<8x128xf32>
    %372 = vector.extract_strided_slice %371 {offsets = [0, 0], sizes = [8, 96], strides = [1, 1]} : vector<8x128xf32> to vector<8x96xf32>
    %373 = arith.negf %372 : vector<8x96xf32>
    %374 = math.exp %373 : vector<8x96xf32>
    %cst_239 = arith.constant 1.000000e+00 : f32
    %375 = vector.broadcast %cst_239 : f32 to vector<8x96xf32>
    %376 = arith.addf %375, %374 : vector<8x96xf32>
    %377 = arith.divf %375, %376 : vector<8x96xf32>
    %378 = vector.extract_strided_slice %377 {offsets = [0, 0], sizes = [8, 32], strides = [1, 1]} : vector<8x96xf32> to vector<8x32xf32>
    %379 = vector.extract_strided_slice %377 {offsets = [0, 32], sizes = [8, 32], strides = [1, 1]} : vector<8x96xf32> to vector<8x32xf32>
    %380 = vector.extract_strided_slice %377 {offsets = [0, 64], sizes = [8, 32], strides = [1, 1]} : vector<8x96xf32> to vector<8x32xf32>
    %381 = vector.extract_strided_slice %371 {offsets = [0, 96], sizes = [8, 32], strides = [1, 1]} : vector<8x128xf32> to vector<8x32xf32>
    %382 = math.tanh %381 : vector<8x32xf32>
    %c0_240 = arith.constant 0 : index
    %c0_241 = arith.constant 0 : index
    %383 = vector.load %arg12[%c0_240, %c0_241] : memref<8x128xf32, #tpu.memory_space<vmem>>, vector<8x32xf32>
    %384 = arith.mulf %379, %383 : vector<8x32xf32>
    %385 = arith.mulf %378, %382 : vector<8x32xf32>
    %386 = arith.addf %384, %385 : vector<8x32xf32>
    %387 = math.tanh %386 : vector<8x32xf32>
    %388 = arith.mulf %380, %387 : vector<8x32xf32>
    %c0_242 = arith.constant 0 : index
    %c0_243 = arith.constant 0 : index
    %389 = vector.load %arg12[%c0_242, %c0_243] : memref<8x128xf32, #tpu.memory_space<vmem>>, vector<8x32xf32>
    tpu.vector_store %arg12[%c0_242, %c0_243], %386 {strides = array<i32>} : memref<8x128xf32, #tpu.memory_space<vmem>>, vector<8x32xf32>,
    %c0_244 = arith.constant 0 : index
    %c0_245 = arith.constant 0 : index
    %390 = vector.load %arg11[%c0_244, %c0_245] : memref<8x128xf32, #tpu.memory_space<vmem>>, vector<8x32xf32>
    tpu.vector_store %arg11[%c0_244, %c0_245], %388 {strides = array<i32>} : memref<8x128xf32, #tpu.memory_space<vmem>>, vector<8x32xf32>,
    %c48_246 = arith.constant 48 : index
    %c0_247 = arith.constant 0 : index
    %391 = vector.load %arg9[%c48_246, %c0_247] : memref<64x128xf32, #tpu.memory_space<vmem>>, vector<8x128xf32>
    %c0_248 = arith.constant 0 : index
    %c0_249 = arith.constant 0 : index
    %392 = vector.load %arg11[%c0_248, %c0_249] : memref<8x128xf32, #tpu.memory_space<vmem>>, vector<8x128xf32>
    %393 = arith.truncf %392 : vector<8x128xf32> to vector<8x128xbf16>
    %c0_250 = arith.constant 0 : index
    %c0_251 = arith.constant 0 : index
    %394 = vector.load %arg5[%c0_250, %c0_251] : memref<128x128xbf16, #tpu.memory_space<vmem>>, vector<128x128xbf16>
    %cst_252 = arith.constant dense<0.000000e+00> : vector<8x128xf32>
    %395 = tpu.matmul %393, %394, %cst_252 {dimension_numbers = #tpu.dot_dimension_numbers<[1], [0], [0], [1], [0, 0, 1, 1], [], []>} : vector<8x128xbf16>, vector<128x128xbf16>, vector<8x128xf32> -> vector<8x128xf32>
    %396 = arith.addf %391, %395 : vector<8x128xf32>
    %397 = vector.extract_strided_slice %396 {offsets = [0, 0], sizes = [8, 96], strides = [1, 1]} : vector<8x128xf32> to vector<8x96xf32>
    %398 = arith.negf %397 : vector<8x96xf32>
    %399 = math.exp %398 : vector<8x96xf32>
    %cst_253 = arith.constant 1.000000e+00 : f32
    %400 = vector.broadcast %cst_253 : f32 to vector<8x96xf32>
    %401 = arith.addf %400, %399 : vector<8x96xf32>
    %402 = arith.divf %400, %401 : vector<8x96xf32>
    %403 = vector.extract_strided_slice %402 {offsets = [0, 0], sizes = [8, 32], strides = [1, 1]} : vector<8x96xf32> to vector<8x32xf32>
    %404 = vector.extract_strided_slice %402 {offsets = [0, 32], sizes = [8, 32], strides = [1, 1]} : vector<8x96xf32> to vector<8x32xf32>
    %405 = vector.extract_strided_slice %402 {offsets = [0, 64], sizes = [8, 32], strides = [1, 1]} : vector<8x96xf32> to vector<8x32xf32>
    %406 = vector.extract_strided_slice %396 {offsets = [0, 96], sizes = [8, 32], strides = [1, 1]} : vector<8x128xf32> to vector<8x32xf32>
    %407 = math.tanh %406 : vector<8x32xf32>
    %c0_254 = arith.constant 0 : index
    %c0_255 = arith.constant 0 : index
    %408 = vector.load %arg12[%c0_254, %c0_255] : memref<8x128xf32, #tpu.memory_space<vmem>>, vector<8x32xf32>
    %409 = arith.mulf %404, %408 : vector<8x32xf32>
    %410 = arith.mulf %403, %407 : vector<8x32xf32>
    %411 = arith.addf %409, %410 : vector<8x32xf32>
    %412 = math.tanh %411 : vector<8x32xf32>
    %413 = arith.mulf %405, %412 : vector<8x32xf32>
    %c0_256 = arith.constant 0 : index
    %c0_257 = arith.constant 0 : index
    %414 = vector.load %arg12[%c0_256, %c0_257] : memref<8x128xf32, #tpu.memory_space<vmem>>, vector<8x32xf32>
    tpu.vector_store %arg12[%c0_256, %c0_257], %411 {strides = array<i32>} : memref<8x128xf32, #tpu.memory_space<vmem>>, vector<8x32xf32>,
    %c0_258 = arith.constant 0 : index
    %c0_259 = arith.constant 0 : index
    %415 = vector.load %arg11[%c0_258, %c0_259] : memref<8x128xf32, #tpu.memory_space<vmem>>, vector<8x32xf32>
    tpu.vector_store %arg11[%c0_258, %c0_259], %413 {strides = array<i32>} : memref<8x128xf32, #tpu.memory_space<vmem>>, vector<8x32xf32>,
    %c56_260 = arith.constant 56 : index
    %c0_261 = arith.constant 0 : index
    %416 = vector.load %arg9[%c56_260, %c0_261] : memref<64x128xf32, #tpu.memory_space<vmem>>, vector<8x128xf32>
    %c0_262 = arith.constant 0 : index
    %c0_263 = arith.constant 0 : index
    %417 = vector.load %arg11[%c0_262, %c0_263] : memref<8x128xf32, #tpu.memory_space<vmem>>, vector<8x128xf32>
    %418 = arith.truncf %417 : vector<8x128xf32> to vector<8x128xbf16>
    %c0_264 = arith.constant 0 : index
    %c0_265 = arith.constant 0 : index
    %419 = vector.load %arg5[%c0_264, %c0_265] : memref<128x128xbf16, #tpu.memory_space<vmem>>, vector<128x128xbf16>
    %cst_266 = arith.constant dense<0.000000e+00> : vector<8x128xf32>
    %420 = tpu.matmul %418, %419, %cst_266 {dimension_numbers = #tpu.dot_dimension_numbers<[1], [0], [0], [1], [0, 0, 1, 1], [], []>} : vector<8x128xbf16>, vector<128x128xbf16>, vector<8x128xf32> -> vector<8x128xf32>
    %421 = arith.addf %416, %420 : vector<8x128xf32>
    %422 = vector.extract_strided_slice %421 {offsets = [0, 0], sizes = [8, 96], strides = [1, 1]} : vector<8x128xf32> to vector<8x96xf32>
    %423 = arith.negf %422 : vector<8x96xf32>
    %424 = math.exp %423 : vector<8x96xf32>
    %cst_267 = arith.constant 1.000000e+00 : f32
    %425 = vector.broadcast %cst_267 : f32 to vector<8x96xf32>
    %426 = arith.addf %425, %424 : vector<8x96xf32>
    %427 = arith.divf %425, %426 : vector<8x96xf32>
    %428 = vector.extract_strided_slice %427 {offsets = [0, 0], sizes = [8, 32], strides = [1, 1]} : vector<8x96xf32> to vector<8x32xf32>
    %429 = vector.extract_strided_slice %427 {offsets = [0, 32], sizes = [8, 32], strides = [1, 1]} : vector<8x96xf32> to vector<8x32xf32>
    %430 = vector.extract_strided_slice %427 {offsets = [0, 64], sizes = [8, 32], strides = [1, 1]} : vector<8x96xf32> to vector<8x32xf32>
    %431 = vector.extract_strided_slice %421 {offsets = [0, 96], sizes = [8, 32], strides = [1, 1]} : vector<8x128xf32> to vector<8x32xf32>
    %432 = math.tanh %431 : vector<8x32xf32>
    %c0_268 = arith.constant 0 : index
    %c0_269 = arith.constant 0 : index
    %433 = vector.load %arg12[%c0_268, %c0_269] : memref<8x128xf32, #tpu.memory_space<vmem>>, vector<8x32xf32>
    %434 = arith.mulf %429, %433 : vector<8x32xf32>
    %435 = arith.mulf %428, %432 : vector<8x32xf32>
    %436 = arith.addf %434, %435 : vector<8x32xf32>
    %437 = math.tanh %436 : vector<8x32xf32>
    %438 = arith.mulf %430, %437 : vector<8x32xf32>
    %c0_270 = arith.constant 0 : index
    %c0_271 = arith.constant 0 : index
    %439 = vector.load %arg12[%c0_270, %c0_271] : memref<8x128xf32, #tpu.memory_space<vmem>>, vector<8x32xf32>
    tpu.vector_store %arg12[%c0_270, %c0_271], %436 {strides = array<i32>} : memref<8x128xf32, #tpu.memory_space<vmem>>, vector<8x32xf32>,
    %c0_272 = arith.constant 0 : index
    %c0_273 = arith.constant 0 : index
    %440 = vector.load %arg11[%c0_272, %c0_273] : memref<8x128xf32, #tpu.memory_space<vmem>>, vector<8x32xf32>
    tpu.vector_store %arg11[%c0_272, %c0_273], %438 {strides = array<i32>} : memref<8x128xf32, #tpu.memory_space<vmem>>, vector<8x32xf32>,
    %c0_274 = arith.constant 0 : index
    %c0_275 = arith.constant 0 : index
    %441 = vector.load %arg11[%c0_274, %c0_275] : memref<8x128xf32, #tpu.memory_space<vmem>>, vector<8x128xf32>
    %c1 = arith.constant 1 : index
    %c0_276 = arith.constant 0 : index
    %c0_277 = arith.constant 0 : index
    %442 = vector.load %arg7[%c1, %c0_276, %c0_277] : memref<2x8x128xf32, #tpu.memory_space<vmem>>, vector<1x8x128xf32>
    %443 = vector.shape_cast %442 : vector<1x8x128xf32> to vector<8x128xf32>
    %444 = vector.shape_cast %441 : vector<8x128xf32> to vector<1x8x128xf32>
    tpu.vector_store %arg7[%c1, %c0_276, %c0_277], %444 {strides = array<i32>} : memref<2x8x128xf32, #tpu.memory_space<vmem>>, vector<1x8x128xf32>,
    %c0_278 = arith.constant 0 : index
    %c0_279 = arith.constant 0 : index
    %445 = vector.load %arg12[%c0_278, %c0_279] : memref<8x128xf32, #tpu.memory_space<vmem>>, vector<8x128xf32>
    %c1_280 = arith.constant 1 : index
    %c0_281 = arith.constant 0 : index
    %c0_282 = arith.constant 0 : index
    %446 = vector.load %arg8[%c1_280, %c0_281, %c0_282] : memref<2x8x128xf32, #tpu.memory_space<vmem>>, vector<1x8x128xf32>
    %447 = vector.shape_cast %446 : vector<1x8x128xf32> to vector<8x128xf32>
    %448 = vector.shape_cast %445 : vector<8x128xf32> to vector<1x8x128xf32>
    tpu.vector_store %arg8[%c1_280, %c0_281, %c0_282], %448 {strides = array<i32>} : memref<2x8x128xf32, #tpu.memory_space<vmem>>, vector<1x8x128xf32>,
    return
  }
}

</mosaic_0001>

<llo_original>
// kernel: tpu_custom_call.1
$region0: #{tpu_custom_call.1}
  #allocation0 [shape = 'u32[]', space=smem, size = 0x4, offset = 0x4, fixed_abs, tag = 'smem constant byte address 0x4 - core index']
  #allocation1 [shape = 'u32[144,128]{1,0:T(1,128)}', space=vmem, size = 0x12000, scoped, tag = 'internal scratch']
  #allocation2 [shape = 'f32[64,128]{1,0:T(8,128)}', space=vmem, size = 0x8000, scoped, tag = 'scratch operand']
  #allocation3 [shape = 'f32[64,128]{1,0:T(8,128)}', space=vmem, size = 0x8000, scoped, tag = 'scratch operand']
  #allocation4 [shape = 'f32[8,128]{1,0:T(8,128)}', space=vmem, size = 0x1000, scoped, tag = 'scratch operand']
  #allocation5 [shape = 'f32[8,128]{1,0:T(8,128)}', space=vmem, size = 0x1000, scoped, tag = 'scratch operand']
  %s0 = inlined_call_operand.hbm [shape: bf16[64,128], index: 0, kind: input, shape index: {}]
  %s1 = inlined_call_operand.hbm [shape: bf16[128,128], index: 1, kind: input, shape index: {}]
  %s2 = inlined_call_operand.hbm [shape: bf16[128,128], index: 2, kind: input, shape index: {}]
  %s3 = inlined_call_operand.vmem [shape: f32[1,128], index: 3, kind: input, shape index: {}]
  %s4 = inlined_call_operand.hbm [shape: bf16[128,128], index: 4, kind: input, shape index: {}]
  %s5 = inlined_call_operand.hbm [shape: bf16[128,128], index: 5, kind: input, shape index: {}]
  %s6 = inlined_call_operand.vmem [shape: f32[1,128], index: 6, kind: input, shape index: {}]
  %s7 = inlined_call_operand.hbm [shape: f32[2,8,128], index: 7, kind: output, shape index: {0}]
  %s8 = inlined_call_operand.hbm [shape: f32[2,8,128], index: 8, kind: output, shape index: {1}]
  %9 = xla_tuple %s7, %s8
  %s10 = sld [smem:[#allocation0]]
  $region66: #{tpu_custom_call.1} parent=0
    _
  %s12 = ssub.s32 1, %s10
  %s13 = scalar_select 0, %s12, %s10
  $region1: #{tpu_custom_call.1} parent=0
    #allocation6 [shape = 'u8[16384]{0}', space=vmem, size = 0x4000, scoped, tag = 'input window, operand 0, single buffered']
    #allocation7 [shape = 's32[1]{0}', space=sflag, size = 0x4, scoped, tag = 'scoped memory for tpu_custom_call.1']
    #allocation8 [shape = 's32[1]{0}', space=sflag, size = 0x4, scoped, tag = 'scoped memory for tpu_custom_call.1']
    #allocation9 [shape = 'u8[32768]{0}', space=vmem, size = 0x8000, scoped, tag = 'input window, operand 1, single buffered']
    #allocation10 [shape = 's32[1]{0}', space=sflag, size = 0x4, scoped, tag = 'scoped memory for tpu_custom_call.1']
    #allocation11 [shape = 'u8[32768]{0}', space=vmem, size = 0x8000, scoped, tag = 'input window, operand 2, single buffered']
    #allocation12 [shape = 'u8[32768]{0}', space=vmem, size = 0x8000, scoped, tag = 'input window, operand 4, single buffered']
    #allocation13 [shape = 's32[1]{0}', space=sflag, size = 0x4, scoped, tag = 'scoped memory for tpu_custom_call.1']
    #allocation14 [shape = 'u8[32768]{0}', space=vmem, size = 0x8000, scoped, tag = 'input window, operand 5, single buffered']
    #allocation15 [shape = 'u8[8192]{0}', space=vmem, size = 0x2000, scoped, tag = 'output window, operand 0, single buffered']
    #allocation16 [shape = 'u8[8192]{0}', space=vmem, size = 0x2000, scoped, tag = 'output window, operand 1, single buffered']
    #allocation17 [shape = 's32[1]{0}', space=sflag, size = 0x4, scoped, tag = 'scoped memory for tpu_custom_call.1']
    %14 = vsyncpa [#allocation7], 0
    %15 = vsyncpa [#allocation10], 0
    %16 = vsyncpa [#allocation13], 0
    %17 = vsyncpa [#allocation8], 0
    %18 = vsyncpa [#allocation17], 0
    // Predicated region
    $region2: #{tpu_custom_call.1} parent=1 // pred_check
      _
    $region3: #{tpu_custom_call.1} parent=1 // pred_check_branch
      %20 = sbr.rel (0) target = $region5
    $region4: #{tpu_custom_call.1} parent=1 // pred_region
      %s22 = ssub.s32 512, 512
      %23 = vsyncadd [#allocation7], %s22
      %s24 = sshll.u32 [#allocation6], 4
      %s25 = int_to_ptr.vmem [resolvable:$true] %s24
      %30 = dma.hbm_to_vmem [thread:$0]  %s0, 512, %s25, [#allocation7], 64, 64, 4
    $region5: #{tpu_custom_call.1} parent=1 // pred_fallthru
      _
    // Predicated region
    $region6: #{tpu_custom_call.1} parent=1 // pred_check
      _
    $region7: #{tpu_custom_call.1} parent=1 // pred_check_branch
      %32 = sbr.rel (0) target = $region9
    $region8: #{tpu_custom_call.1} parent=1 // pred_region
      %s34 = ssub.s32 1024, 1024
      %35 = vsyncadd [#allocation10], %s34
      %s36 = sshll.u32 [#allocation9], 4
      %s37 = int_to_ptr.vmem [resolvable:$true] %s36
      %42 = dma.hbm_to_vmem [thread:$0]  %s1, 1024, %s37, [#allocation10], 64, 64, 4
    $region9: #{tpu_custom_call.1} parent=1 // pred_fallthru
      _
    // Predicated region
    $region10: #{tpu_custom_call.1} parent=1 // pred_check
      _
    $region11: #{tpu_custom_call.1} parent=1 // pred_check_branch
      %44 = sbr.rel (0) target = $region13
    $region12: #{tpu_custom_call.1} parent=1 // pred_region
      %s46 = ssub.s32 1024, 1024
      %47 = vsyncadd [#allocation10], %s46
      %s48 = sshll.u32 [#allocation11], 4
      %s49 = int_to_ptr.vmem [resolvable:$true] %s48
      %54 = dma.hbm_to_vmem [thread:$0]  %s2, 1024, %s49, [#allocation10], 64, 64, 4
    $region13: #{tpu_custom_call.1} parent=1 // pred_fallthru
      _
    // Predicated region
    $region14: #{tpu_custom_call.1} parent=1 // pred_check
      _
    $region15: #{tpu_custom_call.1} parent=1 // pred_check_branch
      %56 = sbr.rel (0) target = $region17
    $region16: #{tpu_custom_call.1} parent=1 // pred_region
      _
    $region17: #{tpu_custom_call.1} parent=1 // pred_fallthru
      _
    // Predicated region
    $region18: #{tpu_custom_call.1} parent=1 // pred_check
      _
    $region19: #{tpu_custom_call.1} parent=1 // pred_check_branch
      %58 = sbr.rel (0) target = $region21
    $region20: #{tpu_custom_call.1} parent=1 // pred_region
      %s60 = ssub.s32 1024, 1024
      %61 = vsyncadd [#allocation13], %s60
      %s62 = sshll.u32 [#allocation12], 4
      %s63 = int_to_ptr.vmem [resolvable:$true] %s62
      %68 = dma.hbm_to_vmem [thread:$0]  %s4, 1024, %s63, [#allocation13], 64, 64, 4
    $region21: #{tpu_custom_call.1} parent=1 // pred_fallthru
      _
    // Predicated region
    $region22: #{tpu_custom_call.1} parent=1 // pred_check
      _
    $region23: #{tpu_custom_call.1} parent=1 // pred_check_branch
      %70 = sbr.rel (0) target = $region25
    $region24: #{tpu_custom_call.1} parent=1 // pred_region
      %s72 = ssub.s32 1024, 1024
      %73 = vsyncadd [#allocation13], %s72
      %s74 = sshll.u32 [#allocation14], 4
      %s75 = int_to_ptr.vmem [resolvable:$true] %s74
      %80 = dma.hbm_to_vmem [thread:$0]  %s5, 1024, %s75, [#allocation13], 64, 64, 4
    $region25: #{tpu_custom_call.1} parent=1 // pred_fallthru
      _
    // Predicated region
    $region26: #{tpu_custom_call.1} parent=1 // pred_check
      _
    $region27: #{tpu_custom_call.1} parent=1 // pred_check_branch
      %82 = sbr.rel (0) target = $region29
    $region28: #{tpu_custom_call.1} parent=1 // pred_region
      _
    $region29: #{tpu_custom_call.1} parent=1 // pred_fallthru
      _
    // Predicated region
    $region30: #{tpu_custom_call.1} parent=1 // pred_check
      _
    $region31: #{tpu_custom_call.1} parent=1 // pred_check_branch
      %84 = sbr.rel (0) target = $region33
    $region32: #{tpu_custom_call.1} parent=1 // pred_region
      %85 = dma.done [#allocation7], 512
    $region33: #{tpu_custom_call.1} parent=1 // pred_fallthru
      _
    // Predicated region
    $region34: #{tpu_custom_call.1} parent=1 // pred_check
      _
    $region35: #{tpu_custom_call.1} parent=1 // pred_check_branch
      %87 = sbr.rel (0) target = $region37
    $region36: #{tpu_custom_call.1} parent=1 // pred_region
      %88 = dma.done [#allocation10], 1024
    $region37: #{tpu_custom_call.1} parent=1 // pred_fallthru
      _
    // Predicated region
    $region38: #{tpu_custom_call.1} parent=1 // pred_check
      _
    $region39: #{tpu_custom_call.1} parent=1 // pred_check_branch
      %90 = sbr.rel (0) target = $region41
    $region40: #{tpu_custom_call.1} parent=1 // pred_region
      %91 = dma.done [#allocation10], 1024
    $region41: #{tpu_custom_call.1} parent=1 // pred_fallthru
      _
    // Predicated region
    $region42: #{tpu_custom_call.1} parent=1 // pred_check
      _
    $region43: #{tpu_custom_call.1} parent=1 // pred_check_branch
      %93 = sbr.rel (0) target = $region45
    $region44: #{tpu_custom_call.1} parent=1 // pred_region
      %94 = dma.done [#allocation13], 1024
    $region45: #{tpu_custom_call.1} parent=1 // pred_fallthru
      _
    // Predicated region
    $region46: #{tpu_custom_call.1} parent=1 // pred_check
      _
    $region47: #{tpu_custom_call.1} parent=1 // pred_check_branch
      %96 = sbr.rel (0) target = $region49
    $region48: #{tpu_custom_call.1} parent=1 // pred_region
      %97 = dma.done [#allocation13], 1024
    $region49: #{tpu_custom_call.1} parent=1 // pred_fallthru
      _
    %99 = vst [vmem:[#allocation3] sm:$0xff] 0.0
    %100 = vst [vmem:[#allocation3 + $0x8] sm:$0xff] 0.0
    %101 = vst [vmem:[#allocation3 + $0x10] sm:$0xff] 0.0
    %102 = vst [vmem:[#allocation3 + $0x18] sm:$0xff] 0.0
    %103 = vst [vmem:[#allocation3 + $0x20] sm:$0xff] 0.0
    %104 = vst [vmem:[#allocation3 + $0x28] sm:$0xff] 0.0
    %105 = vst [vmem:[#allocation3 + $0x30] sm:$0xff] 0.0
    %106 = vst [vmem:[#allocation3 + $0x38] sm:$0xff] 0.0
    %v107 = vld [vmem:[#allocation6] sm:$0xf]
    %v108 = vld [vmem:[#allocation6 + $0x4] sm:$0xf]
    %v109 = vld [vmem:[#allocation6 + $0x8] sm:$0xf]
    %v110 = vld [vmem:[#allocation6 + $0xc] sm:$0xf]
    %v111 = vld [vmem:[#allocation6 + $0x10] sm:$0xf]
    %v112 = vld [vmem:[#allocation6 + $0x14] sm:$0xf]
    %v113 = vld [vmem:[#allocation6 + $0x18] sm:$0xf]
    %v114 = vld [vmem:[#allocation6 + $0x1c] sm:$0xf]
    %v115 = vld [vmem:[#allocation9] sm:$0xf]
    %v116 = vld [vmem:[#allocation9 + $0x4] sm:$0xf]
    %v117 = vld [vmem:[#allocation9 + $0x8] sm:$0xf]
    %v118 = vld [vmem:[#allocation9 + $0xc] sm:$0xf]
    %v119 = vld [vmem:[#allocation9 + $0x10] sm:$0xf]
    %v120 = vld [vmem:[#allocation9 + $0x14] sm:$0xf]
    %v121 = vld [vmem:[#allocation9 + $0x18] sm:$0xf]
    %v122 = vld [vmem:[#allocation9 + $0x1c] sm:$0xf]
    %v123 = vld [vmem:[#allocation9 + $0x20] sm:$0xf]
    %v124 = vld [vmem:[#allocation9 + $0x24] sm:$0xf]
    %v125 = vld [vmem:[#allocation9 + $0x28] sm:$0xf]
    %v126 = vld [vmem:[#allocation9 + $0x2c] sm:$0xf]
    %v127 = vld [vmem:[#allocation9 + $0x30] sm:$0xf]
    %v128 = vld [vmem:[#allocation9 + $0x34] sm:$0xf]
    %v129 = vld [vmem:[#allocation9 + $0x38] sm:$0xf]
    %v130 = vld [vmem:[#allocation9 + $0x3c] sm:$0xf]
    %v131 = vld [vmem:[%s3] sm:$0x1]
    %v133 = vlaneseq
    %v134 = vshrl.u32 %v133, 7
    %v135 = vsub.s32 0, %v134
    %v136 = vrot.slane %v131, %v135
    %v146 = vunpack.c.l.b16 %v107
    %v147 = vunpack.c.l.b16 %v108
    %v148 = vunpack.c.l.b16 %v109
    %v149 = vunpack.c.l.b16 %v110
    %v150 = vunpack.c.l.b16 %v111
    %v151 = vunpack.c.l.b16 %v112
    %v152 = vunpack.c.l.b16 %v113
    %v153 = vunpack.c.l.b16 %v114
    %v154 = vpack.c.b16 %v147, %v146
    %v155 = vpack.c.b16 %v149, %v148
    %v156 = vpack.c.b16 %v151, %v150
    %v157 = vpack.c.b16 %v153, %v152
    %v178 = vunpack.c.l.b16 %v115
    %v179 = vunpack.c.l.b16 %v116
    %v180 = vunpack.c.l.b16 %v117
    %v181 = vunpack.c.l.b16 %v118
    %v182 = vunpack.c.l.b16 %v119
    %v183 = vunpack.c.l.b16 %v120
    %v184 = vunpack.c.l.b16 %v121
    %v185 = vunpack.c.l.b16 %v122
    %v186 = vunpack.c.l.b16 %v123
    %v187 = vunpack.c.l.b16 %v124
    %v188 = vunpack.c.l.b16 %v125
    %v189 = vunpack.c.l.b16 %v126
    %v190 = vunpack.c.l.b16 %v127
    %v191 = vunpack.c.l.b16 %v128
    %v192 = vunpack.c.l.b16 %v129
    %v193 = vunpack.c.l.b16 %v130
    %v194 = vpack.c.b16 %v179, %v178
    %v195 = vpack.c.b16 %v181, %v180
    %v196 = vpack.c.b16 %v183, %v182
    %v197 = vpack.c.b16 %v185, %v184
    %v198 = vpack.c.b16 %v187, %v186
    %v199 = vpack.c.b16 %v189, %v188
    %v200 = vpack.c.b16 %v191, %v190
    %v201 = vpack.c.b16 %v193, %v192
    %210 = vmatprep.subr.bf16.mxu0 0
    %211 = vmatpush1.bf16.msra.mxu0 %v194
    %212 = vmatprep.subr.bf16.mxu0 0
    %213 = vmatpush1.bf16.msra.mxu0 %v195
    %214 = vmatprep.subr.bf16.mxu0 0
    %215 = vmatpush1.bf16.msra.mxu0 %v196
    %216 = vmatprep.subr.bf16.mxu0 0
    %217 = vmatpush1.bf16.msra.mxu0 %v197
    %218 = vmatprep.subr.bf16.mxu0 0
    %219 = vmatpush1.bf16.msra.mxu0 %v198
    %220 = vmatprep.subr.bf16.mxu0 0
    %221 = vmatpush1.bf16.msra.mxu0 %v199
    %222 = vmatprep.subr.bf16.mxu0 0
    %223 = vmatpush1.bf16.msra.mxu0 %v200
    %224 = vmatprep.subr.bf16.mxu0 0
    %225 = vmatpush1.bf16.msra.mxu0 %v201
    %226 = vmatprep.subr.bf16.mxu0 0
    %227 = vmatpush1.bf16.msra.mxu0 0
    %228 = vmatprep.subr.bf16.mxu0 0
    %229 = vmatpush1.bf16.msra.mxu0 0
    %230 = vmatprep.subr.bf16.mxu0 0
    %231 = vmatpush1.bf16.msra.mxu0 0
    %232 = vmatprep.subr.bf16.mxu0 0
    %233 = vmatpush1.bf16.msra.mxu0 0
    %234 = vmatprep.subr.bf16.mxu0 0
    %235 = vmatpush1.bf16.msra.mxu0 0
    %236 = vmatprep.subr.bf16.mxu0 0
    %237 = vmatpush1.bf16.msra.mxu0 0
    %238 = vmatprep.subr.bf16.mxu0 0
    %239 = vmatpush1.bf16.msra.mxu0 0
    %240 = vmatprep.subr.bf16.mxu0 0
    %241 = vmatpush1.bf16.msra.mxu0 0
    %242 = vmatprep.mubr.bf16.mxu0 0
    %243 = vmatmul.mubr.bf16.gmra.mrb[0].mxu0 %v154
    %v244 = vpop.f32.mrb[0].mxu0
    %v245 = vadd.f32 %v136, %v244
    %v246 = vpop.f32.mrb[0].mxu0
    %v247 = vpop.f32.mrb[0].mxu0
    %v248 = vadd.f32 %v136, %v247
    %v249 = vpop.f32.mrb[0].mxu0
    %250 = vmatprep.mubr.bf16.mxu0 0
    %251 = vmatmul.mubr.bf16.gmra.mrb[0].mxu0 %v155
    %v252 = vpop.f32.mrb[0].mxu0
    %v253 = vadd.f32 %v136, %v252
    %v254 = vpop.f32.mrb[0].mxu0
    %v255 = vpop.f32.mrb[0].mxu0
    %v256 = vadd.f32 %v136, %v255
    %v257 = vpop.f32.mrb[0].mxu0
    %258 = vmatprep.mubr.bf16.mxu0 0
    %259 = vmatmul.mubr.bf16.gmra.mrb[0].mxu0 %v156
    %v260 = vpop.f32.mrb[0].mxu0
    %v261 = vadd.f32 %v136, %v260
    %v262 = vpop.f32.mrb[0].mxu0
    %v263 = vpop.f32.mrb[0].mxu0
    %v264 = vadd.f32 %v136, %v263
    %v265 = vpop.f32.mrb[0].mxu0
    %266 = vmatprep.mubr.bf16.mxu0 0
    %267 = vmatmul.mubr.bf16.gmra.mrb[0].mxu0 %v157
    %v268 = vpop.f32.mrb[0].mxu0
    %v269 = vadd.f32 %v136, %v268
    %v270 = vpop.f32.mrb[0].mxu0
    %v271 = vpop.f32.mrb[0].mxu0
    %v272 = vadd.f32 %v136, %v271
    %v273 = vpop.f32.mrb[0].mxu0
    %274 = vdwg.mxu0
    %275 = vst [vmem:[#allocation2] sm:$0xff] %v245
    %276 = vst [vmem:[#allocation2 + $0x8] sm:$0xff] %v248
    %277 = vst [vmem:[#allocation2 + $0x10] sm:$0xff] %v253
    %278 = vst [vmem:[#allocation2 + $0x18] sm:$0xff] %v256
    %279 = vst [vmem:[#allocation2 + $0x20] sm:$0xff] %v261
    %280 = vst [vmem:[#allocation2 + $0x28] sm:$0xff] %v264
    %281 = vst [vmem:[#allocation2 + $0x30] sm:$0xff] %v269
    %282 = vst [vmem:[#allocation2 + $0x38] sm:$0xff] %v272
    %283 = vst [vmem:[#allocation4] sm:$0xff] 0.0
    %284 = vst [vmem:[#allocation5] sm:$0xff] 0.0
    %v285 = vld [vmem:[#allocation2] sm:$0xff]
    %v286 = vld [vmem:[#allocation4] sm:$0xff]
    %v287 = vpack.c.bf16 %v286, %v286
    %v288 = vld [vmem:[#allocation11] sm:$0xf]
    %v289 = vld [vmem:[#allocation11 + $0x4] sm:$0xf]
    %v290 = vld [vmem:[#allocation11 + $0x8] sm:$0xf]
    %v291 = vld [vmem:[#allocation11 + $0xc] sm:$0xf]
    %v292 = vld [vmem:[#allocation11 + $0x10] sm:$0xf]
    %v293 = vld [vmem:[#allocation11 + $0x14] sm:$0xf]
    %v294 = vld [vmem:[#allocation11 + $0x18] sm:$0xf]
    %v295 = vld [vmem:[#allocation11 + $0x1c] sm:$0xf]
    %v296 = vld [vmem:[#allocation11 + $0x20] sm:$0xf]
    %v297 = vld [vmem:[#allocation11 + $0x24] sm:$0xf]
    %v298 = vld [vmem:[#allocation11 + $0x28] sm:$0xf]
    %v299 = vld [vmem:[#allocation11 + $0x2c] sm:$0xf]
    %v300 = vld [vmem:[#allocation11 + $0x30] sm:$0xf]
    %v301 = vld [vmem:[#allocation11 + $0x34] sm:$0xf]
    %v302 = vld [vmem:[#allocation11 + $0x38] sm:$0xf]
    %v303 = vld [vmem:[#allocation11 + $0x3c] sm:$0xf]
    %v320 = vunpack.c.l.b16 %v288
    %v321 = vunpack.c.l.b16 %v289
    %v322 = vunpack.c.l.b16 %v290
    %v323 = vunpack.c.l.b16 %v291
    %v324 = vunpack.c.l.b16 %v292
    %v325 = vunpack.c.l.b16 %v293
    %v326 = vunpack.c.l.b16 %v294
    %v327 = vunpack.c.l.b16 %v295
    %v328 = vunpack.c.l.b16 %v296
    %v329 = vunpack.c.l.b16 %v297
    %v330 = vunpack.c.l.b16 %v298
    %v331 = vunpack.c.l.b16 %v299
    %v332 = vunpack.c.l.b16 %v300
    %v333 = vunpack.c.l.b16 %v301
    %v334 = vunpack.c.l.b16 %v302
    %v335 = vunpack.c.l.b16 %v303
    %v336 = vpack.c.b16 %v321, %v320
    %v337 = vpack.c.b16 %v323, %v322
    %v338 = vpack.c.b16 %v325, %v324
    %v339 = vpack.c.b16 %v327, %v326
    %v340 = vpack.c.b16 %v329, %v328
    %v341 = vpack.c.b16 %v331, %v330
    %v342 = vpack.c.b16 %v333, %v332
    %v343 = vpack.c.b16 %v335, %v334
    %352 = vmatprep.subr.bf16.mxu0 0
    %353 = vmatpush1.bf16.msra.mxu0 %v336
    %354 = vmatprep.subr.bf16.mxu0 0
    %355 = vmatpush1.bf16.msra.mxu0 %v337
    %356 = vmatprep.subr.bf16.mxu0 0
    %357 = vmatpush1.bf16.msra.mxu0 %v338
    %358 = vmatprep.subr.bf16.mxu0 0
    %359 = vmatpush1.bf16.msra.mxu0 %v339
    %360 = vmatprep.subr.bf16.mxu0 0
    %361 = vmatpush1.bf16.msra.mxu0 %v340
    %362 = vmatprep.subr.bf16.mxu0 0
    %363 = vmatpush1.bf16.msra.mxu0 %v341
    %364 = vmatprep.subr.bf16.mxu0 0
    %365 = vmatpush1.bf16.msra.mxu0 %v342
    %366 = vmatprep.subr.bf16.mxu0 0
    %367 = vmatpush1.bf16.msra.mxu0 %v343
    %368 = vmatprep.subr.bf16.mxu0 0
    %369 = vmatpush1.bf16.msra.mxu0 0
    %370 = vmatprep.subr.bf16.mxu0 0
    %371 = vmatpush1.bf16.msra.mxu0 0
    %372 = vmatprep.subr.bf16.mxu0 0
    %373 = vmatpush1.bf16.msra.mxu0 0
    %374 = vmatprep.subr.bf16.mxu0 0
    %375 = vmatpush1.bf16.msra.mxu0 0
    %376 = vmatprep.subr.bf16.mxu0 0
    %377 = vmatpush1.bf16.msra.mxu0 0
    %378 = vmatprep.subr.bf16.mxu0 0
    %379 = vmatpush1.bf16.msra.mxu0 0
    %380 = vmatprep.subr.bf16.mxu0 0
    %381 = vmatpush1.bf16.msra.mxu0 0
    %382 = vmatprep.subr.bf16.mxu0 0
    %383 = vmatpush1.bf16.msra.mxu0 0
    %384 = vmatprep.mubr.bf16.mxu0 0
    %385 = vmatmul.mubr.bf16.gmra.mrb[0].mxu0 %v287
    %v386 = vpop.f32.mrb[0].mxu0
    %v387 = vadd.f32 0.0, %v386
    %v388 = vpop.f32.mrb[0].mxu0
    %v389 = vpop.f32.mrb[0].mxu0
    %v390 = vpop.f32.mrb[0].mxu0
    %391 = vdwg.mxu0
    %v392 = vadd.f32 %v285, %v387
    %v393 = vxor.u32 %v392, 2147483648
    %v394 = vmul.f32 %v393, 1.442695
    %v395 = vpow.pop %v394
    %v396 = vadd.f32 %v395, 1.0
    %v397 = vrcp.pop %v396
    %v398 = vmul.f32 1.0, %v397
    %v399 = vtanh.pop %v392
    %v400 = vld [vmem:[#allocation5] sm:$0xff]
    %402 = vrot.lane.b32.xlu0 %v400, 32
    %v403 = vpop.permute.xlu0 %402
    %v405 = vmul.f32 %v398, %v403
    %407 = vrot.lane.b32.xlu0 %v399, 32
    %v408 = vpop.permute.xlu0 %407
    %v410 = vmul.f32 %v398, %v408
    %412 = vrot.lane.b32.xlu0 %v410, 32
    %v413 = vpop.permute.xlu0 %412
    %v415 = vadd.f32 %v405, %v413
    %v416 = vtanh.pop %v415
    %418 = vrot.lane.b32.xlu0 %v416, 32
    %v419 = vpop.permute.xlu0 %418
    %v421 = vmul.f32 %v398, %v419
    %423 = vrot.lane.b32.xlu0 %v415, 96
    %v424 = vpop.permute.xlu0 %423
    %vm426 = vcmask 261120
    %427 = vst.msk [vmem:[#allocation5] sm:$0xff] %vm426, %v424
    %429 = vrot.lane.b32.xlu0 %v421, 64
    %v430 = vpop.permute.xlu0 %429
    %432 = vst.msk [vmem:[#allocation4] sm:$0xff] %vm426, %v430
    %433 = vst.msk [vmem:[#allocation3] sm:$0xff] %vm426, %v430
    %v434 = vld [vmem:[#allocation2 + $0x8] sm:$0xff]
    %v435 = vld [vmem:[#allocation4] sm:$0xff]
    %v436 = vpack.c.bf16 %v435, %v435
    %v437 = vld [vmem:[#allocation11] sm:$0xf]
    %v438 = vld [vmem:[#allocation11 + $0x4] sm:$0xf]
    %v439 = vld [vmem:[#allocation11 + $0x8] sm:$0xf]
    %v440 = vld [vmem:[#allocation11 + $0xc] sm:$0xf]
    %v441 = vld [vmem:[#allocation11 + $0x10] sm:$0xf]
    %v442 = vld [vmem:[#allocation11 + $0x14] sm:$0xf]
    %v443 = vld [vmem:[#allocation11 + $0x18] sm:$0xf]
    %v444 = vld [vmem:[#allocation11 + $0x1c] sm:$0xf]
    %v445 = vld [vmem:[#allocation11 + $0x20] sm:$0xf]
    %v446 = vld [vmem:[#allocation11 + $0x24] sm:$0xf]
    %v447 = vld [vmem:[#allocation11 + $0x28] sm:$0xf]
    %v448 = vld [vmem:[#allocation11 + $0x2c] sm:$0xf]
    %v449 = vld [vmem:[#allocation11 + $0x30] sm:$0xf]
    %v450 = vld [vmem:[#allocation11 + $0x34] sm:$0xf]
    %v451 = vld [vmem:[#allocation11 + $0x38] sm:$0xf]
    %v452 = vld [vmem:[#allocation11 + $0x3c] sm:$0xf]
    %v469 = vunpack.c.l.b16 %v437
    %v470 = vunpack.c.l.b16 %v438
    %v471 = vunpack.c.l.b16 %v439
    %v472 = vunpack.c.l.b16 %v440
    %v473 = vunpack.c.l.b16 %v441
    %v474 = vunpack.c.l.b16 %v442
    %v475 = vunpack.c.l.b16 %v443
    %v476 = vunpack.c.l.b16 %v444
    %v477 = vunpack.c.l.b16 %v445
    %v478 = vunpack.c.l.b16 %v446
    %v479 = vunpack.c.l.b16 %v447
    %v480 = vunpack.c.l.b16 %v448
    %v481 = vunpack.c.l.b16 %v449
    %v482 = vunpack.c.l.b16 %v450
    %v483 = vunpack.c.l.b16 %v451
    %v484 = vunpack.c.l.b16 %v452
    %v485 = vpack.c.b16 %v470, %v469
    %v486 = vpack.c.b16 %v472, %v471
    %v487 = vpack.c.b16 %v474, %v473
    %v488 = vpack.c.b16 %v476, %v475
    %v489 = vpack.c.b16 %v478, %v477
    %v490 = vpack.c.b16 %v480, %v479
    %v491 = vpack.c.b16 %v482, %v481
    %v492 = vpack.c.b16 %v484, %v483
    %501 = vmatprep.subr.bf16.mxu0 0
    %502 = vmatpush1.bf16.msra.mxu0 %v485
    %503 = vmatprep.subr.bf16.mxu0 0
    %504 = vmatpush1.bf16.msra.mxu0 %v486
    %505 = vmatprep.subr.bf16.mxu0 0
    %506 = vmatpush1.bf16.msra.mxu0 %v487
    %507 = vmatprep.subr.bf16.mxu0 0
    %508 = vmatpush1.bf16.msra.mxu0 %v488
    %509 = vmatprep.subr.bf16.mxu0 0
    %510 = vmatpush1.bf16.msra.mxu0 %v489
    %511 = vmatprep.subr.bf16.mxu0 0
    %512 = vmatpush1.bf16.msra.mxu0 %v490
    %513 = vmatprep.subr.bf16.mxu0 0
    %514 = vmatpush1.bf16.msra.mxu0 %v491
    %515 = vmatprep.subr.bf16.mxu0 0
    %516 = vmatpush1.bf16.msra.mxu0 %v492
    %517 = vmatprep.subr.bf16.mxu0 0
    %518 = vmatpush1.bf16.msra.mxu0 0
    %519 = vmatprep.subr.bf16.mxu0 0
    %520 = vmatpush1.bf16.msra.mxu0 0
    %521 = vmatprep.subr.bf16.mxu0 0
    %522 = vmatpush1.bf16.msra.mxu0 0
    %523 = vmatprep.subr.bf16.mxu0 0
    %524 = vmatpush1.bf16.msra.mxu0 0
    %525 = vmatprep.subr.bf16.mxu0 0
    %526 = vmatpush1.bf16.msra.mxu0 0
    %527 = vmatprep.subr.bf16.mxu0 0
    %528 = vmatpush1.bf16.msra.mxu0 0
    %529 = vmatprep.subr.bf16.mxu0 0
    %530 = vmatpush1.bf16.msra.mxu0 0
    %531 = vmatprep.subr.bf16.mxu0 0
    %532 = vmatpush1.bf16.msra.mxu0 0
    %533 = vmatprep.mubr.bf16.mxu0 0
    %534 = vmatmul.mubr.bf16.gmra.mrb[0].mxu0 %v436
    %v535 = vpop.f32.mrb[0].mxu0
    %v536 = vadd.f32 0.0, %v535
    %v537 = vpop.f32.mrb[0].mxu0
    %v538 = vpop.f32.mrb[0].mxu0
    %v539 = vpop.f32.mrb[0].mxu0
    %540 = vdwg.mxu0
    %v541 = vadd.f32 %v434, %v536
    %v542 = vxor.u32 %v541, 2147483648
    %v543 = vmul.f32 %v542, 1.442695
    %v544 = vpow.pop %v543
    %v545 = vadd.f32 %v544, 1.0
    %v546 = vrcp.pop %v545
    %v547 = vmul.f32 1.0, %v546
    %v548 = vtanh.pop %v541
    %v549 = vld [vmem:[#allocation5] sm:$0xff]
    %551 = vrot.lane.b32.xlu0 %v549, 32
    %v552 = vpop.permute.xlu0 %551
    %v554 = vmul.f32 %v547, %v552
    %556 = vrot.lane.b32.xlu0 %v548, 32
    %v557 = vpop.permute.xlu0 %556
    %v559 = vmul.f32 %v547, %v557
    %561 = vrot.lane.b32.xlu0 %v559, 32
    %v562 = vpop.permute.xlu0 %561
    %v564 = vadd.f32 %v554, %v562
    %v565 = vtanh.pop %v564
    %567 = vrot.lane.b32.xlu0 %v565, 32
    %v568 = vpop.permute.xlu0 %567
    %v570 = vmul.f32 %v547, %v568
    %572 = vrot.lane.b32.xlu0 %v564, 96
    %v573 = vpop.permute.xlu0 %572
    %575 = vst.msk [vmem:[#allocation5] sm:$0xff] %vm426, %v573
    %577 = vrot.lane.b32.xlu0 %v570, 64
    %v578 = vpop.permute.xlu0 %577
    %580 = vst.msk [vmem:[#allocation4] sm:$0xff] %vm426, %v578
    %581 = vst.msk [vmem:[#allocation3 + $0x8] sm:$0xff] %vm426, %v578
    %v582 = vld [vmem:[#allocation2 + $0x10] sm:$0xff]
    %v583 = vld [vmem:[#allocation4] sm:$0xff]
    %v584 = vpack.c.bf16 %v583, %v583
    %v585 = vld [vmem:[#allocation11] sm:$0xf]
    %v586 = vld [vmem:[#allocation11 + $0x4] sm:$0xf]
    %v587 = vld [vmem:[#allocation11 + $0x8] sm:$0xf]
    %v588 = vld [vmem:[#allocation11 + $0xc] sm:$0xf]
    %v589 = vld [vmem:[#allocation11 + $0x10] sm:$0xf]
    %v590 = vld [vmem:[#allocation11 + $0x14] sm:$0xf]
    %v591 = vld [vmem:[#allocation11 + $0x18] sm:$0xf]
    %v592 = vld [vmem:[#allocation11 + $0x1c] sm:$0xf]
    %v593 = vld [vmem:[#allocation11 + $0x20] sm:$0xf]
    %v594 = vld [vmem:[#allocation11 + $0x24] sm:$0xf]
    %v595 = vld [vmem:[#allocation11 + $0x28] sm:$0xf]
    %v596 = vld [vmem:[#allocation11 + $0x2c] sm:$0xf]
    %v597 = vld [vmem:[#allocation11 + $0x30] sm:$0xf]
    %v598 = vld [vmem:[#allocation11 + $0x34] sm:$0xf]
    %v599 = vld [vmem:[#allocation11 + $0x38] sm:$0xf]
    %v600 = vld [vmem:[#allocation11 + $0x3c] sm:$0xf]
    %v617 = vunpack.c.l.b16 %v585
    %v618 = vunpack.c.l.b16 %v586
    %v619 = vunpack.c.l.b16 %v587
    %v620 = vunpack.c.l.b16 %v588
    %v621 = vunpack.c.l.b16 %v589
    %v622 = vunpack.c.l.b16 %v590
    %v623 = vunpack.c.l.b16 %v591
    %v624 = vunpack.c.l.b16 %v592
    %v625 = vunpack.c.l.b16 %v593
    %v626 = vunpack.c.l.b16 %v594
    %v627 = vunpack.c.l.b16 %v595
    %v628 = vunpack.c.l.b16 %v596
    %v629 = vunpack.c.l.b16 %v597
    %v630 = vunpack.c.l.b16 %v598
    %v631 = vunpack.c.l.b16 %v599
    %v632 = vunpack.c.l.b16 %v600
    %v633 = vpack.c.b16 %v618, %v617
    %v634 = vpack.c.b16 %v620, %v619
    %v635 = vpack.c.b16 %v622, %v621
    %v636 = vpack.c.b16 %v624, %v623
    %v637 = vpack.c.b16 %v626, %v625
    %v638 = vpack.c.b16 %v628, %v627
    %v639 = vpack.c.b16 %v630, %v629
    %v640 = vpack.c.b16 %v632, %v631
    %649 = vmatprep.subr.bf16.mxu0 0
    %650 = vmatpush1.bf16.msra.mxu0 %v633
    %651 = vmatprep.subr.bf16.mxu0 0
    %652 = vmatpush1.bf16.msra.mxu0 %v634
    %653 = vmatprep.subr.bf16.mxu0 0
    %654 = vmatpush1.bf16.msra.mxu0 %v635
    %655 = vmatprep.subr.bf16.mxu0 0
    %656 = vmatpush1.bf16.msra.mxu0 %v636
    %657 = vmatprep.subr.bf16.mxu0 0
    %658 = vmatpush1.bf16.msra.mxu0 %v637
    %659 = vmatprep.subr.bf16.mxu0 0
    %660 = vmatpush1.bf16.msra.mxu0 %v638
    %661 = vmatprep.subr.bf16.mxu0 0
    %662 = vmatpush1.bf16.msra.mxu0 %v639
    %663 = vmatprep.subr.bf16.mxu0 0
    %664 = vmatpush1.bf16.msra.mxu0 %v640
    %665 = vmatprep.subr.bf16.mxu0 0
    %666 = vmatpush1.bf16.msra.mxu0 0
    %667 = vmatprep.subr.bf16.mxu0 0
    %668 = vmatpush1.bf16.msra.mxu0 0
    %669 = vmatprep.subr.bf16.mxu0 0
    %670 = vmatpush1.bf16.msra.mxu0 0
    %671 = vmatprep.subr.bf16.mxu0 0
    %672 = vmatpush1.bf16.msra.mxu0 0
    %673 = vmatprep.subr.bf16.mxu0 0
    %674 = vmatpush1.bf16.msra.mxu0 0
    %675 = vmatprep.subr.bf16.mxu0 0
    %676 = vmatpush1.bf16.msra.mxu0 0
    %677 = vmatprep.subr.bf16.mxu0 0
    %678 = vmatpush1.bf16.msra.mxu0 0
    %679 = vmatprep.subr.bf16.mxu0 0
    %680 = vmatpush1.bf16.msra.mxu0 0
    %681 = vmatprep.mubr.bf16.mxu0 0
    %682 = vmatmul.mubr.bf16.gmra.mrb[0].mxu0 %v584
    %v683 = vpop.f32.mrb[0].mxu0
    %v684 = vadd.f32 0.0, %v683
    %v685 = vpop.f32.mrb[0].mxu0
    %v686 = vpop.f32.mrb[0].mxu0
    %v687 = vpop.f32.mrb[0].mxu0
    %688 = vdwg.mxu0
    %v689 = vadd.f32 %v582, %v684
    %v690 = vxor.u32 %v689, 2147483648
    %v691 = vmul.f32 %v690, 1.442695
    %v692 = vpow.pop %v691
    %v693 = vadd.f32 %v692, 1.0
    %v694 = vrcp.pop %v693
    %v695 = vmul.f32 1.0, %v694
    %v696 = vtanh.pop %v689
    %v697 = vld [vmem:[#allocation5] sm:$0xff]
    %699 = vrot.lane.b32.xlu0 %v697, 32
    %v700 = vpop.permute.xlu0 %699
    %v702 = vmul.f32 %v695, %v700
    %704 = vrot.lane.b32.xlu0 %v696, 32
    %v705 = vpop.permute.xlu0 %704
    %v707 = vmul.f32 %v695, %v705
    %709 = vrot.lane.b32.xlu0 %v707, 32
    %v710 = vpop.permute.xlu0 %709
    %v712 = vadd.f32 %v702, %v710
    %v713 = vtanh.pop %v712
    %715 = vrot.lane.b32.xlu0 %v713, 32
    %v716 = vpop.permute.xlu0 %715
    %v718 = vmul.f32 %v695, %v716
    %720 = vrot.lane.b32.xlu0 %v712, 96
    %v721 = vpop.permute.xlu0 %720
    %723 = vst.msk [vmem:[#allocation5] sm:$0xff] %vm426, %v721
    %725 = vrot.lane.b32.xlu0 %v718, 64
    %v726 = vpop.permute.xlu0 %725
    %728 = vst.msk [vmem:[#allocation4] sm:$0xff] %vm426, %v726
    %729 = vst.msk [vmem:[#allocation3 + $0x10] sm:$0xff] %vm426, %v726
    %v730 = vld [vmem:[#allocation2 + $0x18] sm:$0xff]
    %v731 = vld [vmem:[#allocation4] sm:$0xff]
    %v732 = vpack.c.bf16 %v731, %v731
    %v733 = vld [vmem:[#allocation11] sm:$0xf]
    %v734 = vld [vmem:[#allocation11 + $0x4] sm:$0xf]
    %v735 = vld [vmem:[#allocation11 + $0x8] sm:$0xf]
    %v736 = vld [vmem:[#allocation11 + $0xc] sm:$0xf]
    %v737 = vld [vmem:[#allocation11 + $0x10] sm:$0xf]
    %v738 = vld [vmem:[#allocation11 + $0x14] sm:$0xf]
    %v739 = vld [vmem:[#allocation11 + $0x18] sm:$0xf]
    %v740 = vld [vmem:[#allocation11 + $0x1c] sm:$0xf]
    %v741 = vld [vmem:[#allocation11 + $0x20] sm:$0xf]
    %v742 = vld [vmem:[#allocation11 + $0x24] sm:$0xf]
    %v743 = vld [vmem:[#allocation11 + $0x28] sm:$0xf]
    %v744 = vld [vmem:[#allocation11 + $0x2c] sm:$0xf]
    %v745 = vld [vmem:[#allocation11 + $0x30] sm:$0xf]
    %v746 = vld [vmem:[#allocation11 + $0x34] sm:$0xf]
    %v747 = vld [vmem:[#allocation11 + $0x38] sm:$0xf]
    %v748 = vld [vmem:[#allocation11 + $0x3c] sm:$0xf]
    %v765 = vunpack.c.l.b16 %v733
    %v766 = vunpack.c.l.b16 %v734
    %v767 = vunpack.c.l.b16 %v735
    %v768 = vunpack.c.l.b16 %v736
    %v769 = vunpack.c.l.b16 %v737
    %v770 = vunpack.c.l.b16 %v738
    %v771 = vunpack.c.l.b16 %v739
    %v772 = vunpack.c.l.b16 %v740
    %v773 = vunpack.c.l.b16 %v741
    %v774 = vunpack.c.l.b16 %v742
    %v775 = vunpack.c.l.b16 %v743
    %v776 = vunpack.c.l.b16 %v744
    %v777 = vunpack.c.l.b16 %v745
    %v778 = vunpack.c.l.b16 %v746
    %v779 = vunpack.c.l.b16 %v747
    %v780 = vunpack.c.l.b16 %v748
    %v781 = vpack.c.b16 %v766, %v765
    %v782 = vpack.c.b16 %v768, %v767
    %v783 = vpack.c.b16 %v770, %v769
    %v784 = vpack.c.b16 %v772, %v771
    %v785 = vpack.c.b16 %v774, %v773
    %v786 = vpack.c.b16 %v776, %v775
    %v787 = vpack.c.b16 %v778, %v777
    %v788 = vpack.c.b16 %v780, %v779
    %797 = vmatprep.subr.bf16.mxu0 0
    %798 = vmatpush1.bf16.msra.mxu0 %v781
    %799 = vmatprep.subr.bf16.mxu0 0
    %800 = vmatpush1.bf16.msra.mxu0 %v782
    %801 = vmatprep.subr.bf16.mxu0 0
    %802 = vmatpush1.bf16.msra.mxu0 %v783
    %803 = vmatprep.subr.bf16.mxu0 0
    %804 = vmatpush1.bf16.msra.mxu0 %v784
    %805 = vmatprep.subr.bf16.mxu0 0
    %806 = vmatpush1.bf16.msra.mxu0 %v785
    %807 = vmatprep.subr.bf16.mxu0 0
    %808 = vmatpush1.bf16.msra.mxu0 %v786
    %809 = vmatprep.subr.bf16.mxu0 0
    %810 = vmatpush1.bf16.msra.mxu0 %v787
    %811 = vmatprep.subr.bf16.mxu0 0
    %812 = vmatpush1.bf16.msra.mxu0 %v788
    %813 = vmatprep.subr.bf16.mxu0 0
    %814 = vmatpush1.bf16.msra.mxu0 0
    %815 = vmatprep.subr.bf16.mxu0 0
    %816 = vmatpush1.bf16.msra.mxu0 0
    %817 = vmatprep.subr.bf16.mxu0 0
    %818 = vmatpush1.bf16.msra.mxu0 0
    %819 = vmatprep.subr.bf16.mxu0 0
    %820 = vmatpush1.bf16.msra.mxu0 0
    %821 = vmatprep.subr.bf16.mxu0 0
    %822 = vmatpush1.bf16.msra.mxu0 0
    %823 = vmatprep.subr.bf16.mxu0 0
    %824 = vmatpush1.bf16.msra.mxu0 0
    %825 = vmatprep.subr.bf16.mxu0 0
    %826 = vmatpush1.bf16.msra.mxu0 0
    %827 = vmatprep.subr.bf16.mxu0 0
    %828 = vmatpush1.bf16.msra.mxu0 0
    %829 = vmatprep.mubr.bf16.mxu0 0
    %830 = vmatmul.mubr.bf16.gmra.mrb[0].mxu0 %v732
    %v831 = vpop.f32.mrb[0].mxu0
    %v832 = vadd.f32 0.0, %v831
    %v833 = vpop.f32.mrb[0].mxu0
    %v834 = vpop.f32.mrb[0].mxu0
    %v835 = vpop.f32.mrb[0].mxu0
    %836 = vdwg.mxu0
    %v837 = vadd.f32 %v730, %v832
    %v838 = vxor.u32 %v837, 2147483648
    %v839 = vmul.f32 %v838, 1.442695
    %v840 = vpow.pop %v839
    %v841 = vadd.f32 %v840, 1.0
    %v842 = vrcp.pop %v841
    %v843 = vmul.f32 1.0, %v842
    %v844 = vtanh.pop %v837
    %v845 = vld [vmem:[#allocation5] sm:$0xff]
    %847 = vrot.lane.b32.xlu0 %v845, 32
    %v848 = vpop.permute.xlu0 %847
    %v850 = vmul.f32 %v843, %v848
    %852 = vrot.lane.b32.xlu0 %v844, 32
    %v853 = vpop.permute.xlu0 %852
    %v855 = vmul.f32 %v843, %v853
    %857 = vrot.lane.b32.xlu0 %v855, 32
    %v858 = vpop.permute.xlu0 %857
    %v860 = vadd.f32 %v850, %v858
    %v861 = vtanh.pop %v860
    %863 = vrot.lane.b32.xlu0 %v861, 32
    %v864 = vpop.permute.xlu0 %863
    %v866 = vmul.f32 %v843, %v864
    %868 = vrot.lane.b32.xlu0 %v860, 96
    %v869 = vpop.permute.xlu0 %868
    %871 = vst.msk [vmem:[#allocation5] sm:$0xff] %vm426, %v869
    %873 = vrot.lane.b32.xlu0 %v866, 64
    %v874 = vpop.permute.xlu0 %873
    %876 = vst.msk [vmem:[#allocation4] sm:$0xff] %vm426, %v874
    %877 = vst.msk [vmem:[#allocation3 + $0x18] sm:$0xff] %vm426, %v874
    %v878 = vld [vmem:[#allocation2 + $0x20] sm:$0xff]
    %v879 = vld [vmem:[#allocation4] sm:$0xff]
    %v880 = vpack.c.bf16 %v879, %v879
    %v881 = vld [vmem:[#allocation11] sm:$0xf]
    %v882 = vld [vmem:[#allocation11 + $0x4] sm:$0xf]
    %v883 = vld [vmem:[#allocation11 + $0x8] sm:$0xf]
    %v884 = vld [vmem:[#allocation11 + $0xc] sm:$0xf]
    %v885 = vld [vmem:[#allocation11 + $0x10] sm:$0xf]
    %v886 = vld [vmem:[#allocation11 + $0x14] sm:$0xf]
    %v887 = vld [vmem:[#allocation11 + $0x18] sm:$0xf]
    %v888 = vld [vmem:[#allocation11 + $0x1c] sm:$0xf]
    %v889 = vld [vmem:[#allocation11 + $0x20] sm:$0xf]
    %v890 = vld [vmem:[#allocation11 + $0x24] sm:$0xf]
    %v891 = vld [vmem:[#allocation11 + $0x28] sm:$0xf]
    %v892 = vld [vmem:[#allocation11 + $0x2c] sm:$0xf]
    %v893 = vld [vmem:[#allocation11 + $0x30] sm:$0xf]
    %v894 = vld [vmem:[#allocation11 + $0x34] sm:$0xf]
    %v895 = vld [vmem:[#allocation11 + $0x38] sm:$0xf]
    %v896 = vld [vmem:[#allocation11 + $0x3c] sm:$0xf]
    %v913 = vunpack.c.l.b16 %v881
    %v914 = vunpack.c.l.b16 %v882
    %v915 = vunpack.c.l.b16 %v883
    %v916 = vunpack.c.l.b16 %v884
    %v917 = vunpack.c.l.b16 %v885
    %v918 = vunpack.c.l.b16 %v886
    %v919 = vunpack.c.l.b16 %v887
    %v920 = vunpack.c.l.b16 %v888
    %v921 = vunpack.c.l.b16 %v889
    %v922 = vunpack.c.l.b16 %v890
    %v923 = vunpack.c.l.b16 %v891
    %v924 = vunpack.c.l.b16 %v892
    %v925 = vunpack.c.l.b16 %v893
    %v926 = vunpack.c.l.b16 %v894
    %v927 = vunpack.c.l.b16 %v895
    %v928 = vunpack.c.l.b16 %v896
    %v929 = vpack.c.b16 %v914, %v913
    %v930 = vpack.c.b16 %v916, %v915
    %v931 = vpack.c.b16 %v918, %v917
    %v932 = vpack.c.b16 %v920, %v919
    %v933 = vpack.c.b16 %v922, %v921
    %v934 = vpack.c.b16 %v924, %v923
    %v935 = vpack.c.b16 %v926, %v925
    %v936 = vpack.c.b16 %v928, %v927
    %945 = vmatprep.subr.bf16.mxu0 0
    %946 = vmatpush1.bf16.msra.mxu0 %v929
    %947 = vmatprep.subr.bf16.mxu0 0
    %948 = vmatpush1.bf16.msra.mxu0 %v930
    %949 = vmatprep.subr.bf16.mxu0 0
    %950 = vmatpush1.bf16.msra.mxu0 %v931
    %951 = vmatprep.subr.bf16.mxu0 0
    %952 = vmatpush1.bf16.msra.mxu0 %v932
    %953 = vmatprep.subr.bf16.mxu0 0
    %954 = vmatpush1.bf16.msra.mxu0 %v933
    %955 = vmatprep.subr.bf16.mxu0 0
    %956 = vmatpush1.bf16.msra.mxu0 %v934
    %957 = vmatprep.subr.bf16.mxu0 0
    %958 = vmatpush1.bf16.msra.mxu0 %v935
    %959 = vmatprep.subr.bf16.mxu0 0
    %960 = vmatpush1.bf16.msra.mxu0 %v936
    %961 = vmatprep.subr.bf16.mxu0 0
    %962 = vmatpush1.bf16.msra.mxu0 0
    %963 = vmatprep.subr.bf16.mxu0 0
    %964 = vmatpush1.bf16.msra.mxu0 0
    %965 = vmatprep.subr.bf16.mxu0 0
    %966 = vmatpush1.bf16.msra.mxu0 0
    %967 = vmatprep.subr.bf16.mxu0 0
    %968 = vmatpush1.bf16.msra.mxu0 0
    %969 = vmatprep.subr.bf16.mxu0 0
    %970 = vmatpush1.bf16.msra.mxu0 0
    %971 = vmatprep.subr.bf16.mxu0 0
    %972 = vmatpush1.bf16.msra.mxu0 0
    %973 = vmatprep.subr.bf16.mxu0 0
    %974 = vmatpush1.bf16.msra.mxu0 0
    %975 = vmatprep.subr.bf16.mxu0 0
    %976 = vmatpush1.bf16.msra.mxu0 0
    %977 = vmatprep.mubr.bf16.mxu0 0
    %978 = vmatmul.mubr.bf16.gmra.mrb[0].mxu0 %v880
    %v979 = vpop.f32.mrb[0].mxu0
    %v980 = vadd.f32 0.0, %v979
    %v981 = vpop.f32.mrb[0].mxu0
    %v982 = vpop.f32.mrb[0].mxu0
    %v983 = vpop.f32.mrb[0].mxu0
    %984 = vdwg.mxu0
    %v985 = vadd.f32 %v878, %v980
    %v986 = vxor.u32 %v985, 2147483648
    %v987 = vmul.f32 %v986, 1.442695
    %v988 = vpow.pop %v987
    %v989 = vadd.f32 %v988, 1.0
    %v990 = vrcp.pop %v989
    %v991 = vmul.f32 1.0, %v990
    %v992 = vtanh.pop %v985
    %v993 = vld [vmem:[#allocation5] sm:$0xff]
    %995 = vrot.lane.b32.xlu0 %v993, 32
    %v996 = vpop.permute.xlu0 %995
    %v998 = vmul.f32 %v991, %v996
    %1000 = vrot.lane.b32.xlu0 %v992, 32
    %v1001 = vpop.permute.xlu0 %1000
    %v1003 = vmul.f32 %v991, %v1001
    %1005 = vrot.lane.b32.xlu0 %v1003, 32
    %v1006 = vpop.permute.xlu0 %1005
    %v1008 = vadd.f32 %v998, %v1006
    %v1009 = vtanh.pop %v1008
    %1011 = vrot.lane.b32.xlu0 %v1009, 32
    %v1012 = vpop.permute.xlu0 %1011
    %v1014 = vmul.f32 %v991, %v1012
    %1016 = vrot.lane.b32.xlu0 %v1008, 96
    %v1017 = vpop.permute.xlu0 %1016
    %1019 = vst.msk [vmem:[#allocation5] sm:$0xff] %vm426, %v1017
    %1021 = vrot.lane.b32.xlu0 %v1014, 64
    %v1022 = vpop.permute.xlu0 %1021
    %1024 = vst.msk [vmem:[#allocation4] sm:$0xff] %vm426, %v1022
    %1025 = vst.msk [vmem:[#allocation3 + $0x20] sm:$0xff] %vm426, %v1022
    %v1026 = vld [vmem:[#allocation2 + $0x28] sm:$0xff]
    %v1027 = vld [vmem:[#allocation4] sm:$0xff]
    %v1028 = vpack.c.bf16 %v1027, %v1027
    %v1029 = vld [vmem:[#allocation11] sm:$0xf]
    %v1030 = vld [vmem:[#allocation11 + $0x4] sm:$0xf]
    %v1031 = vld [vmem:[#allocation11 + $0x8] sm:$0xf]
    %v1032 = vld [vmem:[#allocation11 + $0xc] sm:$0xf]
    %v1033 = vld [vmem:[#allocation11 + $0x10] sm:$0xf]
    %v1034 = vld [vmem:[#allocation11 + $0x14] sm:$0xf]
    %v1035 = vld [vmem:[#allocation11 + $0x18] sm:$0xf]
    %v1036 = vld [vmem:[#allocation11 + $0x1c] sm:$0xf]
    %v1037 = vld [vmem:[#allocation11 + $0x20] sm:$0xf]
    %v1038 = vld [vmem:[#allocation11 + $0x24] sm:$0xf]
    %v1039 = vld [vmem:[#allocation11 + $0x28] sm:$0xf]
    %v1040 = vld [vmem:[#allocation11 + $0x2c] sm:$0xf]
    %v1041 = vld [vmem:[#allocation11 + $0x30] sm:$0xf]
    %v1042 = vld [vmem:[#allocation11 + $0x34] sm:$0xf]
    %v1043 = vld [vmem:[#allocation11 + $0x38] sm:$0xf]
    %v1044 = vld [vmem:[#allocation11 + $0x3c] sm:$0xf]
    %v1061 = vunpack.c.l.b16 %v1029
    %v1062 = vunpack.c.l.b16 %v1030
    %v1063 = vunpack.c.l.b16 %v1031
    %v1064 = vunpack.c.l.b16 %v1032
    %v1065 = vunpack.c.l.b16 %v1033
    %v1066 = vunpack.c.l.b16 %v1034
    %v1067 = vunpack.c.l.b16 %v1035
    %v1068 = vunpack.c.l.b16 %v1036
    %v1069 = vunpack.c.l.b16 %v1037
    %v1070 = vunpack.c.l.b16 %v1038
    %v1071 = vunpack.c.l.b16 %v1039
    %v1072 = vunpack.c.l.b16 %v1040
    %v1073 = vunpack.c.l.b16 %v1041
    %v1074 = vunpack.c.l.b16 %v1042
    %v1075 = vunpack.c.l.b16 %v1043
    %v1076 = vunpack.c.l.b16 %v1044
    %v1077 = vpack.c.b16 %v1062, %v1061
    %v1078 = vpack.c.b16 %v1064, %v1063
    %v1079 = vpack.c.b16 %v1066, %v1065
    %v1080 = vpack.c.b16 %v1068, %v1067
    %v1081 = vpack.c.b16 %v1070, %v1069
    %v1082 = vpack.c.b16 %v1072, %v1071
    %v1083 = vpack.c.b16 %v1074, %v1073
    %v1084 = vpack.c.b16 %v1076, %v1075
    %1093 = vmatprep.subr.bf16.mxu0 0
    %1094 = vmatpush1.bf16.msra.mxu0 %v1077
    %1095 = vmatprep.subr.bf16.mxu0 0
    %1096 = vmatpush1.bf16.msra.mxu0 %v1078
    %1097 = vmatprep.subr.bf16.mxu0 0
    %1098 = vmatpush1.bf16.msra.mxu0 %v1079
    %1099 = vmatprep.subr.bf16.mxu0 0
    %1100 = vmatpush1.bf16.msra.mxu0 %v1080
    %1101 = vmatprep.subr.bf16.mxu0 0
    %1102 = vmatpush1.bf16.msra.mxu0 %v1081
    %1103 = vmatprep.subr.bf16.mxu0 0
    %1104 = vmatpush1.bf16.msra.mxu0 %v1082
    %1105 = vmatprep.subr.bf16.mxu0 0
    %1106 = vmatpush1.bf16.msra.mxu0 %v1083
    %1107 = vmatprep.subr.bf16.mxu0 0
    %1108 = vmatpush1.bf16.msra.mxu0 %v1084
    %1109 = vmatprep.subr.bf16.mxu0 0
    %1110 = vmatpush1.bf16.msra.mxu0 0
    %1111 = vmatprep.subr.bf16.mxu0 0
    %1112 = vmatpush1.bf16.msra.mxu0 0
    %1113 = vmatprep.subr.bf16.mxu0 0
    %1114 = vmatpush1.bf16.msra.mxu0 0
    %1115 = vmatprep.subr.bf16.mxu0 0
    %1116 = vmatpush1.bf16.msra.mxu0 0
    %1117 = vmatprep.subr.bf16.mxu0 0
    %1118 = vmatpush1.bf16.msra.mxu0 0
    %1119 = vmatprep.subr.bf16.mxu0 0
    %1120 = vmatpush1.bf16.msra.mxu0 0
    %1121 = vmatprep.subr.bf16.mxu0 0
    %1122 = vmatpush1.bf16.msra.mxu0 0
    %1123 = vmatprep.subr.bf16.mxu0 0
    %1124 = vmatpush1.bf16.msra.mxu0 0
    %1125 = vmatprep.mubr.bf16.mxu0 0
    %1126 = vmatmul.mubr.bf16.gmra.mrb[0].mxu0 %v1028
    %v1127 = vpop.f32.mrb[0].mxu0
    %v1128 = vadd.f32 0.0, %v1127
    %v1129 = vpop.f32.mrb[0].mxu0
    %v1130 = vpop.f32.mrb[0].mxu0
    %v1131 = vpop.f32.mrb[0].mxu0
    %1132 = vdwg.mxu0
    %v1133 = vadd.f32 %v1026, %v1128
    %v1134 = vxor.u32 %v1133, 2147483648
    %v1135 = vmul.f32 %v1134, 1.442695
    %v1136 = vpow.pop %v1135
    %v1137 = vadd.f32 %v1136, 1.0
    %v1138 = vrcp.pop %v1137
    %v1139 = vmul.f32 1.0, %v1138
    %v1140 = vtanh.pop %v1133
    %v1141 = vld [vmem:[#allocation5] sm:$0xff]
    %1143 = vrot.lane.b32.xlu0 %v1141, 32
    %v1144 = vpop.permute.xlu0 %1143
    %v1146 = vmul.f32 %v1139, %v1144
    %1148 = vrot.lane.b32.xlu0 %v1140, 32
    %v1149 = vpop.permute.xlu0 %1148
    %v1151 = vmul.f32 %v1139, %v1149
    %1153 = vrot.lane.b32.xlu0 %v1151, 32
    %v1154 = vpop.permute.xlu0 %1153
    %v1156 = vadd.f32 %v1146, %v1154
    %v1157 = vtanh.pop %v1156
    %1159 = vrot.lane.b32.xlu0 %v1157, 32
    %v1160 = vpop.permute.xlu0 %1159
    %v1162 = vmul.f32 %v1139, %v1160
    %1164 = vrot.lane.b32.xlu0 %v1156, 96
    %v1165 = vpop.permute.xlu0 %1164
    %1167 = vst.msk [vmem:[#allocation5] sm:$0xff] %vm426, %v1165
    %1169 = vrot.lane.b32.xlu0 %v1162, 64
    %v1170 = vpop.permute.xlu0 %1169
    %1172 = vst.msk [vmem:[#allocation4] sm:$0xff] %vm426, %v1170
    %1173 = vst.msk [vmem:[#allocation3 + $0x28] sm:$0xff] %vm426, %v1170
    %v1174 = vld [vmem:[#allocation2 + $0x30] sm:$0xff]
    %v1175 = vld [vmem:[#allocation4] sm:$0xff]
    %v1176 = vpack.c.bf16 %v1175, %v1175
    %v1177 = vld [vmem:[#allocation11] sm:$0xf]
    %v1178 = vld [vmem:[#allocation11 + $0x4] sm:$0xf]
    %v1179 = vld [vmem:[#allocation11 + $0x8] sm:$0xf]
    %v1180 = vld [vmem:[#allocation11 + $0xc] sm:$0xf]
    %v1181 = vld [vmem:[#allocation11 + $0x10] sm:$0xf]
    %v1182 = vld [vmem:[#allocation11 + $0x14] sm:$0xf]
    %v1183 = vld [vmem:[#allocation11 + $0x18] sm:$0xf]
    %v1184 = vld [vmem:[#allocation11 + $0x1c] sm:$0xf]
    %v1185 = vld [vmem:[#allocation11 + $0x20] sm:$0xf]
    %v1186 = vld [vmem:[#allocation11 + $0x24] sm:$0xf]
    %v1187 = vld [vmem:[#allocation11 + $0x28] sm:$0xf]
    %v1188 = vld [vmem:[#allocation11 + $0x2c] sm:$0xf]
    %v1189 = vld [vmem:[#allocation11 + $0x30] sm:$0xf]
    %v1190 = vld [vmem:[#allocation11 + $0x34] sm:$0xf]
    %v1191 = vld [vmem:[#allocation11 + $0x38] sm:$0xf]
    %v1192 = vld [vmem:[#allocation11 + $0x3c] sm:$0xf]
    %v1209 = vunpack.c.l.b16 %v1177
    %v1210 = vunpack.c.l.b16 %v1178
    %v1211 = vunpack.c.l.b16 %v1179
    %v1212 = vunpack.c.l.b16 %v1180
    %v1213 = vunpack.c.l.b16 %v1181
    %v1214 = vunpack.c.l.b16 %v1182
    %v1215 = vunpack.c.l.b16 %v1183
    %v1216 = vunpack.c.l.b16 %v1184
    %v1217 = vunpack.c.l.b16 %v1185
    %v1218 = vunpack.c.l.b16 %v1186
    %v1219 = vunpack.c.l.b16 %v1187
    %v1220 = vunpack.c.l.b16 %v1188
    %v1221 = vunpack.c.l.b16 %v1189
    %v1222 = vunpack.c.l.b16 %v1190
    %v1223 = vunpack.c.l.b16 %v1191
    %v1224 = vunpack.c.l.b16 %v1192
    %v1225 = vpack.c.b16 %v1210, %v1209
    %v1226 = vpack.c.b16 %v1212, %v1211
    %v1227 = vpack.c.b16 %v1214, %v1213
    %v1228 = vpack.c.b16 %v1216, %v1215
    %v1229 = vpack.c.b16 %v1218, %v1217
    %v1230 = vpack.c.b16 %v1220, %v1219
    %v1231 = vpack.c.b16 %v1222, %v1221
    %v1232 = vpack.c.b16 %v1224, %v1223
    %1241 = vmatprep.subr.bf16.mxu0 0
    %1242 = vmatpush1.bf16.msra.mxu0 %v1225
    %1243 = vmatprep.subr.bf16.mxu0 0
    %1244 = vmatpush1.bf16.msra.mxu0 %v1226
    %1245 = vmatprep.subr.bf16.mxu0 0
    %1246 = vmatpush1.bf16.msra.mxu0 %v1227
    %1247 = vmatprep.subr.bf16.mxu0 0
    %1248 = vmatpush1.bf16.msra.mxu0 %v1228
    %1249 = vmatprep.subr.bf16.mxu0 0
    %1250 = vmatpush1.bf16.msra.mxu0 %v1229
    %1251 = vmatprep.subr.bf16.mxu0 0
    %1252 = vmatpush1.bf16.msra.mxu0 %v1230
    %1253 = vmatprep.subr.bf16.mxu0 0
    %1254 = vmatpush1.bf16.msra.mxu0 %v1231
    %1255 = vmatprep.subr.bf16.mxu0 0
    %1256 = vmatpush1.bf16.msra.mxu0 %v1232
    %1257 = vmatprep.subr.bf16.mxu0 0
    %1258 = vmatpush1.bf16.msra.mxu0 0
    %1259 = vmatprep.subr.bf16.mxu0 0
    %1260 = vmatpush1.bf16.msra.mxu0 0
    %1261 = vmatprep.subr.bf16.mxu0 0
    %1262 = vmatpush1.bf16.msra.mxu0 0
    %1263 = vmatprep.subr.bf16.mxu0 0
    %1264 = vmatpush1.bf16.msra.mxu0 0
    %1265 = vmatprep.subr.bf16.mxu0 0
    %1266 = vmatpush1.bf16.msra.mxu0 0
    %1267 = vmatprep.subr.bf16.mxu0 0
    %1268 = vmatpush1.bf16.msra.mxu0 0
    %1269 = vmatprep.subr.bf16.mxu0 0
    %1270 = vmatpush1.bf16.msra.mxu0 0
    %1271 = vmatprep.subr.bf16.mxu0 0
    %1272 = vmatpush1.bf16.msra.mxu0 0
    %1273 = vmatprep.mubr.bf16.mxu0 0
    %1274 = vmatmul.mubr.bf16.gmra.mrb[0].mxu0 %v1176
    %v1275 = vpop.f32.mrb[0].mxu0
    %v1276 = vadd.f32 0.0, %v1275
    %v1277 = vpop.f32.mrb[0].mxu0
    %v1278 = vpop.f32.mrb[0].mxu0
    %v1279 = vpop.f32.mrb[0].mxu0
    %1280 = vdwg.mxu0
    %v1281 = vadd.f32 %v1174, %v1276
    %v1282 = vxor.u32 %v1281, 2147483648
    %v1283 = vmul.f32 %v1282, 1.442695
    %v1284 = vpow.pop %v1283
    %v1285 = vadd.f32 %v1284, 1.0
    %v1286 = vrcp.pop %v1285
    %v1287 = vmul.f32 1.0, %v1286
    %v1288 = vtanh.pop %v1281
    %v1289 = vld [vmem:[#allocation5] sm:$0xff]
    %1291 = vrot.lane.b32.xlu0 %v1289, 32
    %v1292 = vpop.permute.xlu0 %1291
    %v1294 = vmul.f32 %v1287, %v1292
    %1296 = vrot.lane.b32.xlu0 %v1288, 32
    %v1297 = vpop.permute.xlu0 %1296
    %v1299 = vmul.f32 %v1287, %v1297
    %1301 = vrot.lane.b32.xlu0 %v1299, 32
    %v1302 = vpop.permute.xlu0 %1301
    %v1304 = vadd.f32 %v1294, %v1302
    %v1305 = vtanh.pop %v1304
    %1307 = vrot.lane.b32.xlu0 %v1305, 32
    %v1308 = vpop.permute.xlu0 %1307
    %v1310 = vmul.f32 %v1287, %v1308
    %1312 = vrot.lane.b32.xlu0 %v1304, 96
    %v1313 = vpop.permute.xlu0 %1312
    %1315 = vst.msk [vmem:[#allocation5] sm:$0xff] %vm426, %v1313
    %1317 = vrot.lane.b32.xlu0 %v1310, 64
    %v1318 = vpop.permute.xlu0 %1317
    %1320 = vst.msk [vmem:[#allocation4] sm:$0xff] %vm426, %v1318
    %1321 = vst.msk [vmem:[#allocation3 + $0x30] sm:$0xff] %vm426, %v1318
    %v1322 = vld [vmem:[#allocation2 + $0x38] sm:$0xff]
    %v1323 = vld [vmem:[#allocation4] sm:$0xff]
    %v1324 = vpack.c.bf16 %v1323, %v1323
    %v1325 = vld [vmem:[#allocation11] sm:$0xf]
    %v1326 = vld [vmem:[#allocation11 + $0x4] sm:$0xf]
    %v1327 = vld [vmem:[#allocation11 + $0x8] sm:$0xf]
    %v1328 = vld [vmem:[#allocation11 + $0xc] sm:$0xf]
    %v1329 = vld [vmem:[#allocation11 + $0x10] sm:$0xf]
    %v1330 = vld [vmem:[#allocation11 + $0x14] sm:$0xf]
    %v1331 = vld [vmem:[#allocation11 + $0x18] sm:$0xf]
    %v1332 = vld [vmem:[#allocation11 + $0x1c] sm:$0xf]
    %v1333 = vld [vmem:[#allocation11 + $0x20] sm:$0xf]
    %v1334 = vld [vmem:[#allocation11 + $0x24] sm:$0xf]
    %v1335 = vld [vmem:[#allocation11 + $0x28] sm:$0xf]
    %v1336 = vld [vmem:[#allocation11 + $0x2c] sm:$0xf]
    %v1337 = vld [vmem:[#allocation11 + $0x30] sm:$0xf]
    %v1338 = vld [vmem:[#allocation11 + $0x34] sm:$0xf]
    %v1339 = vld [vmem:[#allocation11 + $0x38] sm:$0xf]
    %v1340 = vld [vmem:[#allocation11 + $0x3c] sm:$0xf]
    %v1357 = vunpack.c.l.b16 %v1325
    %v1358 = vunpack.c.l.b16 %v1326
    %v1359 = vunpack.c.l.b16 %v1327
    %v1360 = vunpack.c.l.b16 %v1328
    %v1361 = vunpack.c.l.b16 %v1329
    %v1362 = vunpack.c.l.b16 %v1330
    %v1363 = vunpack.c.l.b16 %v1331
    %v1364 = vunpack.c.l.b16 %v1332
    %v1365 = vunpack.c.l.b16 %v1333
    %v1366 = vunpack.c.l.b16 %v1334
    %v1367 = vunpack.c.l.b16 %v1335
    %v1368 = vunpack.c.l.b16 %v1336
    %v1369 = vunpack.c.l.b16 %v1337
    %v1370 = vunpack.c.l.b16 %v1338
    %v1371 = vunpack.c.l.b16 %v1339
    %v1372 = vunpack.c.l.b16 %v1340
    %v1373 = vpack.c.b16 %v1358, %v1357
    %v1374 = vpack.c.b16 %v1360, %v1359
    %v1375 = vpack.c.b16 %v1362, %v1361
    %v1376 = vpack.c.b16 %v1364, %v1363
    %v1377 = vpack.c.b16 %v1366, %v1365
    %v1378 = vpack.c.b16 %v1368, %v1367
    %v1379 = vpack.c.b16 %v1370, %v1369
    %v1380 = vpack.c.b16 %v1372, %v1371
    %1389 = vmatprep.subr.bf16.mxu0 0
    %1390 = vmatpush1.bf16.msra.mxu0 %v1373
    %1391 = vmatprep.subr.bf16.mxu0 0
    %1392 = vmatpush1.bf16.msra.mxu0 %v1374
    %1393 = vmatprep.subr.bf16.mxu0 0
    %1394 = vmatpush1.bf16.msra.mxu0 %v1375
    %1395 = vmatprep.subr.bf16.mxu0 0
    %1396 = vmatpush1.bf16.msra.mxu0 %v1376
    %1397 = vmatprep.subr.bf16.mxu0 0
    %1398 = vmatpush1.bf16.msra.mxu0 %v1377
    %1399 = vmatprep.subr.bf16.mxu0 0
    %1400 = vmatpush1.bf16.msra.mxu0 %v1378
    %1401 = vmatprep.subr.bf16.mxu0 0
    %1402 = vmatpush1.bf16.msra.mxu0 %v1379
    %1403 = vmatprep.subr.bf16.mxu0 0
    %1404 = vmatpush1.bf16.msra.mxu0 %v1380
    %1405 = vmatprep.subr.bf16.mxu0 0
    %1406 = vmatpush1.bf16.msra.mxu0 0
    %1407 = vmatprep.subr.bf16.mxu0 0
    %1408 = vmatpush1.bf16.msra.mxu0 0
    %1409 = vmatprep.subr.bf16.mxu0 0
    %1410 = vmatpush1.bf16.msra.mxu0 0
    %1411 = vmatprep.subr.bf16.mxu0 0
    %1412 = vmatpush1.bf16.msra.mxu0 0
    %1413 = vmatprep.subr.bf16.mxu0 0
    %1414 = vmatpush1.bf16.msra.mxu0 0
    %1415 = vmatprep.subr.bf16.mxu0 0
    %1416 = vmatpush1.bf16.msra.mxu0 0
    %1417 = vmatprep.subr.bf16.mxu0 0
    %1418 = vmatpush1.bf16.msra.mxu0 0
    %1419 = vmatprep.subr.bf16.mxu0 0
    %1420 = vmatpush1.bf16.msra.mxu0 0
    %1421 = vmatprep.mubr.bf16.mxu0 0
    %1422 = vmatmul.mubr.bf16.gmra.mrb[0].mxu0 %v1324
    %v1423 = vpop.f32.mrb[0].mxu0
    %v1424 = vadd.f32 0.0, %v1423
    %v1425 = vpop.f32.mrb[0].mxu0
    %v1426 = vpop.f32.mrb[0].mxu0
    %v1427 = vpop.f32.mrb[0].mxu0
    %1428 = vdwg.mxu0
    %v1429 = vadd.f32 %v1322, %v1424
    %v1430 = vxor.u32 %v1429, 2147483648
    %v1431 = vmul.f32 %v1430, 1.442695
    %v1432 = vpow.pop %v1431
    %v1433 = vadd.f32 %v1432, 1.0
    %v1434 = vrcp.pop %v1433
    %v1435 = vmul.f32 1.0, %v1434
    %v1436 = vtanh.pop %v1429
    %v1437 = vld [vmem:[#allocation5] sm:$0xff]
    %1439 = vrot.lane.b32.xlu0 %v1437, 32
    %v1440 = vpop.permute.xlu0 %1439
    %v1442 = vmul.f32 %v1435, %v1440
    %1444 = vrot.lane.b32.xlu0 %v1436, 32
    %v1445 = vpop.permute.xlu0 %1444
    %v1447 = vmul.f32 %v1435, %v1445
    %1449 = vrot.lane.b32.xlu0 %v1447, 32
    %v1450 = vpop.permute.xlu0 %1449
    %v1452 = vadd.f32 %v1442, %v1450
    %v1453 = vtanh.pop %v1452
    %1455 = vrot.lane.b32.xlu0 %v1453, 32
    %v1456 = vpop.permute.xlu0 %1455
    %v1458 = vmul.f32 %v1435, %v1456
    %1460 = vrot.lane.b32.xlu0 %v1452, 96
    %v1461 = vpop.permute.xlu0 %1460
    %1463 = vst.msk [vmem:[#allocation5] sm:$0xff] %vm426, %v1461
    %1465 = vrot.lane.b32.xlu0 %v1458, 64
    %v1466 = vpop.permute.xlu0 %1465
    %1468 = vst.msk [vmem:[#allocation4] sm:$0xff] %vm426, %v1466
    %1469 = vst.msk [vmem:[#allocation3 + $0x38] sm:$0xff] %vm426, %v1466
    %v1470 = vld [vmem:[#allocation4] sm:$0xff]
    %1471 = vst [vmem:[#allocation15] sm:$0xff] %v1470
    %v1472 = vld [vmem:[#allocation5] sm:$0xff]
    %1473 = vst [vmem:[#allocation16] sm:$0xff] %v1472
    %v1474 = vld [vmem:[#allocation3] sm:$0xff]
    %v1475 = vld [vmem:[#allocation3 + $0x8] sm:$0xff]
    %v1476 = vld [vmem:[#allocation3 + $0x10] sm:$0xff]
    %v1477 = vld [vmem:[#allocation3 + $0x18] sm:$0xff]
    %v1478 = vld [vmem:[#allocation3 + $0x20] sm:$0xff]
    %v1479 = vld [vmem:[#allocation3 + $0x28] sm:$0xff]
    %v1480 = vld [vmem:[#allocation3 + $0x30] sm:$0xff]
    %v1481 = vld [vmem:[#allocation3 + $0x38] sm:$0xff]
    %v1482 = vpack.c.bf16 %v1475, %v1474
    %v1483 = vpack.c.bf16 %v1477, %v1476
    %v1484 = vpack.c.bf16 %v1479, %v1478
    %v1485 = vpack.c.bf16 %v1481, %v1480
    %v1486 = vld [vmem:[#allocation12] sm:$0xf]
    %v1487 = vld [vmem:[#allocation12 + $0x4] sm:$0xf]
    %v1488 = vld [vmem:[#allocation12 + $0x8] sm:$0xf]
    %v1489 = vld [vmem:[#allocation12 + $0xc] sm:$0xf]
    %v1490 = vld [vmem:[#allocation12 + $0x10] sm:$0xf]
    %v1491 = vld [vmem:[#allocation12 + $0x14] sm:$0xf]
    %v1492 = vld [vmem:[#allocation12 + $0x18] sm:$0xf]
    %v1493 = vld [vmem:[#allocation12 + $0x1c] sm:$0xf]
    %v1494 = vld [vmem:[#allocation12 + $0x20] sm:$0xf]
    %v1495 = vld [vmem:[#allocation12 + $0x24] sm:$0xf]
    %v1496 = vld [vmem:[#allocation12 + $0x28] sm:$0xf]
    %v1497 = vld [vmem:[#allocation12 + $0x2c] sm:$0xf]
    %v1498 = vld [vmem:[#allocation12 + $0x30] sm:$0xf]
    %v1499 = vld [vmem:[#allocation12 + $0x34] sm:$0xf]
    %v1500 = vld [vmem:[#allocation12 + $0x38] sm:$0xf]
    %v1501 = vld [vmem:[#allocation12 + $0x3c] sm:$0xf]
    %v1502 = vld [vmem:[%s6] sm:$0x1]
    %v1504 = vlaneseq
    %v1505 = vshrl.u32 %v1504, 7
    %v1506 = vsub.s32 0, %v1505
    %v1507 = vrot.slane %v1502, %v1506
    %v1525 = vunpack.c.l.b16 %v1486
    %v1526 = vunpack.c.l.b16 %v1487
    %v1527 = vunpack.c.l.b16 %v1488
    %v1528 = vunpack.c.l.b16 %v1489
    %v1529 = vunpack.c.l.b16 %v1490
    %v1530 = vunpack.c.l.b16 %v1491
    %v1531 = vunpack.c.l.b16 %v1492
    %v1532 = vunpack.c.l.b16 %v1493
    %v1533 = vunpack.c.l.b16 %v1494
    %v1534 = vunpack.c.l.b16 %v1495
    %v1535 = vunpack.c.l.b16 %v1496
    %v1536 = vunpack.c.l.b16 %v1497
    %v1537 = vunpack.c.l.b16 %v1498
    %v1538 = vunpack.c.l.b16 %v1499
    %v1539 = vunpack.c.l.b16 %v1500
    %v1540 = vunpack.c.l.b16 %v1501
    %v1541 = vpack.c.b16 %v1526, %v1525
    %v1542 = vpack.c.b16 %v1528, %v1527
    %v1543 = vpack.c.b16 %v1530, %v1529
    %v1544 = vpack.c.b16 %v1532, %v1531
    %v1545 = vpack.c.b16 %v1534, %v1533
    %v1546 = vpack.c.b16 %v1536, %v1535
    %v1547 = vpack.c.b16 %v1538, %v1537
    %v1548 = vpack.c.b16 %v1540, %v1539
    %1557 = vmatprep.subr.bf16.mxu0 0
    %1558 = vmatpush1.bf16.msra.mxu0 %v1541
    %1559 = vmatprep.subr.bf16.mxu0 0
    %1560 = vmatpush1.bf16.msra.mxu0 %v1542
    %1561 = vmatprep.subr.bf16.mxu0 0
    %1562 = vmatpush1.bf16.msra.mxu0 %v1543
    %1563 = vmatprep.subr.bf16.mxu0 0
    %1564 = vmatpush1.bf16.msra.mxu0 %v1544
    %1565 = vmatprep.subr.bf16.mxu0 0
    %1566 = vmatpush1.bf16.msra.mxu0 %v1545
    %1567 = vmatprep.subr.bf16.mxu0 0
    %1568 = vmatpush1.bf16.msra.mxu0 %v1546
    %1569 = vmatprep.subr.bf16.mxu0 0
    %1570 = vmatpush1.bf16.msra.mxu0 %v1547
    %1571 = vmatprep.subr.bf16.mxu0 0
    %1572 = vmatpush1.bf16.msra.mxu0 %v1548
    %1573 = vmatprep.subr.bf16.mxu0 0
    %1574 = vmatpush1.bf16.msra.mxu0 0
    %1575 = vmatprep.subr.bf16.mxu0 0
    %1576 = vmatpush1.bf16.msra.mxu0 0
    %1577 = vmatprep.subr.bf16.mxu0 0
    %1578 = vmatpush1.bf16.msra.mxu0 0
    %1579 = vmatprep.subr.bf16.mxu0 0
    %1580 = vmatpush1.bf16.msra.mxu0 0
    %1581 = vmatprep.subr.bf16.mxu0 0
    %1582 = vmatpush1.bf16.msra.mxu0 0
    %1583 = vmatprep.subr.bf16.mxu0 0
    %1584 = vmatpush1.bf16.msra.mxu0 0
    %1585 = vmatprep.subr.bf16.mxu0 0
    %1586 = vmatpush1.bf16.msra.mxu0 0
    %1587 = vmatprep.subr.bf16.mxu0 0
    %1588 = vmatpush1.bf16.msra.mxu0 0
    %1589 = vmatprep.mubr.bf16.mxu0 0
    %1590 = vmatmul.mubr.bf16.gmra.mrb[0].mxu0 %v1482
    %v1591 = vpop.f32.mrb[0].mxu0
    %v1592 = vadd.f32 %v1507, %v1591
    %v1593 = vpop.f32.mrb[0].mxu0
    %v1594 = vpop.f32.mrb[0].mxu0
    %v1595 = vadd.f32 %v1507, %v1594
    %v1596 = vpop.f32.mrb[0].mxu0
    %1597 = vmatprep.mubr.bf16.mxu0 0
    %1598 = vmatmul.mubr.bf16.gmra.mrb[0].mxu0 %v1483
    %v1599 = vpop.f32.mrb[0].mxu0
    %v1600 = vadd.f32 %v1507, %v1599
    %v1601 = vpop.f32.mrb[0].mxu0
    %v1602 = vpop.f32.mrb[0].mxu0
    %v1603 = vadd.f32 %v1507, %v1602
    %v1604 = vpop.f32.mrb[0].mxu0
    %1605 = vmatprep.mubr.bf16.mxu0 0
    %1606 = vmatmul.mubr.bf16.gmra.mrb[0].mxu0 %v1484
    %v1607 = vpop.f32.mrb[0].mxu0
    %v1608 = vadd.f32 %v1507, %v1607
    %v1609 = vpop.f32.mrb[0].mxu0
    %v1610 = vpop.f32.mrb[0].mxu0
    %v1611 = vadd.f32 %v1507, %v1610
    %v1612 = vpop.f32.mrb[0].mxu0
    %1613 = vmatprep.mubr.bf16.mxu0 0
    %1614 = vmatmul.mubr.bf16.gmra.mrb[0].mxu0 %v1485
    %v1615 = vpop.f32.mrb[0].mxu0
    %v1616 = vadd.f32 %v1507, %v1615
    %v1617 = vpop.f32.mrb[0].mxu0
    %v1618 = vpop.f32.mrb[0].mxu0
    %v1619 = vadd.f32 %v1507, %v1618
    %v1620 = vpop.f32.mrb[0].mxu0
    %1621 = vdwg.mxu0
    %1622 = vst [vmem:[#allocation2] sm:$0xff] %v1592
    %1623 = vst [vmem:[#allocation2 + $0x8] sm:$0xff] %v1595
    %1624 = vst [vmem:[#allocation2 + $0x10] sm:$0xff] %v1600
    %1625 = vst [vmem:[#allocation2 + $0x18] sm:$0xff] %v1603
    %1626 = vst [vmem:[#allocation2 + $0x20] sm:$0xff] %v1608
    %1627 = vst [vmem:[#allocation2 + $0x28] sm:$0xff] %v1611
    %1628 = vst [vmem:[#allocation2 + $0x30] sm:$0xff] %v1616
    %1629 = vst [vmem:[#allocation2 + $0x38] sm:$0xff] %v1619
    %1630 = vst [vmem:[#allocation4] sm:$0xff] 0.0
    %1631 = vst [vmem:[#allocation5] sm:$0xff] 0.0
    %v1632 = vld [vmem:[#allocation2] sm:$0xff]
    %v1633 = vld [vmem:[#allocation4] sm:$0xff]
    %v1634 = vpack.c.bf16 %v1633, %v1633
    %v1635 = vld [vmem:[#allocation14] sm:$0xf]
    %v1636 = vld [vmem:[#allocation14 + $0x4] sm:$0xf]
    %v1637 = vld [vmem:[#allocation14 + $0x8] sm:$0xf]
    %v1638 = vld [vmem:[#allocation14 + $0xc] sm:$0xf]
    %v1639 = vld [vmem:[#allocation14 + $0x10] sm:$0xf]
    %v1640 = vld [vmem:[#allocation14 + $0x14] sm:$0xf]
    %v1641 = vld [vmem:[#allocation14 + $0x18] sm:$0xf]
    %v1642 = vld [vmem:[#allocation14 + $0x1c] sm:$0xf]
    %v1643 = vld [vmem:[#allocation14 + $0x20] sm:$0xf]
    %v1644 = vld [vmem:[#allocation14 + $0x24] sm:$0xf]
    %v1645 = vld [vmem:[#allocation14 + $0x28] sm:$0xf]
    %v1646 = vld [vmem:[#allocation14 + $0x2c] sm:$0xf]
    %v1647 = vld [vmem:[#allocation14 + $0x30] sm:$0xf]
    %v1648 = vld [vmem:[#allocation14 + $0x34] sm:$0xf]
    %v1649 = vld [vmem:[#allocation14 + $0x38] sm:$0xf]
    %v1650 = vld [vmem:[#allocation14 + $0x3c] sm:$0xf]
    %v1667 = vunpack.c.l.b16 %v1635
    %v1668 = vunpack.c.l.b16 %v1636
    %v1669 = vunpack.c.l.b16 %v1637
    %v1670 = vunpack.c.l.b16 %v1638
    %v1671 = vunpack.c.l.b16 %v1639
    %v1672 = vunpack.c.l.b16 %v1640
    %v1673 = vunpack.c.l.b16 %v1641
    %v1674 = vunpack.c.l.b16 %v1642
    %v1675 = vunpack.c.l.b16 %v1643
    %v1676 = vunpack.c.l.b16 %v1644
    %v1677 = vunpack.c.l.b16 %v1645
    %v1678 = vunpack.c.l.b16 %v1646
    %v1679 = vunpack.c.l.b16 %v1647
    %v1680 = vunpack.c.l.b16 %v1648
    %v1681 = vunpack.c.l.b16 %v1649
    %v1682 = vunpack.c.l.b16 %v1650
    %v1683 = vpack.c.b16 %v1668, %v1667
    %v1684 = vpack.c.b16 %v1670, %v1669
    %v1685 = vpack.c.b16 %v1672, %v1671
    %v1686 = vpack.c.b16 %v1674, %v1673
    %v1687 = vpack.c.b16 %v1676, %v1675
    %v1688 = vpack.c.b16 %v1678, %v1677
    %v1689 = vpack.c.b16 %v1680, %v1679
    %v1690 = vpack.c.b16 %v1682, %v1681
    %1699 = vmatprep.subr.bf16.mxu0 0
    %1700 = vmatpush1.bf16.msra.mxu0 %v1683
    %1701 = vmatprep.subr.bf16.mxu0 0
    %1702 = vmatpush1.bf16.msra.mxu0 %v1684
    %1703 = vmatprep.subr.bf16.mxu0 0
    %1704 = vmatpush1.bf16.msra.mxu0 %v1685
    %1705 = vmatprep.subr.bf16.mxu0 0
    %1706 = vmatpush1.bf16.msra.mxu0 %v1686
    %1707 = vmatprep.subr.bf16.mxu0 0
    %1708 = vmatpush1.bf16.msra.mxu0 %v1687
    %1709 = vmatprep.subr.bf16.mxu0 0
    %1710 = vmatpush1.bf16.msra.mxu0 %v1688
    %1711 = vmatprep.subr.bf16.mxu0 0
    %1712 = vmatpush1.bf16.msra.mxu0 %v1689
    %1713 = vmatprep.subr.bf16.mxu0 0
    %1714 = vmatpush1.bf16.msra.mxu0 %v1690
    %1715 = vmatprep.subr.bf16.mxu0 0
    %1716 = vmatpush1.bf16.msra.mxu0 0
    %1717 = vmatprep.subr.bf16.mxu0 0
    %1718 = vmatpush1.bf16.msra.mxu0 0
    %1719 = vmatprep.subr.bf16.mxu0 0
    %1720 = vmatpush1.bf16.msra.mxu0 0
    %1721 = vmatprep.subr.bf16.mxu0 0
    %1722 = vmatpush1.bf16.msra.mxu0 0
    %1723 = vmatprep.subr.bf16.mxu0 0
    %1724 = vmatpush1.bf16.msra.mxu0 0
    %1725 = vmatprep.subr.bf16.mxu0 0
    %1726 = vmatpush1.bf16.msra.mxu0 0
    %1727 = vmatprep.subr.bf16.mxu0 0
    %1728 = vmatpush1.bf16.msra.mxu0 0
    %1729 = vmatprep.subr.bf16.mxu0 0
    %1730 = vmatpush1.bf16.msra.mxu0 0
    %1731 = vmatprep.mubr.bf16.mxu0 0
    %1732 = vmatmul.mubr.bf16.gmra.mrb[0].mxu0 %v1634
    %v1733 = vpop.f32.mrb[0].mxu0
    %v1734 = vadd.f32 0.0, %v1733
    %v1735 = vpop.f32.mrb[0].mxu0
    %v1736 = vpop.f32.mrb[0].mxu0
    %v1737 = vpop.f32.mrb[0].mxu0
    %1738 = vdwg.mxu0
    %v1739 = vadd.f32 %v1632, %v1734
    %v1740 = vxor.u32 %v1739, 2147483648
    %v1741 = vmul.f32 %v1740, 1.442695
    %v1742 = vpow.pop %v1741
    %v1743 = vadd.f32 %v1742, 1.0
    %v1744 = vrcp.pop %v1743
    %v1745 = vmul.f32 1.0, %v1744
    %v1746 = vtanh.pop %v1739
    %v1747 = vld [vmem:[#allocation5] sm:$0xff]
    %1749 = vrot.lane.b32.xlu0 %v1747, 32
    %v1750 = vpop.permute.xlu0 %1749
    %v1752 = vmul.f32 %v1745, %v1750
    %1754 = vrot.lane.b32.xlu0 %v1746, 32
    %v1755 = vpop.permute.xlu0 %1754
    %v1757 = vmul.f32 %v1745, %v1755
    %1759 = vrot.lane.b32.xlu0 %v1757, 32
    %v1760 = vpop.permute.xlu0 %1759
    %v1762 = vadd.f32 %v1752, %v1760
    %v1763 = vtanh.pop %v1762
    %1765 = vrot.lane.b32.xlu0 %v1763, 32
    %v1766 = vpop.permute.xlu0 %1765
    %v1768 = vmul.f32 %v1745, %v1766
    %1770 = vrot.lane.b32.xlu0 %v1762, 96
    %v1771 = vpop.permute.xlu0 %1770
    %1773 = vst.msk [vmem:[#allocation5] sm:$0xff] %vm426, %v1771
    %1775 = vrot.lane.b32.xlu0 %v1768, 64
    %v1776 = vpop.permute.xlu0 %1775
    %1778 = vst.msk [vmem:[#allocation4] sm:$0xff] %vm426, %v1776
    %v1779 = vld [vmem:[#allocation2 + $0x8] sm:$0xff]
    %v1780 = vld [vmem:[#allocation4] sm:$0xff]
    %v1781 = vpack.c.bf16 %v1780, %v1780
    %v1782 = vld [vmem:[#allocation14] sm:$0xf]
    %v1783 = vld [vmem:[#allocation14 + $0x4] sm:$0xf]
    %v1784 = vld [vmem:[#allocation14 + $0x8] sm:$0xf]
    %v1785 = vld [vmem:[#allocation14 + $0xc] sm:$0xf]
    %v1786 = vld [vmem:[#allocation14 + $0x10] sm:$0xf]
    %v1787 = vld [vmem:[#allocation14 + $0x14] sm:$0xf]
    %v1788 = vld [vmem:[#allocation14 + $0x18] sm:$0xf]
    %v1789 = vld [vmem:[#allocation14 + $0x1c] sm:$0xf]
    %v1790 = vld [vmem:[#allocation14 + $0x20] sm:$0xf]
    %v1791 = vld [vmem:[#allocation14 + $0x24] sm:$0xf]
    %v1792 = vld [vmem:[#allocation14 + $0x28] sm:$0xf]
    %v1793 = vld [vmem:[#allocation14 + $0x2c] sm:$0xf]
    %v1794 = vld [vmem:[#allocation14 + $0x30] sm:$0xf]
    %v1795 = vld [vmem:[#allocation14 + $0x34] sm:$0xf]
    %v1796 = vld [vmem:[#allocation14 + $0x38] sm:$0xf]
    %v1797 = vld [vmem:[#allocation14 + $0x3c] sm:$0xf]
    %v1814 = vunpack.c.l.b16 %v1782
    %v1815 = vunpack.c.l.b16 %v1783
    %v1816 = vunpack.c.l.b16 %v1784
    %v1817 = vunpack.c.l.b16 %v1785
    %v1818 = vunpack.c.l.b16 %v1786
    %v1819 = vunpack.c.l.b16 %v1787
    %v1820 = vunpack.c.l.b16 %v1788
    %v1821 = vunpack.c.l.b16 %v1789
    %v1822 = vunpack.c.l.b16 %v1790
    %v1823 = vunpack.c.l.b16 %v1791
    %v1824 = vunpack.c.l.b16 %v1792
    %v1825 = vunpack.c.l.b16 %v1793
    %v1826 = vunpack.c.l.b16 %v1794
    %v1827 = vunpack.c.l.b16 %v1795
    %v1828 = vunpack.c.l.b16 %v1796
    %v1829 = vunpack.c.l.b16 %v1797
    %v1830 = vpack.c.b16 %v1815, %v1814
    %v1831 = vpack.c.b16 %v1817, %v1816
    %v1832 = vpack.c.b16 %v1819, %v1818
    %v1833 = vpack.c.b16 %v1821, %v1820
    %v1834 = vpack.c.b16 %v1823, %v1822
    %v1835 = vpack.c.b16 %v1825, %v1824
    %v1836 = vpack.c.b16 %v1827, %v1826
    %v1837 = vpack.c.b16 %v1829, %v1828
    %1846 = vmatprep.subr.bf16.mxu0 0
    %1847 = vmatpush1.bf16.msra.mxu0 %v1830
    %1848 = vmatprep.subr.bf16.mxu0 0
    %1849 = vmatpush1.bf16.msra.mxu0 %v1831
    %1850 = vmatprep.subr.bf16.mxu0 0
    %1851 = vmatpush1.bf16.msra.mxu0 %v1832
    %1852 = vmatprep.subr.bf16.mxu0 0
    %1853 = vmatpush1.bf16.msra.mxu0 %v1833
    %1854 = vmatprep.subr.bf16.mxu0 0
    %1855 = vmatpush1.bf16.msra.mxu0 %v1834
    %1856 = vmatprep.subr.bf16.mxu0 0
    %1857 = vmatpush1.bf16.msra.mxu0 %v1835
    %1858 = vmatprep.subr.bf16.mxu0 0
    %1859 = vmatpush1.bf16.msra.mxu0 %v1836
    %1860 = vmatprep.subr.bf16.mxu0 0
    %1861 = vmatpush1.bf16.msra.mxu0 %v1837
    %1862 = vmatprep.subr.bf16.mxu0 0
    %1863 = vmatpush1.bf16.msra.mxu0 0
    %1864 = vmatprep.subr.bf16.mxu0 0
    %1865 = vmatpush1.bf16.msra.mxu0 0
    %1866 = vmatprep.subr.bf16.mxu0 0
    %1867 = vmatpush1.bf16.msra.mxu0 0
    %1868 = vmatprep.subr.bf16.mxu0 0
    %1869 = vmatpush1.bf16.msra.mxu0 0
    %1870 = vmatprep.subr.bf16.mxu0 0
    %1871 = vmatpush1.bf16.msra.mxu0 0
    %1872 = vmatprep.subr.bf16.mxu0 0
    %1873 = vmatpush1.bf16.msra.mxu0 0
    %1874 = vmatprep.subr.bf16.mxu0 0
    %1875 = vmatpush1.bf16.msra.mxu0 0
    %1876 = vmatprep.subr.bf16.mxu0 0
    %1877 = vmatpush1.bf16.msra.mxu0 0
    %1878 = vmatprep.mubr.bf16.mxu0 0
    %1879 = vmatmul.mubr.bf16.gmra.mrb[0].mxu0 %v1781
    %v1880 = vpop.f32.mrb[0].mxu0
    %v1881 = vadd.f32 0.0, %v1880
    %v1882 = vpop.f32.mrb[0].mxu0
    %v1883 = vpop.f32.mrb[0].mxu0
    %v1884 = vpop.f32.mrb[0].mxu0
    %1885 = vdwg.mxu0
    %v1886 = vadd.f32 %v1779, %v1881
    %v1887 = vxor.u32 %v1886, 2147483648
    %v1888 = vmul.f32 %v1887, 1.442695
    %v1889 = vpow.pop %v1888
    %v1890 = vadd.f32 %v1889, 1.0
    %v1891 = vrcp.pop %v1890
    %v1892 = vmul.f32 1.0, %v1891
    %v1893 = vtanh.pop %v1886
    %v1894 = vld [vmem:[#allocation5] sm:$0xff]
    %1896 = vrot.lane.b32.xlu0 %v1894, 32
    %v1897 = vpop.permute.xlu0 %1896
    %v1899 = vmul.f32 %v1892, %v1897
    %1901 = vrot.lane.b32.xlu0 %v1893, 32
    %v1902 = vpop.permute.xlu0 %1901
    %v1904 = vmul.f32 %v1892, %v1902
    %1906 = vrot.lane.b32.xlu0 %v1904, 32
    %v1907 = vpop.permute.xlu0 %1906
    %v1909 = vadd.f32 %v1899, %v1907
    %v1910 = vtanh.pop %v1909
    %1912 = vrot.lane.b32.xlu0 %v1910, 32
    %v1913 = vpop.permute.xlu0 %1912
    %v1915 = vmul.f32 %v1892, %v1913
    %1917 = vrot.lane.b32.xlu0 %v1909, 96
    %v1918 = vpop.permute.xlu0 %1917
    %1920 = vst.msk [vmem:[#allocation5] sm:$0xff] %vm426, %v1918
    %1922 = vrot.lane.b32.xlu0 %v1915, 64
    %v1923 = vpop.permute.xlu0 %1922
    %1925 = vst.msk [vmem:[#allocation4] sm:$0xff] %vm426, %v1923
    %v1926 = vld [vmem:[#allocation2 + $0x10] sm:$0xff]
    %v1927 = vld [vmem:[#allocation4] sm:$0xff]
    %v1928 = vpack.c.bf16 %v1927, %v1927
    %v1929 = vld [vmem:[#allocation14] sm:$0xf]
    %v1930 = vld [vmem:[#allocation14 + $0x4] sm:$0xf]
    %v1931 = vld [vmem:[#allocation14 + $0x8] sm:$0xf]
    %v1932 = vld [vmem:[#allocation14 + $0xc] sm:$0xf]
    %v1933 = vld [vmem:[#allocation14 + $0x10] sm:$0xf]
    %v1934 = vld [vmem:[#allocation14 + $0x14] sm:$0xf]
    %v1935 = vld [vmem:[#allocation14 + $0x18] sm:$0xf]
    %v1936 = vld [vmem:[#allocation14 + $0x1c] sm:$0xf]
    %v1937 = vld [vmem:[#allocation14 + $0x20] sm:$0xf]
    %v1938 = vld [vmem:[#allocation14 + $0x24] sm:$0xf]
    %v1939 = vld [vmem:[#allocation14 + $0x28] sm:$0xf]
    %v1940 = vld [vmem:[#allocation14 + $0x2c] sm:$0xf]
    %v1941 = vld [vmem:[#allocation14 + $0x30] sm:$0xf]
    %v1942 = vld [vmem:[#allocation14 + $0x34] sm:$0xf]
    %v1943 = vld [vmem:[#allocation14 + $0x38] sm:$0xf]
    %v1944 = vld [vmem:[#allocation14 + $0x3c] sm:$0xf]
    %v1961 = vunpack.c.l.b16 %v1929
    %v1962 = vunpack.c.l.b16 %v1930
    %v1963 = vunpack.c.l.b16 %v1931
    %v1964 = vunpack.c.l.b16 %v1932
    %v1965 = vunpack.c.l.b16 %v1933
    %v1966 = vunpack.c.l.b16 %v1934
    %v1967 = vunpack.c.l.b16 %v1935
    %v1968 = vunpack.c.l.b16 %v1936
    %v1969 = vunpack.c.l.b16 %v1937
    %v1970 = vunpack.c.l.b16 %v1938
    %v1971 = vunpack.c.l.b16 %v1939
    %v1972 = vunpack.c.l.b16 %v1940
    %v1973 = vunpack.c.l.b16 %v1941
    %v1974 = vunpack.c.l.b16 %v1942
    %v1975 = vunpack.c.l.b16 %v1943
    %v1976 = vunpack.c.l.b16 %v1944
    %v1977 = vpack.c.b16 %v1962, %v1961
    %v1978 = vpack.c.b16 %v1964, %v1963
    %v1979 = vpack.c.b16 %v1966, %v1965
    %v1980 = vpack.c.b16 %v1968, %v1967
    %v1981 = vpack.c.b16 %v1970, %v1969
    %v1982 = vpack.c.b16 %v1972, %v1971
    %v1983 = vpack.c.b16 %v1974, %v1973
    %v1984 = vpack.c.b16 %v1976, %v1975
    %1993 = vmatprep.subr.bf16.mxu0 0
    %1994 = vmatpush1.bf16.msra.mxu0 %v1977
    %1995 = vmatprep.subr.bf16.mxu0 0
    %1996 = vmatpush1.bf16.msra.mxu0 %v1978
    %1997 = vmatprep.subr.bf16.mxu0 0
    %1998 = vmatpush1.bf16.msra.mxu0 %v1979
    %1999 = vmatprep.subr.bf16.mxu0 0
    %2000 = vmatpush1.bf16.msra.mxu0 %v1980
    %2001 = vmatprep.subr.bf16.mxu0 0
    %2002 = vmatpush1.bf16.msra.mxu0 %v1981
    %2003 = vmatprep.subr.bf16.mxu0 0
    %2004 = vmatpush1.bf16.msra.mxu0 %v1982
    %2005 = vmatprep.subr.bf16.mxu0 0
    %2006 = vmatpush1.bf16.msra.mxu0 %v1983
    %2007 = vmatprep.subr.bf16.mxu0 0
    %2008 = vmatpush1.bf16.msra.mxu0 %v1984
    %2009 = vmatprep.subr.bf16.mxu0 0
    %2010 = vmatpush1.bf16.msra.mxu0 0
    %2011 = vmatprep.subr.bf16.mxu0 0
    %2012 = vmatpush1.bf16.msra.mxu0 0
    %2013 = vmatprep.subr.bf16.mxu0 0
    %2014 = vmatpush1.bf16.msra.mxu0 0
    %2015 = vmatprep.subr.bf16.mxu0 0
    %2016 = vmatpush1.bf16.msra.mxu0 0
    %2017 = vmatprep.subr.bf16.mxu0 0
    %2018 = vmatpush1.bf16.msra.mxu0 0
    %2019 = vmatprep.subr.bf16.mxu0 0
    %2020 = vmatpush1.bf16.msra.mxu0 0
    %2021 = vmatprep.subr.bf16.mxu0 0
    %2022 = vmatpush1.bf16.msra.mxu0 0
    %2023 = vmatprep.subr.bf16.mxu0 0
    %2024 = vmatpush1.bf16.msra.mxu0 0
    %2025 = vmatprep.mubr.bf16.mxu0 0
    %2026 = vmatmul.mubr.bf16.gmra.mrb[0].mxu0 %v1928
    %v2027 = vpop.f32.mrb[0].mxu0
    %v2028 = vadd.f32 0.0, %v2027
    %v2029 = vpop.f32.mrb[0].mxu0
    %v2030 = vpop.f32.mrb[0].mxu0
    %v2031 = vpop.f32.mrb[0].mxu0
    %2032 = vdwg.mxu0
    %v2033 = vadd.f32 %v1926, %v2028
    %v2034 = vxor.u32 %v2033, 2147483648
    %v2035 = vmul.f32 %v2034, 1.442695
    %v2036 = vpow.pop %v2035
    %v2037 = vadd.f32 %v2036, 1.0
    %v2038 = vrcp.pop %v2037
    %v2039 = vmul.f32 1.0, %v2038
    %v2040 = vtanh.pop %v2033
    %v2041 = vld [vmem:[#allocation5] sm:$0xff]
    %2043 = vrot.lane.b32.xlu0 %v2041, 32
    %v2044 = vpop.permute.xlu0 %2043
    %v2046 = vmul.f32 %v2039, %v2044
    %2048 = vrot.lane.b32.xlu0 %v2040, 32
    %v2049 = vpop.permute.xlu0 %2048
    %v2051 = vmul.f32 %v2039, %v2049
    %2053 = vrot.lane.b32.xlu0 %v2051, 32
    %v2054 = vpop.permute.xlu0 %2053
    %v2056 = vadd.f32 %v2046, %v2054
    %v2057 = vtanh.pop %v2056
    %2059 = vrot.lane.b32.xlu0 %v2057, 32
    %v2060 = vpop.permute.xlu0 %2059
    %v2062 = vmul.f32 %v2039, %v2060
    %2064 = vrot.lane.b32.xlu0 %v2056, 96
    %v2065 = vpop.permute.xlu0 %2064
    %2067 = vst.msk [vmem:[#allocation5] sm:$0xff] %vm426, %v2065
    %2069 = vrot.lane.b32.xlu0 %v2062, 64
    %v2070 = vpop.permute.xlu0 %2069
    %2072 = vst.msk [vmem:[#allocation4] sm:$0xff] %vm426, %v2070
    %v2073 = vld [vmem:[#allocation2 + $0x18] sm:$0xff]
    %v2074 = vld [vmem:[#allocation4] sm:$0xff]
    %v2075 = vpack.c.bf16 %v2074, %v2074
    %v2076 = vld [vmem:[#allocation14] sm:$0xf]
    %v2077 = vld [vmem:[#allocation14 + $0x4] sm:$0xf]
    %v2078 = vld [vmem:[#allocation14 + $0x8] sm:$0xf]
    %v2079 = vld [vmem:[#allocation14 + $0xc] sm:$0xf]
    %v2080 = vld [vmem:[#allocation14 + $0x10] sm:$0xf]
    %v2081 = vld [vmem:[#allocation14 + $0x14] sm:$0xf]
    %v2082 = vld [vmem:[#allocation14 + $0x18] sm:$0xf]
    %v2083 = vld [vmem:[#allocation14 + $0x1c] sm:$0xf]
    %v2084 = vld [vmem:[#allocation14 + $0x20] sm:$0xf]
    %v2085 = vld [vmem:[#allocation14 + $0x24] sm:$0xf]
    %v2086 = vld [vmem:[#allocation14 + $0x28] sm:$0xf]
    %v2087 = vld [vmem:[#allocation14 + $0x2c] sm:$0xf]
    %v2088 = vld [vmem:[#allocation14 + $0x30] sm:$0xf]
    %v2089 = vld [vmem:[#allocation14 + $0x34] sm:$0xf]
    %v2090 = vld [vmem:[#allocation14 + $0x38] sm:$0xf]
    %v2091 = vld [vmem:[#allocation14 + $0x3c] sm:$0xf]
    %v2108 = vunpack.c.l.b16 %v2076
    %v2109 = vunpack.c.l.b16 %v2077
    %v2110 = vunpack.c.l.b16 %v2078
    %v2111 = vunpack.c.l.b16 %v2079
    %v2112 = vunpack.c.l.b16 %v2080
    %v2113 = vunpack.c.l.b16 %v2081
    %v2114 = vunpack.c.l.b16 %v2082
    %v2115 = vunpack.c.l.b16 %v2083
    %v2116 = vunpack.c.l.b16 %v2084
    %v2117 = vunpack.c.l.b16 %v2085
    %v2118 = vunpack.c.l.b16 %v2086
    %v2119 = vunpack.c.l.b16 %v2087
    %v2120 = vunpack.c.l.b16 %v2088
    %v2121 = vunpack.c.l.b16 %v2089
    %v2122 = vunpack.c.l.b16 %v2090
    %v2123 = vunpack.c.l.b16 %v2091
    %v2124 = vpack.c.b16 %v2109, %v2108
    %v2125 = vpack.c.b16 %v2111, %v2110
    %v2126 = vpack.c.b16 %v2113, %v2112
    %v2127 = vpack.c.b16 %v2115, %v2114
    %v2128 = vpack.c.b16 %v2117, %v2116
    %v2129 = vpack.c.b16 %v2119, %v2118
    %v2130 = vpack.c.b16 %v2121, %v2120
    %v2131 = vpack.c.b16 %v2123, %v2122
    %2140 = vmatprep.subr.bf16.mxu0 0
    %2141 = vmatpush1.bf16.msra.mxu0 %v2124
    %2142 = vmatprep.subr.bf16.mxu0 0
    %2143 = vmatpush1.bf16.msra.mxu0 %v2125
    %2144 = vmatprep.subr.bf16.mxu0 0
    %2145 = vmatpush1.bf16.msra.mxu0 %v2126
    %2146 = vmatprep.subr.bf16.mxu0 0
    %2147 = vmatpush1.bf16.msra.mxu0 %v2127
    %2148 = vmatprep.subr.bf16.mxu0 0
    %2149 = vmatpush1.bf16.msra.mxu0 %v2128
    %2150 = vmatprep.subr.bf16.mxu0 0
    %2151 = vmatpush1.bf16.msra.mxu0 %v2129
    %2152 = vmatprep.subr.bf16.mxu0 0
    %2153 = vmatpush1.bf16.msra.mxu0 %v2130
    %2154 = vmatprep.subr.bf16.mxu0 0
    %2155 = vmatpush1.bf16.msra.mxu0 %v2131
    %2156 = vmatprep.subr.bf16.mxu0 0
    %2157 = vmatpush1.bf16.msra.mxu0 0
    %2158 = vmatprep.subr.bf16.mxu0 0
    %2159 = vmatpush1.bf16.msra.mxu0 0
    %2160 = vmatprep.subr.bf16.mxu0 0
    %2161 = vmatpush1.bf16.msra.mxu0 0
    %2162 = vmatprep.subr.bf16.mxu0 0
    %2163 = vmatpush1.bf16.msra.mxu0 0
    %2164 = vmatprep.subr.bf16.mxu0 0
    %2165 = vmatpush1.bf16.msra.mxu0 0
    %2166 = vmatprep.subr.bf16.mxu0 0
    %2167 = vmatpush1.bf16.msra.mxu0 0
    %2168 = vmatprep.subr.bf16.mxu0 0
    %2169 = vmatpush1.bf16.msra.mxu0 0
    %2170 = vmatprep.subr.bf16.mxu0 0
    %2171 = vmatpush1.bf16.msra.mxu0 0
    %2172 = vmatprep.mubr.bf16.mxu0 0
    %2173 = vmatmul.mubr.bf16.gmra.mrb[0].mxu0 %v2075
    %v2174 = vpop.f32.mrb[0].mxu0
    %v2175 = vadd.f32 0.0, %v2174
    %v2176 = vpop.f32.mrb[0].mxu0
    %v2177 = vpop.f32.mrb[0].mxu0
    %v2178 = vpop.f32.mrb[0].mxu0
    %2179 = vdwg.mxu0
    %v2180 = vadd.f32 %v2073, %v2175
    %v2181 = vxor.u32 %v2180, 2147483648
    %v2182 = vmul.f32 %v2181, 1.442695
    %v2183 = vpow.pop %v2182
    %v2184 = vadd.f32 %v2183, 1.0
    %v2185 = vrcp.pop %v2184
    %v2186 = vmul.f32 1.0, %v2185
    %v2187 = vtanh.pop %v2180
    %v2188 = vld [vmem:[#allocation5] sm:$0xff]
    %2190 = vrot.lane.b32.xlu0 %v2188, 32
    %v2191 = vpop.permute.xlu0 %2190
    %v2193 = vmul.f32 %v2186, %v2191
    %2195 = vrot.lane.b32.xlu0 %v2187, 32
    %v2196 = vpop.permute.xlu0 %2195
    %v2198 = vmul.f32 %v2186, %v2196
    %2200 = vrot.lane.b32.xlu0 %v2198, 32
    %v2201 = vpop.permute.xlu0 %2200
    %v2203 = vadd.f32 %v2193, %v2201
    %v2204 = vtanh.pop %v2203
    %2206 = vrot.lane.b32.xlu0 %v2204, 32
    %v2207 = vpop.permute.xlu0 %2206
    %v2209 = vmul.f32 %v2186, %v2207
    %2211 = vrot.lane.b32.xlu0 %v2203, 96
    %v2212 = vpop.permute.xlu0 %2211
    %2214 = vst.msk [vmem:[#allocation5] sm:$0xff] %vm426, %v2212
    %2216 = vrot.lane.b32.xlu0 %v2209, 64
    %v2217 = vpop.permute.xlu0 %2216
    %2219 = vst.msk [vmem:[#allocation4] sm:$0xff] %vm426, %v2217
    %v2220 = vld [vmem:[#allocation2 + $0x20] sm:$0xff]
    %v2221 = vld [vmem:[#allocation4] sm:$0xff]
    %v2222 = vpack.c.bf16 %v2221, %v2221
    %v2223 = vld [vmem:[#allocation14] sm:$0xf]
    %v2224 = vld [vmem:[#allocation14 + $0x4] sm:$0xf]
    %v2225 = vld [vmem:[#allocation14 + $0x8] sm:$0xf]
    %v2226 = vld [vmem:[#allocation14 + $0xc] sm:$0xf]
    %v2227 = vld [vmem:[#allocation14 + $0x10] sm:$0xf]
    %v2228 = vld [vmem:[#allocation14 + $0x14] sm:$0xf]
    %v2229 = vld [vmem:[#allocation14 + $0x18] sm:$0xf]
    %v2230 = vld [vmem:[#allocation14 + $0x1c] sm:$0xf]
    %v2231 = vld [vmem:[#allocation14 + $0x20] sm:$0xf]
    %v2232 = vld [vmem:[#allocation14 + $0x24] sm:$0xf]
    %v2233 = vld [vmem:[#allocation14 + $0x28] sm:$0xf]
    %v2234 = vld [vmem:[#allocation14 + $0x2c] sm:$0xf]
    %v2235 = vld [vmem:[#allocation14 + $0x30] sm:$0xf]
    %v2236 = vld [vmem:[#allocation14 + $0x34] sm:$0xf]
    %v2237 = vld [vmem:[#allocation14 + $0x38] sm:$0xf]
    %v2238 = vld [vmem:[#allocation14 + $0x3c] sm:$0xf]
    %v2255 = vunpack.c.l.b16 %v2223
    %v2256 = vunpack.c.l.b16 %v2224
    %v2257 = vunpack.c.l.b16 %v2225
    %v2258 = vunpack.c.l.b16 %v2226
    %v2259 = vunpack.c.l.b16 %v2227
    %v2260 = vunpack.c.l.b16 %v2228
    %v2261 = vunpack.c.l.b16 %v2229
    %v2262 = vunpack.c.l.b16 %v2230
    %v2263 = vunpack.c.l.b16 %v2231
    %v2264 = vunpack.c.l.b16 %v2232
    %v2265 = vunpack.c.l.b16 %v2233
    %v2266 = vunpack.c.l.b16 %v2234
    %v2267 = vunpack.c.l.b16 %v2235
    %v2268 = vunpack.c.l.b16 %v2236
    %v2269 = vunpack.c.l.b16 %v2237
    %v2270 = vunpack.c.l.b16 %v2238
    %v2271 = vpack.c.b16 %v2256, %v2255
    %v2272 = vpack.c.b16 %v2258, %v2257
    %v2273 = vpack.c.b16 %v2260, %v2259
    %v2274 = vpack.c.b16 %v2262, %v2261
    %v2275 = vpack.c.b16 %v2264, %v2263
    %v2276 = vpack.c.b16 %v2266, %v2265
    %v2277 = vpack.c.b16 %v2268, %v2267
    %v2278 = vpack.c.b16 %v2270, %v2269
    %2287 = vmatprep.subr.bf16.mxu0 0
    %2288 = vmatpush1.bf16.msra.mxu0 %v2271
    %2289 = vmatprep.subr.bf16.mxu0 0
    %2290 = vmatpush1.bf16.msra.mxu0 %v2272
    %2291 = vmatprep.subr.bf16.mxu0 0
    %2292 = vmatpush1.bf16.msra.mxu0 %v2273
    %2293 = vmatprep.subr.bf16.mxu0 0
    %2294 = vmatpush1.bf16.msra.mxu0 %v2274
    %2295 = vmatprep.subr.bf16.mxu0 0
    %2296 = vmatpush1.bf16.msra.mxu0 %v2275
    %2297 = vmatprep.subr.bf16.mxu0 0
    %2298 = vmatpush1.bf16.msra.mxu0 %v2276
    %2299 = vmatprep.subr.bf16.mxu0 0
    %2300 = vmatpush1.bf16.msra.mxu0 %v2277
    %2301 = vmatprep.subr.bf16.mxu0 0
    %2302 = vmatpush1.bf16.msra.mxu0 %v2278
    %2303 = vmatprep.subr.bf16.mxu0 0
    %2304 = vmatpush1.bf16.msra.mxu0 0
    %2305 = vmatprep.subr.bf16.mxu0 0
    %2306 = vmatpush1.bf16.msra.mxu0 0
    %2307 = vmatprep.subr.bf16.mxu0 0
    %2308 = vmatpush1.bf16.msra.mxu0 0
    %2309 = vmatprep.subr.bf16.mxu0 0
    %2310 = vmatpush1.bf16.msra.mxu0 0
    %2311 = vmatprep.subr.bf16.mxu0 0
    %2312 = vmatpush1.bf16.msra.mxu0 0
    %2313 = vmatprep.subr.bf16.mxu0 0
    %2314 = vmatpush1.bf16.msra.mxu0 0
    %2315 = vmatprep.subr.bf16.mxu0 0
    %2316 = vmatpush1.bf16.msra.mxu0 0
    %2317 = vmatprep.subr.bf16.mxu0 0
    %2318 = vmatpush1.bf16.msra.mxu0 0
    %2319 = vmatprep.mubr.bf16.mxu0 0
    %2320 = vmatmul.mubr.bf16.gmra.mrb[0].mxu0 %v2222
    %v2321 = vpop.f32.mrb[0].mxu0
    %v2322 = vadd.f32 0.0, %v2321
    %v2323 = vpop.f32.mrb[0].mxu0
    %v2324 = vpop.f32.mrb[0].mxu0
    %v2325 = vpop.f32.mrb[0].mxu0
    %2326 = vdwg.mxu0
    %v2327 = vadd.f32 %v2220, %v2322
    %v2328 = vxor.u32 %v2327, 2147483648
    %v2329 = vmul.f32 %v2328, 1.442695
    %v2330 = vpow.pop %v2329
    %v2331 = vadd.f32 %v2330, 1.0
    %v2332 = vrcp.pop %v2331
    %v2333 = vmul.f32 1.0, %v2332
    %v2334 = vtanh.pop %v2327
    %v2335 = vld [vmem:[#allocation5] sm:$0xff]
    %2337 = vrot.lane.b32.xlu0 %v2335, 32
    %v2338 = vpop.permute.xlu0 %2337
    %v2340 = vmul.f32 %v2333, %v2338
    %2342 = vrot.lane.b32.xlu0 %v2334, 32
    %v2343 = vpop.permute.xlu0 %2342
    %v2345 = vmul.f32 %v2333, %v2343
    %2347 = vrot.lane.b32.xlu0 %v2345, 32
    %v2348 = vpop.permute.xlu0 %2347
    %v2350 = vadd.f32 %v2340, %v2348
    %v2351 = vtanh.pop %v2350
    %2353 = vrot.lane.b32.xlu0 %v2351, 32
    %v2354 = vpop.permute.xlu0 %2353
    %v2356 = vmul.f32 %v2333, %v2354
    %2358 = vrot.lane.b32.xlu0 %v2350, 96
    %v2359 = vpop.permute.xlu0 %2358
    %2361 = vst.msk [vmem:[#allocation5] sm:$0xff] %vm426, %v2359
    %2363 = vrot.lane.b32.xlu0 %v2356, 64
    %v2364 = vpop.permute.xlu0 %2363
    %2366 = vst.msk [vmem:[#allocation4] sm:$0xff] %vm426, %v2364
    %v2367 = vld [vmem:[#allocation2 + $0x28] sm:$0xff]
    %v2368 = vld [vmem:[#allocation4] sm:$0xff]
    %v2369 = vpack.c.bf16 %v2368, %v2368
    %v2370 = vld [vmem:[#allocation14] sm:$0xf]
    %v2371 = vld [vmem:[#allocation14 + $0x4] sm:$0xf]
    %v2372 = vld [vmem:[#allocation14 + $0x8] sm:$0xf]
    %v2373 = vld [vmem:[#allocation14 + $0xc] sm:$0xf]
    %v2374 = vld [vmem:[#allocation14 + $0x10] sm:$0xf]
    %v2375 = vld [vmem:[#allocation14 + $0x14] sm:$0xf]
    %v2376 = vld [vmem:[#allocation14 + $0x18] sm:$0xf]
    %v2377 = vld [vmem:[#allocation14 + $0x1c] sm:$0xf]
    %v2378 = vld [vmem:[#allocation14 + $0x20] sm:$0xf]
    %v2379 = vld [vmem:[#allocation14 + $0x24] sm:$0xf]
    %v2380 = vld [vmem:[#allocation14 + $0x28] sm:$0xf]
    %v2381 = vld [vmem:[#allocation14 + $0x2c] sm:$0xf]
    %v2382 = vld [vmem:[#allocation14 + $0x30] sm:$0xf]
    %v2383 = vld [vmem:[#allocation14 + $0x34] sm:$0xf]
    %v2384 = vld [vmem:[#allocation14 + $0x38] sm:$0xf]
    %v2385 = vld [vmem:[#allocation14 + $0x3c] sm:$0xf]
    %v2402 = vunpack.c.l.b16 %v2370
    %v2403 = vunpack.c.l.b16 %v2371
    %v2404 = vunpack.c.l.b16 %v2372
    %v2405 = vunpack.c.l.b16 %v2373
    %v2406 = vunpack.c.l.b16 %v2374
    %v2407 = vunpack.c.l.b16 %v2375
    %v2408 = vunpack.c.l.b16 %v2376
    %v2409 = vunpack.c.l.b16 %v2377
    %v2410 = vunpack.c.l.b16 %v2378
    %v2411 = vunpack.c.l.b16 %v2379
    %v2412 = vunpack.c.l.b16 %v2380
    %v2413 = vunpack.c.l.b16 %v2381
    %v2414 = vunpack.c.l.b16 %v2382
    %v2415 = vunpack.c.l.b16 %v2383
    %v2416 = vunpack.c.l.b16 %v2384
    %v2417 = vunpack.c.l.b16 %v2385
    %v2418 = vpack.c.b16 %v2403, %v2402
    %v2419 = vpack.c.b16 %v2405, %v2404
    %v2420 = vpack.c.b16 %v2407, %v2406
    %v2421 = vpack.c.b16 %v2409, %v2408
    %v2422 = vpack.c.b16 %v2411, %v2410
    %v2423 = vpack.c.b16 %v2413, %v2412
    %v2424 = vpack.c.b16 %v2415, %v2414
    %v2425 = vpack.c.b16 %v2417, %v2416
    %2434 = vmatprep.subr.bf16.mxu0 0
    %2435 = vmatpush1.bf16.msra.mxu0 %v2418
    %2436 = vmatprep.subr.bf16.mxu0 0
    %2437 = vmatpush1.bf16.msra.mxu0 %v2419
    %2438 = vmatprep.subr.bf16.mxu0 0
    %2439 = vmatpush1.bf16.msra.mxu0 %v2420
    %2440 = vmatprep.subr.bf16.mxu0 0
    %2441 = vmatpush1.bf16.msra.mxu0 %v2421
    %2442 = vmatprep.subr.bf16.mxu0 0
    %2443 = vmatpush1.bf16.msra.mxu0 %v2422
    %2444 = vmatprep.subr.bf16.mxu0 0
    %2445 = vmatpush1.bf16.msra.mxu0 %v2423
    %2446 = vmatprep.subr.bf16.mxu0 0
    %2447 = vmatpush1.bf16.msra.mxu0 %v2424
    %2448 = vmatprep.subr.bf16.mxu0 0
    %2449 = vmatpush1.bf16.msra.mxu0 %v2425
    %2450 = vmatprep.subr.bf16.mxu0 0
    %2451 = vmatpush1.bf16.msra.mxu0 0
    %2452 = vmatprep.subr.bf16.mxu0 0
    %2453 = vmatpush1.bf16.msra.mxu0 0
    %2454 = vmatprep.subr.bf16.mxu0 0
    %2455 = vmatpush1.bf16.msra.mxu0 0
    %2456 = vmatprep.subr.bf16.mxu0 0
    %2457 = vmatpush1.bf16.msra.mxu0 0
    %2458 = vmatprep.subr.bf16.mxu0 0
    %2459 = vmatpush1.bf16.msra.mxu0 0
    %2460 = vmatprep.subr.bf16.mxu0 0
    %2461 = vmatpush1.bf16.msra.mxu0 0
    %2462 = vmatprep.subr.bf16.mxu0 0
    %2463 = vmatpush1.bf16.msra.mxu0 0
    %2464 = vmatprep.subr.bf16.mxu0 0
    %2465 = vmatpush1.bf16.msra.mxu0 0
    %2466 = vmatprep.mubr.bf16.mxu0 0
    %2467 = vmatmul.mubr.bf16.gmra.mrb[0].mxu0 %v2369
    %v2468 = vpop.f32.mrb[0].mxu0
    %v2469 = vadd.f32 0.0, %v2468
    %v2470 = vpop.f32.mrb[0].mxu0
    %v2471 = vpop.f32.mrb[0].mxu0
    %v2472 = vpop.f32.mrb[0].mxu0
    %2473 = vdwg.mxu0
    %v2474 = vadd.f32 %v2367, %v2469
    %v2475 = vxor.u32 %v2474, 2147483648
    %v2476 = vmul.f32 %v2475, 1.442695
    %v2477 = vpow.pop %v2476
    %v2478 = vadd.f32 %v2477, 1.0
    %v2479 = vrcp.pop %v2478
    %v2480 = vmul.f32 1.0, %v2479
    %v2481 = vtanh.pop %v2474
    %v2482 = vld [vmem:[#allocation5] sm:$0xff]
    %2484 = vrot.lane.b32.xlu0 %v2482, 32
    %v2485 = vpop.permute.xlu0 %2484
    %v2487 = vmul.f32 %v2480, %v2485
    %2489 = vrot.lane.b32.xlu0 %v2481, 32
    %v2490 = vpop.permute.xlu0 %2489
    %v2492 = vmul.f32 %v2480, %v2490
    %2494 = vrot.lane.b32.xlu0 %v2492, 32
    %v2495 = vpop.permute.xlu0 %2494
    %v2497 = vadd.f32 %v2487, %v2495
    %v2498 = vtanh.pop %v2497
    %2500 = vrot.lane.b32.xlu0 %v2498, 32
    %v2501 = vpop.permute.xlu0 %2500
    %v2503 = vmul.f32 %v2480, %v2501
    %2505 = vrot.lane.b32.xlu0 %v2497, 96
    %v2506 = vpop.permute.xlu0 %2505
    %2508 = vst.msk [vmem:[#allocation5] sm:$0xff] %vm426, %v2506
    %2510 = vrot.lane.b32.xlu0 %v2503, 64
    %v2511 = vpop.permute.xlu0 %2510
    %2513 = vst.msk [vmem:[#allocation4] sm:$0xff] %vm426, %v2511
    %v2514 = vld [vmem:[#allocation2 + $0x30] sm:$0xff]
    %v2515 = vld [vmem:[#allocation4] sm:$0xff]
    %v2516 = vpack.c.bf16 %v2515, %v2515
    %v2517 = vld [vmem:[#allocation14] sm:$0xf]
    %v2518 = vld [vmem:[#allocation14 + $0x4] sm:$0xf]
    %v2519 = vld [vmem:[#allocation14 + $0x8] sm:$0xf]
    %v2520 = vld [vmem:[#allocation14 + $0xc] sm:$0xf]
    %v2521 = vld [vmem:[#allocation14 + $0x10] sm:$0xf]
    %v2522 = vld [vmem:[#allocation14 + $0x14] sm:$0xf]
    %v2523 = vld [vmem:[#allocation14 + $0x18] sm:$0xf]
    %v2524 = vld [vmem:[#allocation14 + $0x1c] sm:$0xf]
    %v2525 = vld [vmem:[#allocation14 + $0x20] sm:$0xf]
    %v2526 = vld [vmem:[#allocation14 + $0x24] sm:$0xf]
    %v2527 = vld [vmem:[#allocation14 + $0x28] sm:$0xf]
    %v2528 = vld [vmem:[#allocation14 + $0x2c] sm:$0xf]
    %v2529 = vld [vmem:[#allocation14 + $0x30] sm:$0xf]
    %v2530 = vld [vmem:[#allocation14 + $0x34] sm:$0xf]
    %v2531 = vld [vmem:[#allocation14 + $0x38] sm:$0xf]
    %v2532 = vld [vmem:[#allocation14 + $0x3c] sm:$0xf]
    %v2549 = vunpack.c.l.b16 %v2517
    %v2550 = vunpack.c.l.b16 %v2518
    %v2551 = vunpack.c.l.b16 %v2519
    %v2552 = vunpack.c.l.b16 %v2520
    %v2553 = vunpack.c.l.b16 %v2521
    %v2554 = vunpack.c.l.b16 %v2522
    %v2555 = vunpack.c.l.b16 %v2523
    %v2556 = vunpack.c.l.b16 %v2524
    %v2557 = vunpack.c.l.b16 %v2525
    %v2558 = vunpack.c.l.b16 %v2526
    %v2559 = vunpack.c.l.b16 %v2527
    %v2560 = vunpack.c.l.b16 %v2528
    %v2561 = vunpack.c.l.b16 %v2529
    %v2562 = vunpack.c.l.b16 %v2530
    %v2563 = vunpack.c.l.b16 %v2531
    %v2564 = vunpack.c.l.b16 %v2532
    %v2565 = vpack.c.b16 %v2550, %v2549
    %v2566 = vpack.c.b16 %v2552, %v2551
    %v2567 = vpack.c.b16 %v2554, %v2553
    %v2568 = vpack.c.b16 %v2556, %v2555
    %v2569 = vpack.c.b16 %v2558, %v2557
    %v2570 = vpack.c.b16 %v2560, %v2559
    %v2571 = vpack.c.b16 %v2562, %v2561
    %v2572 = vpack.c.b16 %v2564, %v2563
    %2581 = vmatprep.subr.bf16.mxu0 0
    %2582 = vmatpush1.bf16.msra.mxu0 %v2565
    %2583 = vmatprep.subr.bf16.mxu0 0
    %2584 = vmatpush1.bf16.msra.mxu0 %v2566
    %2585 = vmatprep.subr.bf16.mxu0 0
    %2586 = vmatpush1.bf16.msra.mxu0 %v2567
    %2587 = vmatprep.subr.bf16.mxu0 0
    %2588 = vmatpush1.bf16.msra.mxu0 %v2568
    %2589 = vmatprep.subr.bf16.mxu0 0
    %2590 = vmatpush1.bf16.msra.mxu0 %v2569
    %2591 = vmatprep.subr.bf16.mxu0 0
    %2592 = vmatpush1.bf16.msra.mxu0 %v2570
    %2593 = vmatprep.subr.bf16.mxu0 0
    %2594 = vmatpush1.bf16.msra.mxu0 %v2571
    %2595 = vmatprep.subr.bf16.mxu0 0
    %2596 = vmatpush1.bf16.msra.mxu0 %v2572
    %2597 = vmatprep.subr.bf16.mxu0 0
    %2598 = vmatpush1.bf16.msra.mxu0 0
    %2599 = vmatprep.subr.bf16.mxu0 0
    %2600 = vmatpush1.bf16.msra.mxu0 0
    %2601 = vmatprep.subr.bf16.mxu0 0
    %2602 = vmatpush1.bf16.msra.mxu0 0
    %2603 = vmatprep.subr.bf16.mxu0 0
    %2604 = vmatpush1.bf16.msra.mxu0 0
    %2605 = vmatprep.subr.bf16.mxu0 0
    %2606 = vmatpush1.bf16.msra.mxu0 0
    %2607 = vmatprep.subr.bf16.mxu0 0
    %2608 = vmatpush1.bf16.msra.mxu0 0
    %2609 = vmatprep.subr.bf16.mxu0 0
    %2610 = vmatpush1.bf16.msra.mxu0 0
    %2611 = vmatprep.subr.bf16.mxu0 0
    %2612 = vmatpush1.bf16.msra.mxu0 0
    %2613 = vmatprep.mubr.bf16.mxu0 0
    %2614 = vmatmul.mubr.bf16.gmra.mrb[0].mxu0 %v2516
    %v2615 = vpop.f32.mrb[0].mxu0
    %v2616 = vadd.f32 0.0, %v2615
    %v2617 = vpop.f32.mrb[0].mxu0
    %v2618 = vpop.f32.mrb[0].mxu0
    %v2619 = vpop.f32.mrb[0].mxu0
    %2620 = vdwg.mxu0
    %v2621 = vadd.f32 %v2514, %v2616
    %v2622 = vxor.u32 %v2621, 2147483648
    %v2623 = vmul.f32 %v2622, 1.442695
    %v2624 = vpow.pop %v2623
    %v2625 = vadd.f32 %v2624, 1.0
    %v2626 = vrcp.pop %v2625
    %v2627 = vmul.f32 1.0, %v2626
    %v2628 = vtanh.pop %v2621
    %v2629 = vld [vmem:[#allocation5] sm:$0xff]
    %2631 = vrot.lane.b32.xlu0 %v2629, 32
    %v2632 = vpop.permute.xlu0 %2631
    %v2634 = vmul.f32 %v2627, %v2632
    %2636 = vrot.lane.b32.xlu0 %v2628, 32
    %v2637 = vpop.permute.xlu0 %2636
    %v2639 = vmul.f32 %v2627, %v2637
    %2641 = vrot.lane.b32.xlu0 %v2639, 32
    %v2642 = vpop.permute.xlu0 %2641
    %v2644 = vadd.f32 %v2634, %v2642
    %v2645 = vtanh.pop %v2644
    %2647 = vrot.lane.b32.xlu0 %v2645, 32
    %v2648 = vpop.permute.xlu0 %2647
    %v2650 = vmul.f32 %v2627, %v2648
    %2652 = vrot.lane.b32.xlu0 %v2644, 96
    %v2653 = vpop.permute.xlu0 %2652
    %2655 = vst.msk [vmem:[#allocation5] sm:$0xff] %vm426, %v2653
    %2657 = vrot.lane.b32.xlu0 %v2650, 64
    %v2658 = vpop.permute.xlu0 %2657
    %2660 = vst.msk [vmem:[#allocation4] sm:$0xff] %vm426, %v2658
    %v2661 = vld [vmem:[#allocation2 + $0x38] sm:$0xff]
    %v2662 = vld [vmem:[#allocation4] sm:$0xff]
    %v2663 = vpack.c.bf16 %v2662, %v2662
    %v2664 = vld [vmem:[#allocation14] sm:$0xf]
    %v2665 = vld [vmem:[#allocation14 + $0x4] sm:$0xf]
    %v2666 = vld [vmem:[#allocation14 + $0x8] sm:$0xf]
    %v2667 = vld [vmem:[#allocation14 + $0xc] sm:$0xf]
    %v2668 = vld [vmem:[#allocation14 + $0x10] sm:$0xf]
    %v2669 = vld [vmem:[#allocation14 + $0x14] sm:$0xf]
    %v2670 = vld [vmem:[#allocation14 + $0x18] sm:$0xf]
    %v2671 = vld [vmem:[#allocation14 + $0x1c] sm:$0xf]
    %v2672 = vld [vmem:[#allocation14 + $0x20] sm:$0xf]
    %v2673 = vld [vmem:[#allocation14 + $0x24] sm:$0xf]
    %v2674 = vld [vmem:[#allocation14 + $0x28] sm:$0xf]
    %v2675 = vld [vmem:[#allocation14 + $0x2c] sm:$0xf]
    %v2676 = vld [vmem:[#allocation14 + $0x30] sm:$0xf]
    %v2677 = vld [vmem:[#allocation14 + $0x34] sm:$0xf]
    %v2678 = vld [vmem:[#allocation14 + $0x38] sm:$0xf]
    %v2679 = vld [vmem:[#allocation14 + $0x3c] sm:$0xf]
    %v2696 = vunpack.c.l.b16 %v2664
    %v2697 = vunpack.c.l.b16 %v2665
    %v2698 = vunpack.c.l.b16 %v2666
    %v2699 = vunpack.c.l.b16 %v2667
    %v2700 = vunpack.c.l.b16 %v2668
    %v2701 = vunpack.c.l.b16 %v2669
    %v2702 = vunpack.c.l.b16 %v2670
    %v2703 = vunpack.c.l.b16 %v2671
    %v2704 = vunpack.c.l.b16 %v2672
    %v2705 = vunpack.c.l.b16 %v2673
    %v2706 = vunpack.c.l.b16 %v2674
    %v2707 = vunpack.c.l.b16 %v2675
    %v2708 = vunpack.c.l.b16 %v2676
    %v2709 = vunpack.c.l.b16 %v2677
    %v2710 = vunpack.c.l.b16 %v2678
    %v2711 = vunpack.c.l.b16 %v2679
    %v2712 = vpack.c.b16 %v2697, %v2696
    %v2713 = vpack.c.b16 %v2699, %v2698
    %v2714 = vpack.c.b16 %v2701, %v2700
    %v2715 = vpack.c.b16 %v2703, %v2702
    %v2716 = vpack.c.b16 %v2705, %v2704
    %v2717 = vpack.c.b16 %v2707, %v2706
    %v2718 = vpack.c.b16 %v2709, %v2708
    %v2719 = vpack.c.b16 %v2711, %v2710
    %2728 = vmatprep.subr.bf16.mxu0 0
    %2729 = vmatpush1.bf16.msra.mxu0 %v2712
    %2730 = vmatprep.subr.bf16.mxu0 0
    %2731 = vmatpush1.bf16.msra.mxu0 %v2713
    %2732 = vmatprep.subr.bf16.mxu0 0
    %2733 = vmatpush1.bf16.msra.mxu0 %v2714
    %2734 = vmatprep.subr.bf16.mxu0 0
    %2735 = vmatpush1.bf16.msra.mxu0 %v2715
    %2736 = vmatprep.subr.bf16.mxu0 0
    %2737 = vmatpush1.bf16.msra.mxu0 %v2716
    %2738 = vmatprep.subr.bf16.mxu0 0
    %2739 = vmatpush1.bf16.msra.mxu0 %v2717
    %2740 = vmatprep.subr.bf16.mxu0 0
    %2741 = vmatpush1.bf16.msra.mxu0 %v2718
    %2742 = vmatprep.subr.bf16.mxu0 0
    %2743 = vmatpush1.bf16.msra.mxu0 %v2719
    %2744 = vmatprep.subr.bf16.mxu0 0
    %2745 = vmatpush1.bf16.msra.mxu0 0
    %2746 = vmatprep.subr.bf16.mxu0 0
    %2747 = vmatpush1.bf16.msra.mxu0 0
    %2748 = vmatprep.subr.bf16.mxu0 0
    %2749 = vmatpush1.bf16.msra.mxu0 0
    %2750 = vmatprep.subr.bf16.mxu0 0
    %2751 = vmatpush1.bf16.msra.mxu0 0
    %2752 = vmatprep.subr.bf16.mxu0 0
    %2753 = vmatpush1.bf16.msra.mxu0 0
    %2754 = vmatprep.subr.bf16.mxu0 0
    %2755 = vmatpush1.bf16.msra.mxu0 0
    %2756 = vmatprep.subr.bf16.mxu0 0
    %2757 = vmatpush1.bf16.msra.mxu0 0
    %2758 = vmatprep.subr.bf16.mxu0 0
    %2759 = vmatpush1.bf16.msra.mxu0 0
    %2760 = vmatprep.mubr.bf16.mxu0 0
    %2761 = vmatmul.mubr.bf16.gmra.mrb[0].mxu0 %v2663
    %v2762 = vpop.f32.mrb[0].mxu0
    %v2763 = vadd.f32 0.0, %v2762
    %v2764 = vpop.f32.mrb[0].mxu0
    %v2765 = vpop.f32.mrb[0].mxu0
    %v2766 = vpop.f32.mrb[0].mxu0
    %2767 = vdwg.mxu0
    %v2768 = vadd.f32 %v2661, %v2763
    %v2769 = vxor.u32 %v2768, 2147483648
    %v2770 = vmul.f32 %v2769, 1.442695
    %v2771 = vpow.pop %v2770
    %v2772 = vadd.f32 %v2771, 1.0
    %v2773 = vrcp.pop %v2772
    %v2774 = vmul.f32 1.0, %v2773
    %v2775 = vtanh.pop %v2768
    %v2776 = vld [vmem:[#allocation5] sm:$0xff]
    %2778 = vrot.lane.b32.xlu0 %v2776, 32
    %v2779 = vpop.permute.xlu0 %2778
    %v2781 = vmul.f32 %v2774, %v2779
    %2783 = vrot.lane.b32.xlu0 %v2775, 32
    %v2784 = vpop.permute.xlu0 %2783
    %v2786 = vmul.f32 %v2774, %v2784
    %2788 = vrot.lane.b32.xlu0 %v2786, 32
    %v2789 = vpop.permute.xlu0 %2788
    %v2791 = vadd.f32 %v2781, %v2789
    %v2792 = vtanh.pop %v2791
    %2794 = vrot.lane.b32.xlu0 %v2792, 32
    %v2795 = vpop.permute.xlu0 %2794
    %v2797 = vmul.f32 %v2774, %v2795
    %2799 = vrot.lane.b32.xlu0 %v2791, 96
    %v2800 = vpop.permute.xlu0 %2799
    %2802 = vst.msk [vmem:[#allocation5] sm:$0xff] %vm426, %v2800
    %2804 = vrot.lane.b32.xlu0 %v2797, 64
    %v2805 = vpop.permute.xlu0 %2804
    %2807 = vst.msk [vmem:[#allocation4] sm:$0xff] %vm426, %v2805
    %v2808 = vld [vmem:[#allocation4] sm:$0xff]
    %s2809 = scalar_lea.vmem [#allocation15], 8
    %2810 = vst [vmem:[%s2809] sm:$0xff] %v2808
    %v2811 = vld [vmem:[#allocation5] sm:$0xff]
    %s2812 = scalar_lea.vmem [#allocation16], 8
    %2813 = vst [vmem:[%s2812] sm:$0xff] %v2811
    // Predicated region
    $region50: #{tpu_custom_call.1} parent=1 // pred_check
      _
    $region51: #{tpu_custom_call.1} parent=1 // pred_check_branch
      %2815 = sbr.rel (0) target = $region53
    $region52: #{tpu_custom_call.1} parent=1 // pred_region
      %s2817 = ssub.s32 256, 256
      %2818 = vsyncadd [#allocation8], %s2817
      %s2819 = sshll.u32 [#allocation15], 4
      %s2820 = int_to_ptr.vmem [resolvable:$true] %s2819
      %2825 = dma.vmem_to_hbm [thread:$0]  %s2820, 256, %s7, [#allocation8], 128, 128, 8
    $region53: #{tpu_custom_call.1} parent=1 // pred_fallthru
      _
    // Predicated region
    $region54: #{tpu_custom_call.1} parent=1 // pred_check
      _
    $region55: #{tpu_custom_call.1} parent=1 // pred_check_branch
      %2827 = sbr.rel (0) target = $region57
    $region56: #{tpu_custom_call.1} parent=1 // pred_region
      %s2829 = ssub.s32 256, 256
      %2830 = vsyncadd [#allocation17], %s2829
      %s2831 = sshll.u32 [#allocation16], 4
      %s2832 = int_to_ptr.vmem [resolvable:$true] %s2831
      %2837 = dma.vmem_to_hbm [thread:$0]  %s2832, 256, %s8, [#allocation17], 128, 128, 8
    $region57: #{tpu_custom_call.1} parent=1 // pred_fallthru
      _
    // Predicated region
    $region58: #{tpu_custom_call.1} parent=1 // pred_check
      _
    $region59: #{tpu_custom_call.1} parent=1 // pred_check_branch
      %2839 = sbr.rel (0) target = $region61
    $region60: #{tpu_custom_call.1} parent=1 // pred_region
      %2840 = dma.done [#allocation8], 256
    $region61: #{tpu_custom_call.1} parent=1 // pred_fallthru
      _
    // Predicated region
    $region62: #{tpu_custom_call.1} parent=1 // pred_check
      _
    $region63: #{tpu_custom_call.1} parent=1 // pred_check_branch
      %2842 = sbr.rel (0) target = $region65
    $region64: #{tpu_custom_call.1} parent=1 // pred_region
      %2843 = dma.done [#allocation17], 256
    $region65: #{tpu_custom_call.1} parent=1 // pred_fallthru
      _
    %2844 = vsyncpa [#allocation7], 1
    %2845 = vsyncpa [#allocation10], 1
    %2846 = vsyncpa [#allocation13], 1
    %2847 = vsyncpa [#allocation8], 1
    %2848 = vsyncpa [#allocation17], 1

</llo_original>
